<compile_context>
chip_gen: v5e
topology: v5e:2x2
jax: 0.10.0
libtpu: 0.0.40
codegen_flags: <defaults>
</compile_context>

<pallas_src>
import jax
import jax.numpy as jnp
from jax import lax
from jax.experimental import pallas as pl
from jax.experimental.pallas import tpu as pltpu


# ----------------------------------------------------------------------------
# One-time parameter preparation (torch layout -> fused-kernel layout).
# ----------------------------------------------------------------------------
def _banded_conv_weights(w_oihw, out_w):
    """torch OIHW 3x3 'same' conv weight -> 3 banded matrices (one per kernel
    row), with the horizontal zero-pad columns already trimmed.

    B[ky] has shape (out_w*Cin, out_w*Cout) with
       B[ky][q*Cin + c, x*Cout + co] = w[co, c, ky, q - x + 1]   (0 <= q-x+1 < 3)
    so   out_row(y) = sum_ky padded_row(y + ky) @ B[ky]
    where padded_row(p) is input row p-1 (zeros for p = 0 and p = H+1) and rows
    are laid out pixel-major / channel-minor along the lane axis.
    """
    Cout, Cin, KH, KW = w_oihw.shape
    w = jnp.transpose(w_oihw, (2, 3, 1, 0)).astype(jnp.float32)   # (KH,KW,Cin,Cout)
    q = jnp.arange(out_w)[:, None]                                # input pixel
    x = jnp.arange(out_w)[None, :]                                # output pixel
    kx = q - x + 1
    valid = ((kx >= 0) & (kx < KW)).astype(jnp.float32)
    g = w[:, jnp.clip(kx, 0, KW - 1)]                 # (KH, q, x, Cin, Cout)
    g = g * valid[None, :, :, None, None]
    g = jnp.transpose(g, (0, 1, 3, 2, 4))             # (KH, q, Cin, x, Cout)
    return g.reshape(KH, out_w * Cin, out_w * Cout).astype(jnp.bfloat16)


def _pool_selectors(w_in, c):
    """(2, w_in*c, (w_in//2)*c) 0/1 matrices that pick the even / odd pixel
    groups (pixel-major, channel-minor lanes). Used as MXU selection matmuls."""
    w_out = w_in // 2
    rows = jnp.arange(w_in * c)
    cols = jnp.arange(w_out * c)
    pin, cin = rows // c, rows % c
    pout, cout = cols // c, cols % c
    even = (pin[:, None] == 2 * pout[None, :]) & (cin[:, None] == cout[None, :])
    odd = (pin[:, None] == 2 * pout[None, :] + 1) & (cin[:, None] == cout[None, :])
    return jnp.stack([even, odd]).astype(jnp.bfloat16)


def prepare_params(p, h, w):
    """Convert torch-style params to the fused-kernel layout. Call ONCE."""
    l1 = p['b11'].shape[0]
    l2 = p['b21'].shape[0]
    w2 = w // 2
    h4, w4 = h // 4, w // 4
    f32 = jnp.float32

    kp = {
        'w11': _banded_conv_weights(p['w11'], w),
        'b11': jnp.tile(p['b11'].astype(f32), (w,)).reshape(1, w * l1),
        'w12': _banded_conv_weights(p['w12'], w),
        'b12': jnp.tile(p['b12'].astype(f32), (w,)).reshape(1, w * l1),
        'sel1': _pool_selectors(w, l1),
        'w21': _banded_conv_weights(p['w21'], w2),
        'b21': jnp.tile(p['b21'].astype(f32), (w2,)).reshape(1, w2 * l2),
        'w22': _banded_conv_weights(p['w22'], w2),
        'b22': jnp.tile(p['b22'].astype(f32), (w2,)).reshape(1, w2 * l2),
        'sel2': _pool_selectors(w2, l2),
    }

    # fc1 columns permuted from torch's NCHW flatten order to the kernel's
    # (row, col, channel) order; fc1 and fc2 fused into one linear map (no ReLU
    # between them) and reshaped to (h4, w4*l2, code) so the kernel accumulates
    # one small dot per pooled row (no flatten relayout).
    perm = (jnp.arange(l2)[None, None, :] * (h4 * w4)
            + jnp.arange(h4)[:, None, None] * w4
            + jnp.arange(w4)[None, :, None]).reshape(-1)
    w1p = p['fc1_w'].astype(f32)[:, perm]                          # (hid, conv_dim)
    w2_ = p['fc2_w'].astype(f32)                                   # (code, hid)
    wf = jnp.dot(w1p.T, w2_.T, precision=lax.Precision.HIGHEST)    # (conv_dim, code)
    bf = jnp.dot(p['fc1_b'].astype(f32), w2_.T,
                 precision=lax.Precision.HIGHEST) + p['fc2_b'].astype(f32)
    code = w2_.shape[0]
    kp['fc_w'] = wf.reshape(h4, w4 * l2, code).astype(jnp.bfloat16)
    kp['fc_b'] = bf.reshape(1, code).astype(f32)
    return kp


# ----------------------------------------------------------------------------
# Fused forward kernel: B images per grid step, everything resident in VMEM.
# ----------------------------------------------------------------------------
def _fused_kernel(x_ref,
                  w11, b11, w12, b12, sel1,
                  w21, b21, w22, b22, sel2,
                  fw, fb,
                  o_ref,
                  pad1, pad2, pad3, pad4):

    def conv_relu(x, pad_ref, w_ref, b_ref):
        # x: (H, B, W*Cin) f32 value; pad_ref: (H+2, B, W*Cin) f32 scratch.
        H, Bb, WC = x.shape
        Nout = w_ref.shape[2]
        zrow = jnp.zeros((Bb, WC), jnp.float32)
        pad_ref[0] = zrow                       # vertical zero border only
        pad_ref[H + 1] = zrow
        pad_ref[1:H + 1] = x                    # interior fully overwritten
        acc = jnp.zeros((H * Bb, Nout), jnp.float32)
        for ky in range(3):                     # 3 MXU matmuls per conv
            lhs = pad_ref[ky:ky + H].reshape(H * Bb, WC).astype(jnp.bfloat16)
            acc = acc + jnp.dot(lhs, w_ref[ky],
                                preferred_element_type=jnp.float32)
        return jnp.maximum(acc + b_ref[...], 0.0).reshape(H, Bb, Nout)

    def pool2x2(x, sel_ref):
        # (H, B, W*C) -> (H//2, B, (W//2)*C).  Vertical max via a leading-axis
        # split (layout no-op); horizontal max + lane compaction via two 0/1
        # selection matmuls (exact), avoiding lane-splitting reshapes.
        H, Bb, WC = x.shape
        x4 = x.reshape(H // 2, 2, Bb, WC)
        v = jnp.maximum(x4[:, 0], x4[:, 1])
        v = v.reshape((H // 2) * Bb, WC).astype(jnp.bfloat16)
        e = jnp.dot(v, sel_ref[0], preferred_element_type=jnp.float32)
        o = jnp.dot(v, sel_ref[1], preferred_element_type=jnp.float32)
        return jnp.maximum(e, o).reshape(H // 2, Bb, WC // 2)

    h = conv_relu(x_ref[...], pad1, w11, b11)
    h = conv_relu(h, pad2, w12, b12)
    h = pool2x2(h, sel1)
    h = conv_relu(h, pad3, w21, b21)
    h = conv_relu(h, pad4, w22, b22)
    h = pool2x2(h, sel2)                         # (H/4, B, (W/4)*l2)

    # Fused fc1+fc2: one (B, (W/4)*l2) @ ((W/4)*l2, code) dot per pooled row.
    Bb = h.shape[1]
    code = o_ref.shape[1]
    z = jnp.zeros((Bb, code), jnp.float32)
    for r in range(h.shape[0]):
        z = z + jnp.dot(h[r].astype(jnp.bfloat16), fw[r],
                        preferred_element_type=jnp.float32)
    o_ref[...] = z + fb[...]


def cae_encoder_forward(x_nchw, kp, block_batch=8):
    N, C, H, W = x_nchw.shape
    code_dim = kp['fc_b'].shape[1]
    l1 = kp['b11'].shape[1] // W
    l2 = kp['b21'].shape[1] // (W // 2)
    H2, W2 = H // 2, W // 2

    # Keep the batch block a multiple of 8 (sublane tile); pad N if necessary.
    B = max(8, (block_batch // 8) * 8)
    Np = ((N + B - 1) // B) * B
    if Np != N:
        x_nchw = jnp.pad(x_nchw, ((0, Np - N), (0, 0), (0, 0), (0, 0)))

    # NCHW -> (H, N, W*C): batch on sublanes, pixel-major/channel-minor lanes.
    x2d = jnp.transpose(x_nchw, (2, 0, 3, 1)).reshape(H, Np, W * C)
    grid_n = Np // B

    def full(a):  # whole-array block with constant index map (fetched once)
        return pl.BlockSpec(a.shape, lambda n, _nd=a.ndim: (0,) * _nd)

    out = pl.pallas_call(
        _fused_kernel,
        out_shape=jax.ShapeDtypeStruct((Np, code_dim), jnp.float32),
        grid=(grid_n,),
        in_specs=[
            pl.BlockSpec((H, B, W * C), lambda n: (0, n, 0)),
            full(kp['w11']), full(kp['b11']),
            full(kp['w12']), full(kp['b12']),
            full(kp['sel1']),
            full(kp['w21']), full(kp['b21']),
            full(kp['w22']), full(kp['b22']),
            full(kp['sel2']),
            full(kp['fc_w']), full(kp['fc_b']),
        ],
        out_specs=pl.BlockSpec((B, code_dim), lambda n: (n, 0)),
        scratch_shapes=[
            pltpu.VMEM((H + 2, B, W * C), jnp.float32),     # pad for conv11
            pltpu.VMEM((H + 2, B, W * l1), jnp.float32),    # pad for conv12
            pltpu.VMEM((H2 + 2, B, W2 * l1), jnp.float32),  # pad for conv21
            pltpu.VMEM((H2 + 2, B, W2 * l2), jnp.float32),  # pad for conv22
        ],
        compiler_params=pltpu.CompilerParams(
            dimension_semantics=("parallel",)),
    )(x2d, kp['w11'], kp['b11'], kp['w12'], kp['b12'], kp['sel1'],
      kp['w21'], kp['b21'], kp['w22'], kp['b22'], kp['sel2'],
      kp['fc_w'], kp['fc_b'])
    return out[:N]


# ----------------------------------------------------------------------------
# Pure-JAX f32 reference mirroring the PyTorch module (for validation).
# ----------------------------------------------------------------------------
def torch_ref_forward(x_nchw, p):
    hp = lax.Precision.HIGHEST

    def conv(x, w, b):
        y = lax.conv_general_dilated(
            x, w, window_strides=(1, 1), padding=((1, 1), (1, 1)),
            dimension_numbers=('NCHW', 'OIHW', 'NCHW'), precision=hp)
        return jax.nn.relu(y + b[None, :, None, None])

    def pool(x):
        return lax.reduce_window(x, -jnp.inf, lax.max,
                                 window_dimensions=(1, 1, 2, 2),
                                 window_strides=(1, 1, 2, 2), padding='VALID')

    out = pool(conv(conv(x_nchw, p['w11'], p['b11']), p['w12'], p['b12']))
    out = pool(conv(conv(out, p['w21'], p['b21']), p['w22'], p['b22']))
    out = out.reshape(out.shape[0], -1)
    out = jnp.dot(out, p['fc1_w'].T, precision=hp) + p['fc1_b']
    out = jnp.dot(out, p['fc2_w'].T, precision=hp) + p['fc2_b']
    return out


if __name__ == "__main__":
    # CAEEncoder(w=16, h=16, channels=4, hid_dim=32, code_dim=16,
    #            kernel_size=3, first_feature_count=8), batch 16
    # (16 = 2 grid steps of 8 images -> exercises batching + both v7x cores).
    N, C, H, W = 16, 4, 16, 16
    first_feature_count, hid_dim, code_dim = 8, 32, 16
    l1, l2 = first_feature_count, first_feature_count * 2
    conv_dim = (W * H // 16) * l2                            # 256

    key = jax.random.PRNGKey(0)
    ks = jax.random.split(key, 13)

    def init(k, shape, scale=0.1):
        return jax.random.normal(k, shape, jnp.float32) * scale

    params = {
        'w11': init(ks[0], (l1, C, 3, 3)),  'b11': init(ks[1], (l1,)),
        'w12': init(ks[2], (l1, l1, 3, 3)), 'b12': init(ks[3], (l1,)),
        'w21': init(ks[4], (l2, l1, 3, 3)), 'b21': init(ks[5], (l2,)),
        'w22': init(ks[6], (l2, l2, 3, 3)), 'b22': init(ks[7], (l2,)),
        'fc1_w': init(ks[8], (hid_dim, conv_dim)), 'fc1_b': init(ks[9], (hid_dim,)),
        'fc2_w': init(ks[10], (code_dim, hid_dim)), 'fc2_b': init(ks[11], (code_dim,)),
    }
    x = jax.random.normal(ks[12], (N, C, H, W), jnp.float32)

    # One-time weight prep (banded conv matrices, pool selectors, fused fc).
    kparams = jax.tree_util.tree_map(jax.block_until_ready,
                                     prepare_params(params, H, W))

    fwd = jax.jit(cae_encoder_forward)
    out = jax.block_until_ready(fwd(x, kparams))
    assert out.shape == (N, code_dim), out.shape

    ref = torch_ref_forward(x, params)
    # The kernel feeds the MXU bf16 (f32 accumulation), so compare against the
    # exact f32 reference with a correspondingly relaxed tolerance.
    err = float(jnp.max(jnp.abs(out - ref)))
    if not jnp.allclose(out, ref, rtol=5e-2, atol=5e-2):
        raise AssertionError(f"Pallas CAEEncoder mismatch, max abs err = {err}")
    print("KERNEL_OK")
</pallas_src>

<mosaic_0001>
module attributes {stable_mosaic.version = 11 : i64} {
  func.func @_fused_kernel(%arg0: i32, %arg1: memref<16x8x64xf32, #tpu.memory_space<vmem>>, %arg2: memref<3x64x128xbf16, #tpu.memory_space<vmem>>, %arg3: memref<1x128xf32, #tpu.memory_space<vmem>>, %arg4: memref<3x128x128xbf16, #tpu.memory_space<vmem>>, %arg5: memref<1x128xf32, #tpu.memory_space<vmem>>, %arg6: memref<2x128x64xbf16, #tpu.memory_space<vmem>>, %arg7: memref<3x64x128xbf16, #tpu.memory_space<vmem>>, %arg8: memref<1x128xf32, #tpu.memory_space<vmem>>, %arg9: memref<3x128x128xbf16, #tpu.memory_space<vmem>>, %arg10: memref<1x128xf32, #tpu.memory_space<vmem>>, %arg11: memref<2x128x64xbf16, #tpu.memory_space<vmem>>, %arg12: memref<4x64x16xbf16, #tpu.memory_space<vmem>>, %arg13: memref<1x16xf32, #tpu.memory_space<vmem>>, %arg14: memref<8x16xf32, #tpu.memory_space<vmem>>, %arg15: memref<18x8x64xf32, #tpu.memory_space<vmem>>, %arg16: memref<18x8x128xf32, #tpu.memory_space<vmem>>, %arg17: memref<10x8x64xf32, #tpu.memory_space<vmem>>, %arg18: memref<10x8x128xf32, #tpu.memory_space<vmem>>) attributes {dimension_semantics = [#tpu.dimension_semantics<parallel>], iteration_bounds = array<i64: 2>, scalar_prefetch = 0 : i64, scratch_operands = 4 : i64, tpu.core_type = #tpu.core_type<tc>, window_params = [{transform_indices = @transform_0, window_bounds = array<i64: 16, 8, 64>}, {pipeline_mode = #tpu.pipeline_mode<synchronous>, transform_indices = @transform_1, window_bounds = array<i64: 3, 64, 128>}, {pipeline_mode = #tpu.pipeline_mode<synchronous>, transform_indices = @transform_2, window_bounds = array<i64: 1, 128>}, {pipeline_mode = #tpu.pipeline_mode<synchronous>, transform_indices = @transform_3, window_bounds = array<i64: 3, 128, 128>}, {pipeline_mode = #tpu.pipeline_mode<synchronous>, transform_indices = @transform_4, window_bounds = array<i64: 1, 128>}, {pipeline_mode = #tpu.pipeline_mode<synchronous>, transform_indices = @transform_5, window_bounds = array<i64: 2, 128, 64>}, {pipeline_mode = #tpu.pipeline_mode<synchronous>, transform_indices = @transform_6, window_bounds = array<i64: 3, 64, 128>}, {pipeline_mode = #tpu.pipeline_mode<synchronous>, transform_indices = @transform_7, window_bounds = array<i64: 1, 128>}, {pipeline_mode = #tpu.pipeline_mode<synchronous>, transform_indices = @transform_8, window_bounds = array<i64: 3, 128, 128>}, {pipeline_mode = #tpu.pipeline_mode<synchronous>, transform_indices = @transform_9, window_bounds = array<i64: 1, 128>}, {pipeline_mode = #tpu.pipeline_mode<synchronous>, transform_indices = @transform_10, window_bounds = array<i64: 2, 128, 64>}, {pipeline_mode = #tpu.pipeline_mode<synchronous>, transform_indices = @transform_11, window_bounds = array<i64: 4, 64, 16>}, {pipeline_mode = #tpu.pipeline_mode<synchronous>, transform_indices = @transform_12, window_bounds = array<i64: 1, 16>}, {transform_indices = @transform_13, window_bounds = array<i64: 8, 16>}]} {
    %c0 = arith.constant 0 : index
    %c0_0 = arith.constant 0 : index
    %c0_1 = arith.constant 0 : index
    %0 = vector.load %arg1[%c0, %c0_0, %c0_1] : memref<16x8x64xf32, #tpu.memory_space<vmem>>, vector<16x8x64xf32>
    %cst = arith.constant 0.000000e+00 : f32
    %1 = vector.broadcast %cst : f32 to vector<8x64xf32>
    %c0_2 = arith.constant 0 : index
    %c0_3 = arith.constant 0 : index
    %c0_4 = arith.constant 0 : index
    %2 = vector.load %arg15[%c0_2, %c0_3, %c0_4] : memref<18x8x64xf32, #tpu.memory_space<vmem>>, vector<1x8x64xf32>
    %3 = vector.shape_cast %2 : vector<1x8x64xf32> to vector<8x64xf32>
    %4 = vector.shape_cast %1 : vector<8x64xf32> to vector<1x8x64xf32>
    tpu.vector_store %arg15[%c0_2, %c0_3, %c0_4], %4 {strides = array<i32>} : memref<18x8x64xf32, #tpu.memory_space<vmem>>, vector<1x8x64xf32>,
    %c17 = arith.constant 17 : index
    %c0_5 = arith.constant 0 : index
    %c0_6 = arith.constant 0 : index
    %5 = vector.load %arg15[%c17, %c0_5, %c0_6] : memref<18x8x64xf32, #tpu.memory_space<vmem>>, vector<1x8x64xf32>
    %6 = vector.shape_cast %5 : vector<1x8x64xf32> to vector<8x64xf32>
    %7 = vector.shape_cast %1 : vector<8x64xf32> to vector<1x8x64xf32>
    tpu.vector_store %arg15[%c17, %c0_5, %c0_6], %7 {strides = array<i32>} : memref<18x8x64xf32, #tpu.memory_space<vmem>>, vector<1x8x64xf32>,
    %c1 = arith.constant 1 : index
    %c0_7 = arith.constant 0 : index
    %c0_8 = arith.constant 0 : index
    %8 = vector.load %arg15[%c1, %c0_7, %c0_8] : memref<18x8x64xf32, #tpu.memory_space<vmem>>, vector<16x8x64xf32>
    tpu.vector_store %arg15[%c1, %c0_7, %c0_8], %0 {strides = array<i32>} : memref<18x8x64xf32, #tpu.memory_space<vmem>>, vector<16x8x64xf32>,
    %cst_9 = arith.constant 0.000000e+00 : f32
    %9 = vector.broadcast %cst_9 : f32 to vector<128x128xf32>
    %c0_10 = arith.constant 0 : index
    %c0_11 = arith.constant 0 : index
    %c0_12 = arith.constant 0 : index
    %10 = vector.load %arg15[%c0_10, %c0_11, %c0_12] : memref<18x8x64xf32, #tpu.memory_space<vmem>>, vector<16x8x64xf32>
    %11 = vector.shape_cast %10 : vector<16x8x64xf32> to vector<128x64xf32>
    %12 = arith.truncf %11 : vector<128x64xf32> to vector<128x64xbf16>
    %c0_13 = arith.constant 0 : index
    %c0_14 = arith.constant 0 : index
    %c0_15 = arith.constant 0 : index
    %13 = vector.load %arg2[%c0_13, %c0_14, %c0_15] : memref<3x64x128xbf16, #tpu.memory_space<vmem>>, vector<1x64x128xbf16>
    %14 = vector.shape_cast %13 : vector<1x64x128xbf16> to vector<64x128xbf16>
    %cst_16 = arith.constant dense<0.000000e+00> : vector<128x128xf32>
    %15 = tpu.matmul %12, %14, %cst_16 {dimension_numbers = #tpu.dot_dimension_numbers<[1], [0], [0], [1], [0, 0, 1, 1], [], []>} : vector<128x64xbf16>, vector<64x128xbf16>, vector<128x128xf32> -> vector<128x128xf32>
    %16 = arith.addf %9, %15 : vector<128x128xf32>
    %c1_17 = arith.constant 1 : index
    %c0_18 = arith.constant 0 : index
    %c0_19 = arith.constant 0 : index
    %17 = vector.load %arg15[%c1_17, %c0_18, %c0_19] : memref<18x8x64xf32, #tpu.memory_space<vmem>>, vector<16x8x64xf32>
    %18 = vector.shape_cast %17 : vector<16x8x64xf32> to vector<128x64xf32>
    %19 = arith.truncf %18 : vector<128x64xf32> to vector<128x64xbf16>
    %c1_20 = arith.constant 1 : index
    %c0_21 = arith.constant 0 : index
    %c0_22 = arith.constant 0 : index
    %20 = vector.load %arg2[%c1_20, %c0_21, %c0_22] : memref<3x64x128xbf16, #tpu.memory_space<vmem>>, vector<1x64x128xbf16>
    %21 = vector.shape_cast %20 : vector<1x64x128xbf16> to vector<64x128xbf16>
    %cst_23 = arith.constant dense<0.000000e+00> : vector<128x128xf32>
    %22 = tpu.matmul %19, %21, %cst_23 {dimension_numbers = #tpu.dot_dimension_numbers<[1], [0], [0], [1], [0, 0, 1, 1], [], []>} : vector<128x64xbf16>, vector<64x128xbf16>, vector<128x128xf32> -> vector<128x128xf32>
    %23 = arith.addf %16, %22 : vector<128x128xf32>
    %c2 = arith.constant 2 : index
    %c0_24 = arith.constant 0 : index
    %c0_25 = arith.constant 0 : index
    %24 = vector.load %arg15[%c2, %c0_24, %c0_25] : memref<18x8x64xf32, #tpu.memory_space<vmem>>, vector<16x8x64xf32>
    %25 = vector.shape_cast %24 : vector<16x8x64xf32> to vector<128x64xf32>
    %26 = arith.truncf %25 : vector<128x64xf32> to vector<128x64xbf16>
    %c2_26 = arith.constant 2 : index
    %c0_27 = arith.constant 0 : index
    %c0_28 = arith.constant 0 : index
    %27 = vector.load %arg2[%c2_26, %c0_27, %c0_28] : memref<3x64x128xbf16, #tpu.memory_space<vmem>>, vector<1x64x128xbf16>
    %28 = vector.shape_cast %27 : vector<1x64x128xbf16> to vector<64x128xbf16>
    %cst_29 = arith.constant dense<0.000000e+00> : vector<128x128xf32>
    %29 = tpu.matmul %26, %28, %cst_29 {dimension_numbers = #tpu.dot_dimension_numbers<[1], [0], [0], [1], [0, 0, 1, 1], [], []>} : vector<128x64xbf16>, vector<64x128xbf16>, vector<128x128xf32> -> vector<128x128xf32>
    %30 = arith.addf %23, %29 : vector<128x128xf32>
    %c0_30 = arith.constant 0 : index
    %c0_31 = arith.constant 0 : index
    %31 = vector.load %arg3[%c0_30, %c0_31] : memref<1x128xf32, #tpu.memory_space<vmem>>, vector<1x128xf32>
    %32 = vector.broadcast %31 : vector<1x128xf32> to vector<128x128xf32>
    %33 = arith.addf %30, %32 : vector<128x128xf32>
    %cst_32 = arith.constant 0.000000e+00 : f32
    %34 = vector.broadcast %cst_32 : f32 to vector<128x128xf32>
    %35 = arith.maximumf %33, %34 : vector<128x128xf32>
    %36 = vector.shape_cast %35 : vector<128x128xf32> to vector<16x8x128xf32>
    %cst_33 = arith.constant 0.000000e+00 : f32
    %37 = vector.broadcast %cst_33 : f32 to vector<8x128xf32>
    %c0_34 = arith.constant 0 : index
    %c0_35 = arith.constant 0 : index
    %c0_36 = arith.constant 0 : index
    %38 = vector.load %arg16[%c0_34, %c0_35, %c0_36] : memref<18x8x128xf32, #tpu.memory_space<vmem>>, vector<1x8x128xf32>
    %39 = vector.shape_cast %38 : vector<1x8x128xf32> to vector<8x128xf32>
    %40 = vector.shape_cast %37 : vector<8x128xf32> to vector<1x8x128xf32>
    tpu.vector_store %arg16[%c0_34, %c0_35, %c0_36], %40 {strides = array<i32>} : memref<18x8x128xf32, #tpu.memory_space<vmem>>, vector<1x8x128xf32>,
    %c17_37 = arith.constant 17 : index
    %c0_38 = arith.constant 0 : index
    %c0_39 = arith.constant 0 : index
    %41 = vector.load %arg16[%c17_37, %c0_38, %c0_39] : memref<18x8x128xf32, #tpu.memory_space<vmem>>, vector<1x8x128xf32>
    %42 = vector.shape_cast %41 : vector<1x8x128xf32> to vector<8x128xf32>
    %43 = vector.shape_cast %37 : vector<8x128xf32> to vector<1x8x128xf32>
    tpu.vector_store %arg16[%c17_37, %c0_38, %c0_39], %43 {strides = array<i32>} : memref<18x8x128xf32, #tpu.memory_space<vmem>>, vector<1x8x128xf32>,
    %c1_40 = arith.constant 1 : index
    %c0_41 = arith.constant 0 : index
    %c0_42 = arith.constant 0 : index
    %44 = vector.load %arg16[%c1_40, %c0_41, %c0_42] : memref<18x8x128xf32, #tpu.memory_space<vmem>>, vector<16x8x128xf32>
    tpu.vector_store %arg16[%c1_40, %c0_41, %c0_42], %36 {strides = array<i32>} : memref<18x8x128xf32, #tpu.memory_space<vmem>>, vector<16x8x128xf32>,
    %cst_43 = arith.constant 0.000000e+00 : f32
    %45 = vector.broadcast %cst_43 : f32 to vector<128x128xf32>
    %c0_44 = arith.constant 0 : index
    %c0_45 = arith.constant 0 : index
    %c0_46 = arith.constant 0 : index
    %46 = vector.load %arg16[%c0_44, %c0_45, %c0_46] : memref<18x8x128xf32, #tpu.memory_space<vmem>>, vector<16x8x128xf32>
    %47 = vector.shape_cast %46 : vector<16x8x128xf32> to vector<128x128xf32>
    %48 = arith.truncf %47 : vector<128x128xf32> to vector<128x128xbf16>
    %c0_47 = arith.constant 0 : index
    %c0_48 = arith.constant 0 : index
    %c0_49 = arith.constant 0 : index
    %49 = vector.load %arg4[%c0_47, %c0_48, %c0_49] : memref<3x128x128xbf16, #tpu.memory_space<vmem>>, vector<1x128x128xbf16>
    %50 = vector.shape_cast %49 : vector<1x128x128xbf16> to vector<128x128xbf16>
    %cst_50 = arith.constant dense<0.000000e+00> : vector<128x128xf32>
    %51 = tpu.matmul %48, %50, %cst_50 {dimension_numbers = #tpu.dot_dimension_numbers<[1], [0], [0], [1], [0, 0, 1, 1], [], []>} : vector<128x128xbf16>, vector<128x128xbf16>, vector<128x128xf32> -> vector<128x128xf32>
    %52 = arith.addf %45, %51 : vector<128x128xf32>
    %c1_51 = arith.constant 1 : index
    %c0_52 = arith.constant 0 : index
    %c0_53 = arith.constant 0 : index
    %53 = vector.load %arg16[%c1_51, %c0_52, %c0_53] : memref<18x8x128xf32, #tpu.memory_space<vmem>>, vector<16x8x128xf32>
    %54 = vector.shape_cast %53 : vector<16x8x128xf32> to vector<128x128xf32>
    %55 = arith.truncf %54 : vector<128x128xf32> to vector<128x128xbf16>
    %c1_54 = arith.constant 1 : index
    %c0_55 = arith.constant 0 : index
    %c0_56 = arith.constant 0 : index
    %56 = vector.load %arg4[%c1_54, %c0_55, %c0_56] : memref<3x128x128xbf16, #tpu.memory_space<vmem>>, vector<1x128x128xbf16>
    %57 = vector.shape_cast %56 : vector<1x128x128xbf16> to vector<128x128xbf16>
    %cst_57 = arith.constant dense<0.000000e+00> : vector<128x128xf32>
    %58 = tpu.matmul %55, %57, %cst_57 {dimension_numbers = #tpu.dot_dimension_numbers<[1], [0], [0], [1], [0, 0, 1, 1], [], []>} : vector<128x128xbf16>, vector<128x128xbf16>, vector<128x128xf32> -> vector<128x128xf32>
    %59 = arith.addf %52, %58 : vector<128x128xf32>
    %c2_58 = arith.constant 2 : index
    %c0_59 = arith.constant 0 : index
    %c0_60 = arith.constant 0 : index
    %60 = vector.load %arg16[%c2_58, %c0_59, %c0_60] : memref<18x8x128xf32, #tpu.memory_space<vmem>>, vector<16x8x128xf32>
    %61 = vector.shape_cast %60 : vector<16x8x128xf32> to vector<128x128xf32>
    %62 = arith.truncf %61 : vector<128x128xf32> to vector<128x128xbf16>
    %c2_61 = arith.constant 2 : index
    %c0_62 = arith.constant 0 : index
    %c0_63 = arith.constant 0 : index
    %63 = vector.load %arg4[%c2_61, %c0_62, %c0_63] : memref<3x128x128xbf16, #tpu.memory_space<vmem>>, vector<1x128x128xbf16>
    %64 = vector.shape_cast %63 : vector<1x128x128xbf16> to vector<128x128xbf16>
    %cst_64 = arith.constant dense<0.000000e+00> : vector<128x128xf32>
    %65 = tpu.matmul %62, %64, %cst_64 {dimension_numbers = #tpu.dot_dimension_numbers<[1], [0], [0], [1], [0, 0, 1, 1], [], []>} : vector<128x128xbf16>, vector<128x128xbf16>, vector<128x128xf32> -> vector<128x128xf32>
    %66 = arith.addf %59, %65 : vector<128x128xf32>
    %c0_65 = arith.constant 0 : index
    %c0_66 = arith.constant 0 : index
    %67 = vector.load %arg5[%c0_65, %c0_66] : memref<1x128xf32, #tpu.memory_space<vmem>>, vector<1x128xf32>
    %68 = vector.broadcast %67 : vector<1x128xf32> to vector<128x128xf32>
    %69 = arith.addf %66, %68 : vector<128x128xf32>
    %cst_67 = arith.constant 0.000000e+00 : f32
    %70 = vector.broadcast %cst_67 : f32 to vector<128x128xf32>
    %71 = arith.maximumf %69, %70 : vector<128x128xf32>
    %72 = vector.shape_cast %71 : vector<128x128xf32> to vector<16x8x128xf32>
    %73 = vector.shape_cast %72 : vector<16x8x128xf32> to vector<8x2x8x128xf32>
    %74 = vector.extract_strided_slice %73 {offsets = [0, 0, 0, 0], sizes = [8, 1, 8, 128], strides = [1, 1, 1, 1]} : vector<8x2x8x128xf32> to vector<8x1x8x128xf32>
    %75 = vector.shape_cast %74 : vector<8x1x8x128xf32> to vector<8x8x128xf32>
    %76 = vector.extract_strided_slice %73 {offsets = [0, 1, 0, 0], sizes = [8, 1, 8, 128], strides = [1, 1, 1, 1]} : vector<8x2x8x128xf32> to vector<8x1x8x128xf32>
    %77 = vector.shape_cast %76 : vector<8x1x8x128xf32> to vector<8x8x128xf32>
    %78 = arith.maximumf %75, %77 : vector<8x8x128xf32>
    %79 = vector.shape_cast %78 : vector<8x8x128xf32> to vector<64x128xf32>
    %80 = arith.truncf %79 : vector<64x128xf32> to vector<64x128xbf16>
    %c0_68 = arith.constant 0 : index
    %c0_69 = arith.constant 0 : index
    %c0_70 = arith.constant 0 : index
    %81 = vector.load %arg6[%c0_68, %c0_69, %c0_70] : memref<2x128x64xbf16, #tpu.memory_space<vmem>>, vector<1x128x64xbf16>
    %82 = vector.shape_cast %81 : vector<1x128x64xbf16> to vector<128x64xbf16>
    %cst_71 = arith.constant dense<0.000000e+00> : vector<64x64xf32>
    %83 = tpu.matmul %80, %82, %cst_71 {dimension_numbers = #tpu.dot_dimension_numbers<[1], [0], [0], [1], [0, 0, 1, 1], [], []>} : vector<64x128xbf16>, vector<128x64xbf16>, vector<64x64xf32> -> vector<64x64xf32>
    %c1_72 = arith.constant 1 : index
    %c0_73 = arith.constant 0 : index
    %c0_74 = arith.constant 0 : index
    %84 = vector.load %arg6[%c1_72, %c0_73, %c0_74] : memref<2x128x64xbf16, #tpu.memory_space<vmem>>, vector<1x128x64xbf16>
    %85 = vector.shape_cast %84 : vector<1x128x64xbf16> to vector<128x64xbf16>
    %cst_75 = arith.constant dense<0.000000e+00> : vector<64x64xf32>
    %86 = tpu.matmul %80, %85, %cst_75 {dimension_numbers = #tpu.dot_dimension_numbers<[1], [0], [0], [1], [0, 0, 1, 1], [], []>} : vector<64x128xbf16>, vector<128x64xbf16>, vector<64x64xf32> -> vector<64x64xf32>
    %87 = arith.maximumf %83, %86 : vector<64x64xf32>
    %88 = vector.shape_cast %87 : vector<64x64xf32> to vector<8x8x64xf32>
    %cst_76 = arith.constant 0.000000e+00 : f32
    %89 = vector.broadcast %cst_76 : f32 to vector<8x64xf32>
    %c0_77 = arith.constant 0 : index
    %c0_78 = arith.constant 0 : index
    %c0_79 = arith.constant 0 : index
    %90 = vector.load %arg17[%c0_77, %c0_78, %c0_79] : memref<10x8x64xf32, #tpu.memory_space<vmem>>, vector<1x8x64xf32>
    %91 = vector.shape_cast %90 : vector<1x8x64xf32> to vector<8x64xf32>
    %92 = vector.shape_cast %89 : vector<8x64xf32> to vector<1x8x64xf32>
    tpu.vector_store %arg17[%c0_77, %c0_78, %c0_79], %92 {strides = array<i32>} : memref<10x8x64xf32, #tpu.memory_space<vmem>>, vector<1x8x64xf32>,
    %c9 = arith.constant 9 : index
    %c0_80 = arith.constant 0 : index
    %c0_81 = arith.constant 0 : index
    %93 = vector.load %arg17[%c9, %c0_80, %c0_81] : memref<10x8x64xf32, #tpu.memory_space<vmem>>, vector<1x8x64xf32>
    %94 = vector.shape_cast %93 : vector<1x8x64xf32> to vector<8x64xf32>
    %95 = vector.shape_cast %89 : vector<8x64xf32> to vector<1x8x64xf32>
    tpu.vector_store %arg17[%c9, %c0_80, %c0_81], %95 {strides = array<i32>} : memref<10x8x64xf32, #tpu.memory_space<vmem>>, vector<1x8x64xf32>,
    %c1_82 = arith.constant 1 : index
    %c0_83 = arith.constant 0 : index
    %c0_84 = arith.constant 0 : index
    %96 = vector.load %arg17[%c1_82, %c0_83, %c0_84] : memref<10x8x64xf32, #tpu.memory_space<vmem>>, vector<8x8x64xf32>
    tpu.vector_store %arg17[%c1_82, %c0_83, %c0_84], %88 {strides = array<i32>} : memref<10x8x64xf32, #tpu.memory_space<vmem>>, vector<8x8x64xf32>,
    %cst_85 = arith.constant 0.000000e+00 : f32
    %97 = vector.broadcast %cst_85 : f32 to vector<64x128xf32>
    %c0_86 = arith.constant 0 : index
    %c0_87 = arith.constant 0 : index
    %c0_88 = arith.constant 0 : index
    %98 = vector.load %arg17[%c0_86, %c0_87, %c0_88] : memref<10x8x64xf32, #tpu.memory_space<vmem>>, vector<8x8x64xf32>
    %99 = vector.shape_cast %98 : vector<8x8x64xf32> to vector<64x64xf32>
    %100 = arith.truncf %99 : vector<64x64xf32> to vector<64x64xbf16>
    %c0_89 = arith.constant 0 : index
    %c0_90 = arith.constant 0 : index
    %c0_91 = arith.constant 0 : index
    %101 = vector.load %arg7[%c0_89, %c0_90, %c0_91] : memref<3x64x128xbf16, #tpu.memory_space<vmem>>, vector<1x64x128xbf16>
    %102 = vector.shape_cast %101 : vector<1x64x128xbf16> to vector<64x128xbf16>
    %cst_92 = arith.constant dense<0.000000e+00> : vector<64x128xf32>
    %103 = tpu.matmul %100, %102, %cst_92 {dimension_numbers = #tpu.dot_dimension_numbers<[1], [0], [0], [1], [0, 0, 1, 1], [], []>} : vector<64x64xbf16>, vector<64x128xbf16>, vector<64x128xf32> -> vector<64x128xf32>
    %104 = arith.addf %97, %103 : vector<64x128xf32>
    %c1_93 = arith.constant 1 : index
    %c0_94 = arith.constant 0 : index
    %c0_95 = arith.constant 0 : index
    %105 = vector.load %arg17[%c1_93, %c0_94, %c0_95] : memref<10x8x64xf32, #tpu.memory_space<vmem>>, vector<8x8x64xf32>
    %106 = vector.shape_cast %105 : vector<8x8x64xf32> to vector<64x64xf32>
    %107 = arith.truncf %106 : vector<64x64xf32> to vector<64x64xbf16>
    %c1_96 = arith.constant 1 : index
    %c0_97 = arith.constant 0 : index
    %c0_98 = arith.constant 0 : index
    %108 = vector.load %arg7[%c1_96, %c0_97, %c0_98] : memref<3x64x128xbf16, #tpu.memory_space<vmem>>, vector<1x64x128xbf16>
    %109 = vector.shape_cast %108 : vector<1x64x128xbf16> to vector<64x128xbf16>
    %cst_99 = arith.constant dense<0.000000e+00> : vector<64x128xf32>
    %110 = tpu.matmul %107, %109, %cst_99 {dimension_numbers = #tpu.dot_dimension_numbers<[1], [0], [0], [1], [0, 0, 1, 1], [], []>} : vector<64x64xbf16>, vector<64x128xbf16>, vector<64x128xf32> -> vector<64x128xf32>
    %111 = arith.addf %104, %110 : vector<64x128xf32>
    %c2_100 = arith.constant 2 : index
    %c0_101 = arith.constant 0 : index
    %c0_102 = arith.constant 0 : index
    %112 = vector.load %arg17[%c2_100, %c0_101, %c0_102] : memref<10x8x64xf32, #tpu.memory_space<vmem>>, vector<8x8x64xf32>
    %113 = vector.shape_cast %112 : vector<8x8x64xf32> to vector<64x64xf32>
    %114 = arith.truncf %113 : vector<64x64xf32> to vector<64x64xbf16>
    %c2_103 = arith.constant 2 : index
    %c0_104 = arith.constant 0 : index
    %c0_105 = arith.constant 0 : index
    %115 = vector.load %arg7[%c2_103, %c0_104, %c0_105] : memref<3x64x128xbf16, #tpu.memory_space<vmem>>, vector<1x64x128xbf16>
    %116 = vector.shape_cast %115 : vector<1x64x128xbf16> to vector<64x128xbf16>
    %cst_106 = arith.constant dense<0.000000e+00> : vector<64x128xf32>
    %117 = tpu.matmul %114, %116, %cst_106 {dimension_numbers = #tpu.dot_dimension_numbers<[1], [0], [0], [1], [0, 0, 1, 1], [], []>} : vector<64x64xbf16>, vector<64x128xbf16>, vector<64x128xf32> -> vector<64x128xf32>
    %118 = arith.addf %111, %117 : vector<64x128xf32>
    %c0_107 = arith.constant 0 : index
    %c0_108 = arith.constant 0 : index
    %119 = vector.load %arg8[%c0_107, %c0_108] : memref<1x128xf32, #tpu.memory_space<vmem>>, vector<1x128xf32>
    %120 = vector.broadcast %119 : vector<1x128xf32> to vector<64x128xf32>
    %121 = arith.addf %118, %120 : vector<64x128xf32>
    %cst_109 = arith.constant 0.000000e+00 : f32
    %122 = vector.broadcast %cst_109 : f32 to vector<64x128xf32>
    %123 = arith.maximumf %121, %122 : vector<64x128xf32>
    %124 = vector.shape_cast %123 : vector<64x128xf32> to vector<8x8x128xf32>
    %cst_110 = arith.constant 0.000000e+00 : f32
    %125 = vector.broadcast %cst_110 : f32 to vector<8x128xf32>
    %c0_111 = arith.constant 0 : index
    %c0_112 = arith.constant 0 : index
    %c0_113 = arith.constant 0 : index
    %126 = vector.load %arg18[%c0_111, %c0_112, %c0_113] : memref<10x8x128xf32, #tpu.memory_space<vmem>>, vector<1x8x128xf32>
    %127 = vector.shape_cast %126 : vector<1x8x128xf32> to vector<8x128xf32>
    %128 = vector.shape_cast %125 : vector<8x128xf32> to vector<1x8x128xf32>
    tpu.vector_store %arg18[%c0_111, %c0_112, %c0_113], %128 {strides = array<i32>} : memref<10x8x128xf32, #tpu.memory_space<vmem>>, vector<1x8x128xf32>,
    %c9_114 = arith.constant 9 : index
    %c0_115 = arith.constant 0 : index
    %c0_116 = arith.constant 0 : index
    %129 = vector.load %arg18[%c9_114, %c0_115, %c0_116] : memref<10x8x128xf32, #tpu.memory_space<vmem>>, vector<1x8x128xf32>
    %130 = vector.shape_cast %129 : vector<1x8x128xf32> to vector<8x128xf32>
    %131 = vector.shape_cast %125 : vector<8x128xf32> to vector<1x8x128xf32>
    tpu.vector_store %arg18[%c9_114, %c0_115, %c0_116], %131 {strides = array<i32>} : memref<10x8x128xf32, #tpu.memory_space<vmem>>, vector<1x8x128xf32>,
    %c1_117 = arith.constant 1 : index
    %c0_118 = arith.constant 0 : index
    %c0_119 = arith.constant 0 : index
    %132 = vector.load %arg18[%c1_117, %c0_118, %c0_119] : memref<10x8x128xf32, #tpu.memory_space<vmem>>, vector<8x8x128xf32>
    tpu.vector_store %arg18[%c1_117, %c0_118, %c0_119], %124 {strides = array<i32>} : memref<10x8x128xf32, #tpu.memory_space<vmem>>, vector<8x8x128xf32>,
    %cst_120 = arith.constant 0.000000e+00 : f32
    %133 = vector.broadcast %cst_120 : f32 to vector<64x128xf32>
    %c0_121 = arith.constant 0 : index
    %c0_122 = arith.constant 0 : index
    %c0_123 = arith.constant 0 : index
    %134 = vector.load %arg18[%c0_121, %c0_122, %c0_123] : memref<10x8x128xf32, #tpu.memory_space<vmem>>, vector<8x8x128xf32>
    %135 = vector.shape_cast %134 : vector<8x8x128xf32> to vector<64x128xf32>
    %136 = arith.truncf %135 : vector<64x128xf32> to vector<64x128xbf16>
    %c0_124 = arith.constant 0 : index
    %c0_125 = arith.constant 0 : index
    %c0_126 = arith.constant 0 : index
    %137 = vector.load %arg9[%c0_124, %c0_125, %c0_126] : memref<3x128x128xbf16, #tpu.memory_space<vmem>>, vector<1x128x128xbf16>
    %138 = vector.shape_cast %137 : vector<1x128x128xbf16> to vector<128x128xbf16>
    %cst_127 = arith.constant dense<0.000000e+00> : vector<64x128xf32>
    %139 = tpu.matmul %136, %138, %cst_127 {dimension_numbers = #tpu.dot_dimension_numbers<[1], [0], [0], [1], [0, 0, 1, 1], [], []>} : vector<64x128xbf16>, vector<128x128xbf16>, vector<64x128xf32> -> vector<64x128xf32>
    %140 = arith.addf %133, %139 : vector<64x128xf32>
    %c1_128 = arith.constant 1 : index
    %c0_129 = arith.constant 0 : index
    %c0_130 = arith.constant 0 : index
    %141 = vector.load %arg18[%c1_128, %c0_129, %c0_130] : memref<10x8x128xf32, #tpu.memory_space<vmem>>, vector<8x8x128xf32>
    %142 = vector.shape_cast %141 : vector<8x8x128xf32> to vector<64x128xf32>
    %143 = arith.truncf %142 : vector<64x128xf32> to vector<64x128xbf16>
    %c1_131 = arith.constant 1 : index
    %c0_132 = arith.constant 0 : index
    %c0_133 = arith.constant 0 : index
    %144 = vector.load %arg9[%c1_131, %c0_132, %c0_133] : memref<3x128x128xbf16, #tpu.memory_space<vmem>>, vector<1x128x128xbf16>
    %145 = vector.shape_cast %144 : vector<1x128x128xbf16> to vector<128x128xbf16>
    %cst_134 = arith.constant dense<0.000000e+00> : vector<64x128xf32>
    %146 = tpu.matmul %143, %145, %cst_134 {dimension_numbers = #tpu.dot_dimension_numbers<[1], [0], [0], [1], [0, 0, 1, 1], [], []>} : vector<64x128xbf16>, vector<128x128xbf16>, vector<64x128xf32> -> vector<64x128xf32>
    %147 = arith.addf %140, %146 : vector<64x128xf32>
    %c2_135 = arith.constant 2 : index
    %c0_136 = arith.constant 0 : index
    %c0_137 = arith.constant 0 : index
    %148 = vector.load %arg18[%c2_135, %c0_136, %c0_137] : memref<10x8x128xf32, #tpu.memory_space<vmem>>, vector<8x8x128xf32>
    %149 = vector.shape_cast %148 : vector<8x8x128xf32> to vector<64x128xf32>
    %150 = arith.truncf %149 : vector<64x128xf32> to vector<64x128xbf16>
    %c2_138 = arith.constant 2 : index
    %c0_139 = arith.constant 0 : index
    %c0_140 = arith.constant 0 : index
    %151 = vector.load %arg9[%c2_138, %c0_139, %c0_140] : memref<3x128x128xbf16, #tpu.memory_space<vmem>>, vector<1x128x128xbf16>
    %152 = vector.shape_cast %151 : vector<1x128x128xbf16> to vector<128x128xbf16>
    %cst_141 = arith.constant dense<0.000000e+00> : vector<64x128xf32>
    %153 = tpu.matmul %150, %152, %cst_141 {dimension_numbers = #tpu.dot_dimension_numbers<[1], [0], [0], [1], [0, 0, 1, 1], [], []>} : vector<64x128xbf16>, vector<128x128xbf16>, vector<64x128xf32> -> vector<64x128xf32>
    %154 = arith.addf %147, %153 : vector<64x128xf32>
    %c0_142 = arith.constant 0 : index
    %c0_143 = arith.constant 0 : index
    %155 = vector.load %arg10[%c0_142, %c0_143] : memref<1x128xf32, #tpu.memory_space<vmem>>, vector<1x128xf32>
    %156 = vector.broadcast %155 : vector<1x128xf32> to vector<64x128xf32>
    %157 = arith.addf %154, %156 : vector<64x128xf32>
    %cst_144 = arith.constant 0.000000e+00 : f32
    %158 = vector.broadcast %cst_144 : f32 to vector<64x128xf32>
    %159 = arith.maximumf %157, %158 : vector<64x128xf32>
    %160 = vector.shape_cast %159 : vector<64x128xf32> to vector<8x8x128xf32>
    %161 = vector.shape_cast %160 : vector<8x8x128xf32> to vector<4x2x8x128xf32>
    %162 = vector.extract_strided_slice %161 {offsets = [0, 0, 0, 0], sizes = [4, 1, 8, 128], strides = [1, 1, 1, 1]} : vector<4x2x8x128xf32> to vector<4x1x8x128xf32>
    %163 = vector.shape_cast %162 : vector<4x1x8x128xf32> to vector<4x8x128xf32>
    %164 = vector.extract_strided_slice %161 {offsets = [0, 1, 0, 0], sizes = [4, 1, 8, 128], strides = [1, 1, 1, 1]} : vector<4x2x8x128xf32> to vector<4x1x8x128xf32>
    %165 = vector.shape_cast %164 : vector<4x1x8x128xf32> to vector<4x8x128xf32>
    %166 = arith.maximumf %163, %165 : vector<4x8x128xf32>
    %167 = vector.shape_cast %166 : vector<4x8x128xf32> to vector<32x128xf32>
    %168 = arith.truncf %167 : vector<32x128xf32> to vector<32x128xbf16>
    %c0_145 = arith.constant 0 : index
    %c0_146 = arith.constant 0 : index
    %c0_147 = arith.constant 0 : index
    %169 = vector.load %arg11[%c0_145, %c0_146, %c0_147] : memref<2x128x64xbf16, #tpu.memory_space<vmem>>, vector<1x128x64xbf16>
    %170 = vector.shape_cast %169 : vector<1x128x64xbf16> to vector<128x64xbf16>
    %cst_148 = arith.constant dense<0.000000e+00> : vector<32x64xf32>
    %171 = tpu.matmul %168, %170, %cst_148 {dimension_numbers = #tpu.dot_dimension_numbers<[1], [0], [0], [1], [0, 0, 1, 1], [], []>} : vector<32x128xbf16>, vector<128x64xbf16>, vector<32x64xf32> -> vector<32x64xf32>
    %c1_149 = arith.constant 1 : index
    %c0_150 = arith.constant 0 : index
    %c0_151 = arith.constant 0 : index
    %172 = vector.load %arg11[%c1_149, %c0_150, %c0_151] : memref<2x128x64xbf16, #tpu.memory_space<vmem>>, vector<1x128x64xbf16>
    %173 = vector.shape_cast %172 : vector<1x128x64xbf16> to vector<128x64xbf16>
    %cst_152 = arith.constant dense<0.000000e+00> : vector<32x64xf32>
    %174 = tpu.matmul %168, %173, %cst_152 {dimension_numbers = #tpu.dot_dimension_numbers<[1], [0], [0], [1], [0, 0, 1, 1], [], []>} : vector<32x128xbf16>, vector<128x64xbf16>, vector<32x64xf32> -> vector<32x64xf32>
    %175 = arith.maximumf %171, %174 : vector<32x64xf32>
    %176 = vector.shape_cast %175 : vector<32x64xf32> to vector<4x8x64xf32>
    %cst_153 = arith.constant 0.000000e+00 : f32
    %177 = vector.broadcast %cst_153 : f32 to vector<8x16xf32>
    %178 = vector.extract_strided_slice %176 {offsets = [0, 0, 0], sizes = [1, 8, 64], strides = [1, 1, 1]} : vector<4x8x64xf32> to vector<1x8x64xf32>
    %179 = vector.shape_cast %178 : vector<1x8x64xf32> to vector<8x64xf32>
    %180 = arith.truncf %179 : vector<8x64xf32> to vector<8x64xbf16>
    %c0_154 = arith.constant 0 : index
    %c0_155 = arith.constant 0 : index
    %c0_156 = arith.constant 0 : index
    %181 = vector.load %arg12[%c0_154, %c0_155, %c0_156] : memref<4x64x16xbf16, #tpu.memory_space<vmem>>, vector<1x64x16xbf16>
    %182 = vector.shape_cast %181 : vector<1x64x16xbf16> to vector<64x16xbf16>
    %cst_157 = arith.constant dense<0.000000e+00> : vector<8x16xf32>
    %183 = tpu.matmul %180, %182, %cst_157 {dimension_numbers = #tpu.dot_dimension_numbers<[1], [0], [0], [1], [0, 0, 1, 1], [], []>} : vector<8x64xbf16>, vector<64x16xbf16>, vector<8x16xf32> -> vector<8x16xf32>
    %184 = arith.addf %177, %183 : vector<8x16xf32>
    %185 = vector.extract_strided_slice %176 {offsets = [1, 0, 0], sizes = [1, 8, 64], strides = [1, 1, 1]} : vector<4x8x64xf32> to vector<1x8x64xf32>
    %186 = vector.shape_cast %185 : vector<1x8x64xf32> to vector<8x64xf32>
    %187 = arith.truncf %186 : vector<8x64xf32> to vector<8x64xbf16>
    %c1_158 = arith.constant 1 : index
    %c0_159 = arith.constant 0 : index
    %c0_160 = arith.constant 0 : index
    %188 = vector.load %arg12[%c1_158, %c0_159, %c0_160] : memref<4x64x16xbf16, #tpu.memory_space<vmem>>, vector<1x64x16xbf16>
    %189 = vector.shape_cast %188 : vector<1x64x16xbf16> to vector<64x16xbf16>
    %cst_161 = arith.constant dense<0.000000e+00> : vector<8x16xf32>
    %190 = tpu.matmul %187, %189, %cst_161 {dimension_numbers = #tpu.dot_dimension_numbers<[1], [0], [0], [1], [0, 0, 1, 1], [], []>} : vector<8x64xbf16>, vector<64x16xbf16>, vector<8x16xf32> -> vector<8x16xf32>
    %191 = arith.addf %184, %190 : vector<8x16xf32>
    %192 = vector.extract_strided_slice %176 {offsets = [2, 0, 0], sizes = [1, 8, 64], strides = [1, 1, 1]} : vector<4x8x64xf32> to vector<1x8x64xf32>
    %193 = vector.shape_cast %192 : vector<1x8x64xf32> to vector<8x64xf32>
    %194 = arith.truncf %193 : vector<8x64xf32> to vector<8x64xbf16>
    %c2_162 = arith.constant 2 : index
    %c0_163 = arith.constant 0 : index
    %c0_164 = arith.constant 0 : index
    %195 = vector.load %arg12[%c2_162, %c0_163, %c0_164] : memref<4x64x16xbf16, #tpu.memory_space<vmem>>, vector<1x64x16xbf16>
    %196 = vector.shape_cast %195 : vector<1x64x16xbf16> to vector<64x16xbf16>
    %cst_165 = arith.constant dense<0.000000e+00> : vector<8x16xf32>
    %197 = tpu.matmul %194, %196, %cst_165 {dimension_numbers = #tpu.dot_dimension_numbers<[1], [0], [0], [1], [0, 0, 1, 1], [], []>} : vector<8x64xbf16>, vector<64x16xbf16>, vector<8x16xf32> -> vector<8x16xf32>
    %198 = arith.addf %191, %197 : vector<8x16xf32>
    %199 = vector.extract_strided_slice %176 {offsets = [3, 0, 0], sizes = [1, 8, 64], strides = [1, 1, 1]} : vector<4x8x64xf32> to vector<1x8x64xf32>
    %200 = vector.shape_cast %199 : vector<1x8x64xf32> to vector<8x64xf32>
    %201 = arith.truncf %200 : vector<8x64xf32> to vector<8x64xbf16>
    %c3 = arith.constant 3 : index
    %c0_166 = arith.constant 0 : index
    %c0_167 = arith.constant 0 : index
    %202 = vector.load %arg12[%c3, %c0_166, %c0_167] : memref<4x64x16xbf16, #tpu.memory_space<vmem>>, vector<1x64x16xbf16>
    %203 = vector.shape_cast %202 : vector<1x64x16xbf16> to vector<64x16xbf16>
    %cst_168 = arith.constant dense<0.000000e+00> : vector<8x16xf32>
    %204 = tpu.matmul %201, %203, %cst_168 {dimension_numbers = #tpu.dot_dimension_numbers<[1], [0], [0], [1], [0, 0, 1, 1], [], []>} : vector<8x64xbf16>, vector<64x16xbf16>, vector<8x16xf32> -> vector<8x16xf32>
    %205 = arith.addf %198, %204 : vector<8x16xf32>
    %c0_169 = arith.constant 0 : index
    %c0_170 = arith.constant 0 : index
    %206 = vector.load %arg13[%c0_169, %c0_170] : memref<1x16xf32, #tpu.memory_space<vmem>>, vector<1x16xf32>
    %207 = vector.broadcast %206 : vector<1x16xf32> to vector<8x16xf32>
    %208 = arith.addf %205, %207 : vector<8x16xf32>
    %c0_171 = arith.constant 0 : index
    %c0_172 = arith.constant 0 : index
    %209 = vector.load %arg14[%c0_171, %c0_172] : memref<8x16xf32, #tpu.memory_space<vmem>>, vector<8x16xf32>
    tpu.vector_store %arg14[%c0_171, %c0_172], %208 {strides = array<i32>} : memref<8x16xf32, #tpu.memory_space<vmem>>, vector<8x16xf32>,
    return
  }
  func.func @transform_0(%arg0: i32) -> (i32, i32, i32) {
    %c0_i32 = arith.constant 0 : i32
    %c0_i32_0 = arith.constant 0 : i32
    %c0_i32_1 = arith.constant 0 : i32
    return %c0_i32, %arg0, %c0_i32_0 : i32, i32, i32
  }
  func.func @transform_1(%arg0: i32) -> (i32, i32, i32) {
    %c0_i32 = arith.constant 0 : i32
    %c0_i32_0 = arith.constant 0 : i32
    %c0_i32_1 = arith.constant 0 : i32
    %c0_i32_2 = arith.constant 0 : i32
    return %c0_i32, %c0_i32_0, %c0_i32_1 : i32, i32, i32
  }
  func.func @transform_2(%arg0: i32) -> (i32, i32) {
    %c0_i32 = arith.constant 0 : i32
    %c0_i32_0 = arith.constant 0 : i32
    %c0_i32_1 = arith.constant 0 : i32
    return %c0_i32, %c0_i32_0 : i32, i32
  }
  func.func @transform_3(%arg0: i32) -> (i32, i32, i32) {
    %c0_i32 = arith.constant 0 : i32
    %c0_i32_0 = arith.constant 0 : i32
    %c0_i32_1 = arith.constant 0 : i32
    %c0_i32_2 = arith.constant 0 : i32
    return %c0_i32, %c0_i32_0, %c0_i32_1 : i32, i32, i32
  }
  func.func @transform_4(%arg0: i32) -> (i32, i32) {
    %c0_i32 = arith.constant 0 : i32
    %c0_i32_0 = arith.constant 0 : i32
    %c0_i32_1 = arith.constant 0 : i32
    return %c0_i32, %c0_i32_0 : i32, i32
  }
  func.func @transform_5(%arg0: i32) -> (i32, i32, i32) {
    %c0_i32 = arith.constant 0 : i32
    %c0_i32_0 = arith.constant 0 : i32
    %c0_i32_1 = arith.constant 0 : i32
    %c0_i32_2 = arith.constant 0 : i32
    return %c0_i32, %c0_i32_0, %c0_i32_1 : i32, i32, i32
  }
  func.func @transform_6(%arg0: i32) -> (i32, i32, i32) {
    %c0_i32 = arith.constant 0 : i32
    %c0_i32_0 = arith.constant 0 : i32
    %c0_i32_1 = arith.constant 0 : i32
    %c0_i32_2 = arith.constant 0 : i32
    return %c0_i32, %c0_i32_0, %c0_i32_1 : i32, i32, i32
  }
  func.func @transform_7(%arg0: i32) -> (i32, i32) {
    %c0_i32 = arith.constant 0 : i32
    %c0_i32_0 = arith.constant 0 : i32
    %c0_i32_1 = arith.constant 0 : i32
    return %c0_i32, %c0_i32_0 : i32, i32
  }
  func.func @transform_8(%arg0: i32) -> (i32, i32, i32) {
    %c0_i32 = arith.constant 0 : i32
    %c0_i32_0 = arith.constant 0 : i32
    %c0_i32_1 = arith.constant 0 : i32
    %c0_i32_2 = arith.constant 0 : i32
    return %c0_i32, %c0_i32_0, %c0_i32_1 : i32, i32, i32
  }
  func.func @transform_9(%arg0: i32) -> (i32, i32) {
    %c0_i32 = arith.constant 0 : i32
    %c0_i32_0 = arith.constant 0 : i32
    %c0_i32_1 = arith.constant 0 : i32
    return %c0_i32, %c0_i32_0 : i32, i32
  }
  func.func @transform_10(%arg0: i32) -> (i32, i32, i32) {
    %c0_i32 = arith.constant 0 : i32
    %c0_i32_0 = arith.constant 0 : i32
    %c0_i32_1 = arith.constant 0 : i32
    %c0_i32_2 = arith.constant 0 : i32
    return %c0_i32, %c0_i32_0, %c0_i32_1 : i32, i32, i32
  }
  func.func @transform_11(%arg0: i32) -> (i32, i32, i32) {
    %c0_i32 = arith.constant 0 : i32
    %c0_i32_0 = arith.constant 0 : i32
    %c0_i32_1 = arith.constant 0 : i32
    %c0_i32_2 = arith.constant 0 : i32
    return %c0_i32, %c0_i32_0, %c0_i32_1 : i32, i32, i32
  }
  func.func @transform_12(%arg0: i32) -> (i32, i32) {
    %c0_i32 = arith.constant 0 : i32
    %c0_i32_0 = arith.constant 0 : i32
    %c0_i32_1 = arith.constant 0 : i32
    return %c0_i32, %c0_i32_0 : i32, i32
  }
  func.func @transform_13(%arg0: i32) -> (i32, i32) {
    %c0_i32 = arith.constant 0 : i32
    %c0_i32_0 = arith.constant 0 : i32
    return %arg0, %c0_i32 : i32, i32
  }
}

</mosaic_0001>

<llo_original>
// kernel: cae_encoder_forward.1
$region0: #{cae_encoder_forward.1}
  #allocation0 [shape = 'u32[]', space=smem, size = 0x4, offset = 0x4, fixed_abs, tag = 'smem constant byte address 0x4 - core index']
  #allocation1 [shape = 'u32[72,128]{1,0:T(1,128)}', space=vmem, size = 0x9000, scoped, tag = 'internal scratch']
  #allocation2 [shape = 'f32[18,8,64]{2,1,0:T(8,128)}', space=vmem, size = 0x12000, scoped, tag = 'scratch operand']
  #allocation3 [shape = 'f32[18,8,128]{2,1,0:T(8,128)}', space=vmem, size = 0x12000, scoped, tag = 'scratch operand']
  #allocation4 [shape = 'f32[10,8,64]{2,1,0:T(8,128)}', space=vmem, size = 0xa000, scoped, tag = 'scratch operand']
  #allocation5 [shape = 'f32[10,8,128]{2,1,0:T(8,128)}', space=vmem, size = 0xa000, scoped, tag = 'scratch operand']
  %s0 = inlined_call_operand.vmem [shape: f32[16,16,64], index: 0, kind: input, shape index: {}]
  %s1 = inlined_call_operand.vmem [shape: bf16[3,64,128], index: 1, kind: input, shape index: {}]
  %s2 = inlined_call_operand.vmem [shape: f32[1,128], index: 2, kind: input, shape index: {}]
  %s3 = inlined_call_operand.vmem [shape: bf16[3,128,128], index: 3, kind: input, shape index: {}]
  %s4 = inlined_call_operand.vmem [shape: f32[1,128], index: 4, kind: input, shape index: {}]
  %s5 = inlined_call_operand.vmem [shape: bf16[2,128,64], index: 5, kind: input, shape index: {}]
  %s6 = inlined_call_operand.vmem [shape: bf16[3,64,128], index: 6, kind: input, shape index: {}]
  %s7 = inlined_call_operand.vmem [shape: f32[1,128], index: 7, kind: input, shape index: {}]
  %s8 = inlined_call_operand.vmem [shape: bf16[3,128,128], index: 8, kind: input, shape index: {}]
  %s9 = inlined_call_operand.vmem [shape: f32[1,128], index: 9, kind: input, shape index: {}]
  %s10 = inlined_call_operand.vmem [shape: bf16[2,128,64], index: 10, kind: input, shape index: {}]
  %s11 = inlined_call_operand.vmem [shape: bf16[4,64,16], index: 11, kind: input, shape index: {}]
  %s12 = inlined_call_operand.vmem [shape: f32[1,16], index: 12, kind: input, shape index: {}]
  %s13 = inlined_call_operand.hbm [shape: f32[16,16], index: 13, kind: output, shape index: {}]
  %s14 = sld [smem:[#allocation0]]
  $region123: #{cae_encoder_forward.1} parent=0
    _
  %s16 = ssub.s32 1, %s14
  %s17 = scalar_select 0, %s16, %s14
  $region1: #{cae_encoder_forward.1} parent=0
    #allocation6 [shape = 'u8[131072]{0}', space=vmem, size = 0x20000, scoped, tag = 'input window, operand 0']
    #allocation7 [shape = 'u8[8192]{0}', space=vmem, size = 0x2000, scoped, tag = 'output window, operand 0']
    #allocation8 [shape = 's32[2]{0}', space=sflag, size = 0x8, scoped, tag = 'scoped memory for cae_encoder_forward.1']
    %18 = vsyncpa [#allocation8], 0
    %s19 = scalar_lea.sflag [#allocation8], 1
    %20 = vsyncpa %s19, 0
    loop: start=0, step=1, limit=4
    $region2: #{cae_encoder_forward.1} parent=1 // loop_pre_header
      _
    $region3: #{cae_encoder_forward.1} parent=1 // loop_header
      %s22 = sphi 0, %s26
      %p23 = scmp.ge.s32.totalorder %s22, 4
      %s32 = sphi 0, %s34
      %s35 = sphi 0, %s32
      %s36 = sphi 0, %s35
      %s52 = sphi 0, %s36
      %s56 = sphi 0, %s56
      %s58 = sphi 0, %s56
      %s59 = sphi 0, %s58
      %s73 = sphi 0, %s59
      %s77 = sphi 0, %s77
      %s79 = sphi 0, %s77
      %s80 = sphi 0, %s79
      %s94 = sphi 0, %s80
      %s98 = sphi 0, %s98
      %s100 = sphi 0, %s98
      %s101 = sphi 0, %s100
      %s115 = sphi 0, %s101
      %s119 = sphi 0, %s119
      %s121 = sphi 0, %s119
      %s122 = sphi 0, %s121
      %s136 = sphi 0, %s122
      %s140 = sphi 0, %s140
      %s142 = sphi 0, %s140
      %s143 = sphi 0, %s142
      %s157 = sphi 0, %s143
      %s161 = sphi 0, %s161
      %s163 = sphi 0, %s161
      %s164 = sphi 0, %s163
      %s178 = sphi 0, %s164
      %s182 = sphi 0, %s182
      %s184 = sphi 0, %s182
      %s185 = sphi 0, %s184
      %s199 = sphi 0, %s185
      %s203 = sphi 0, %s203
      %s205 = sphi 0, %s203
      %s206 = sphi 0, %s205
      %s220 = sphi 0, %s206
      %s224 = sphi 0, %s224
      %s226 = sphi 0, %s224
      %s227 = sphi 0, %s226
      %s241 = sphi 0, %s227
      %s245 = sphi 0, %s245
      %s247 = sphi 0, %s245
      %s248 = sphi 0, %s247
      %s262 = sphi 0, %s248
      %s266 = sphi 0, %s266
      %s268 = sphi 0, %s266
      %s269 = sphi 0, %s268
      %s283 = sphi 0, %s269
      %s287 = sphi 0, %s287
      %s289 = sphi 0, %s287
      %s290 = sphi 0, %s289
      %s304 = sphi 0, %s290
      %s310 = sphi 0, %s312
      %s313 = sphi 0, %s310
      %s314 = sphi 0, %s313
      %s330 = sphi 0, %s314
    $region4: #{cae_encoder_forward.1} parent=1 // loop_header_branch
      %25 = sbr.rel (%p23) target = $region8
    $region5: #{cae_encoder_forward.1} parent=1 // loop_body
      %s27 = ssub.s32 %s22, 1
      %s28 = ssub.s32 %s22, 2
      %s29 = sadd.s32 %s22, 1
      %s30 = ssub.s32 %s22, %s29
      %p31 = scmp.eq.s32.totalorder %s30, 0
      %s33 = sadd.s32 %s32, 1
      %s34 = scalar_select %p31, %s32, %s33
      %p37 = pneg %p31
      %p38 = scmp.eq.s32.totalorder %s22, 1
      %p39 = por %p37, %p38
      %p40 = scmp.ne.s32.totalorder %s32, %s35
      %p41 = scmp.eq.s32.totalorder %s22, 0
      %p42 = por %p40, %p41
      %p43 = scmp.ne.s32.totalorder %s32, %s35
      %p44 = scmp.eq.s32.totalorder %s27, 1
      %p45 = por %p43, %p44
      %p46 = scmp.ne.s32.totalorder %s35, %s36
      %p47 = scmp.eq.s32.totalorder %s27, 0
      %p48 = por %p46, %p47
      %p49 = scmp.ne.s32.totalorder %s35, %s36
      %p50 = scmp.eq.s32.totalorder %s28, 1
      %p51 = por %p49, %p50
      %p53 = scmp.ne.s32.totalorder %s36, %s52
      %p54 = scmp.eq.s32.totalorder %s28, 0
      %p55 = por %p53, %p54
      %s57 = sadd.s32 %s56, 1
      %p60 = scmp.eq.s32.totalorder %s22, 1
      %p61 = scmp.ne.s32.totalorder %s56, %s58
      %p62 = scmp.eq.s32.totalorder %s22, 0
      %p63 = por %p61, %p62
      %p64 = scmp.ne.s32.totalorder %s56, %s58
      %p65 = scmp.eq.s32.totalorder %s27, 1
      %p66 = por %p64, %p65
      %p67 = scmp.ne.s32.totalorder %s58, %s59
      %p68 = scmp.eq.s32.totalorder %s27, 0
      %p69 = por %p67, %p68
      %p70 = scmp.ne.s32.totalorder %s58, %s59
      %p71 = scmp.eq.s32.totalorder %s28, 1
      %p72 = por %p70, %p71
      %p74 = scmp.ne.s32.totalorder %s59, %s73
      %p75 = scmp.eq.s32.totalorder %s28, 0
      %p76 = por %p74, %p75
      %s78 = sadd.s32 %s77, 1
      %p81 = scmp.eq.s32.totalorder %s22, 1
      %p82 = scmp.ne.s32.totalorder %s77, %s79
      %p83 = scmp.eq.s32.totalorder %s22, 0
      %p84 = por %p82, %p83
      %p85 = scmp.ne.s32.totalorder %s77, %s79
      %p86 = scmp.eq.s32.totalorder %s27, 1
      %p87 = por %p85, %p86
      %p88 = scmp.ne.s32.totalorder %s79, %s80
      %p89 = scmp.eq.s32.totalorder %s27, 0
      %p90 = por %p88, %p89
      %p91 = scmp.ne.s32.totalorder %s79, %s80
      %p92 = scmp.eq.s32.totalorder %s28, 1
      %p93 = por %p91, %p92
      %p95 = scmp.ne.s32.totalorder %s80, %s94
      %p96 = scmp.eq.s32.totalorder %s28, 0
      %p97 = por %p95, %p96
      %s99 = sadd.s32 %s98, 1
      %p102 = scmp.eq.s32.totalorder %s22, 1
      %p103 = scmp.ne.s32.totalorder %s98, %s100
      %p104 = scmp.eq.s32.totalorder %s22, 0
      %p105 = por %p103, %p104
      %p106 = scmp.ne.s32.totalorder %s98, %s100
      %p107 = scmp.eq.s32.totalorder %s27, 1
      %p108 = por %p106, %p107
      %p109 = scmp.ne.s32.totalorder %s100, %s101
      %p110 = scmp.eq.s32.totalorder %s27, 0
      %p111 = por %p109, %p110
      %p112 = scmp.ne.s32.totalorder %s100, %s101
      %p113 = scmp.eq.s32.totalorder %s28, 1
      %p114 = por %p112, %p113
      %p116 = scmp.ne.s32.totalorder %s101, %s115
      %p117 = scmp.eq.s32.totalorder %s28, 0
      %p118 = por %p116, %p117
      %s120 = sadd.s32 %s119, 1
      %p123 = scmp.eq.s32.totalorder %s22, 1
      %p124 = scmp.ne.s32.totalorder %s119, %s121
      %p125 = scmp.eq.s32.totalorder %s22, 0
      %p126 = por %p124, %p125
      %p127 = scmp.ne.s32.totalorder %s119, %s121
      %p128 = scmp.eq.s32.totalorder %s27, 1
      %p129 = por %p127, %p128
      %p130 = scmp.ne.s32.totalorder %s121, %s122
      %p131 = scmp.eq.s32.totalorder %s27, 0
      %p132 = por %p130, %p131
      %p133 = scmp.ne.s32.totalorder %s121, %s122
      %p134 = scmp.eq.s32.totalorder %s28, 1
      %p135 = por %p133, %p134
      %p137 = scmp.ne.s32.totalorder %s122, %s136
      %p138 = scmp.eq.s32.totalorder %s28, 0
      %p139 = por %p137, %p138
      %s141 = sadd.s32 %s140, 1
      %p144 = scmp.eq.s32.totalorder %s22, 1
      %p145 = scmp.ne.s32.totalorder %s140, %s142
      %p146 = scmp.eq.s32.totalorder %s22, 0
      %p147 = por %p145, %p146
      %p148 = scmp.ne.s32.totalorder %s140, %s142
      %p149 = scmp.eq.s32.totalorder %s27, 1
      %p150 = por %p148, %p149
      %p151 = scmp.ne.s32.totalorder %s142, %s143
      %p152 = scmp.eq.s32.totalorder %s27, 0
      %p153 = por %p151, %p152
      %p154 = scmp.ne.s32.totalorder %s142, %s143
      %p155 = scmp.eq.s32.totalorder %s28, 1
      %p156 = por %p154, %p155
      %p158 = scmp.ne.s32.totalorder %s143, %s157
      %p159 = scmp.eq.s32.totalorder %s28, 0
      %p160 = por %p158, %p159
      %s162 = sadd.s32 %s161, 1
      %p165 = scmp.eq.s32.totalorder %s22, 1
      %p166 = scmp.ne.s32.totalorder %s161, %s163
      %p167 = scmp.eq.s32.totalorder %s22, 0
      %p168 = por %p166, %p167
      %p169 = scmp.ne.s32.totalorder %s161, %s163
      %p170 = scmp.eq.s32.totalorder %s27, 1
      %p171 = por %p169, %p170
      %p172 = scmp.ne.s32.totalorder %s163, %s164
      %p173 = scmp.eq.s32.totalorder %s27, 0
      %p174 = por %p172, %p173
      %p175 = scmp.ne.s32.totalorder %s163, %s164
      %p176 = scmp.eq.s32.totalorder %s28, 1
      %p177 = por %p175, %p176
      %p179 = scmp.ne.s32.totalorder %s164, %s178
      %p180 = scmp.eq.s32.totalorder %s28, 0
      %p181 = por %p179, %p180
      %s183 = sadd.s32 %s182, 1
      %p186 = scmp.eq.s32.totalorder %s22, 1
      %p187 = scmp.ne.s32.totalorder %s182, %s184
      %p188 = scmp.eq.s32.totalorder %s22, 0
      %p189 = por %p187, %p188
      %p190 = scmp.ne.s32.totalorder %s182, %s184
      %p191 = scmp.eq.s32.totalorder %s27, 1
      %p192 = por %p190, %p191
      %p193 = scmp.ne.s32.totalorder %s184, %s185
      %p194 = scmp.eq.s32.totalorder %s27, 0
      %p195 = por %p193, %p194
      %p196 = scmp.ne.s32.totalorder %s184, %s185
      %p197 = scmp.eq.s32.totalorder %s28, 1
      %p198 = por %p196, %p197
      %p200 = scmp.ne.s32.totalorder %s185, %s199
      %p201 = scmp.eq.s32.totalorder %s28, 0
      %p202 = por %p200, %p201
      %s204 = sadd.s32 %s203, 1
      %p207 = scmp.eq.s32.totalorder %s22, 1
      %p208 = scmp.ne.s32.totalorder %s203, %s205
      %p209 = scmp.eq.s32.totalorder %s22, 0
      %p210 = por %p208, %p209
      %p211 = scmp.ne.s32.totalorder %s203, %s205
      %p212 = scmp.eq.s32.totalorder %s27, 1
      %p213 = por %p211, %p212
      %p214 = scmp.ne.s32.totalorder %s205, %s206
      %p215 = scmp.eq.s32.totalorder %s27, 0
      %p216 = por %p214, %p215
      %p217 = scmp.ne.s32.totalorder %s205, %s206
      %p218 = scmp.eq.s32.totalorder %s28, 1
      %p219 = por %p217, %p218
      %p221 = scmp.ne.s32.totalorder %s206, %s220
      %p222 = scmp.eq.s32.totalorder %s28, 0
      %p223 = por %p221, %p222
      %s225 = sadd.s32 %s224, 1
      %p228 = scmp.eq.s32.totalorder %s22, 1
      %p229 = scmp.ne.s32.totalorder %s224, %s226
      %p230 = scmp.eq.s32.totalorder %s22, 0
      %p231 = por %p229, %p230
      %p232 = scmp.ne.s32.totalorder %s224, %s226
      %p233 = scmp.eq.s32.totalorder %s27, 1
      %p234 = por %p232, %p233
      %p235 = scmp.ne.s32.totalorder %s226, %s227
      %p236 = scmp.eq.s32.totalorder %s27, 0
      %p237 = por %p235, %p236
      %p238 = scmp.ne.s32.totalorder %s226, %s227
      %p239 = scmp.eq.s32.totalorder %s28, 1
      %p240 = por %p238, %p239
      %p242 = scmp.ne.s32.totalorder %s227, %s241
      %p243 = scmp.eq.s32.totalorder %s28, 0
      %p244 = por %p242, %p243
      %s246 = sadd.s32 %s245, 1
      %p249 = scmp.eq.s32.totalorder %s22, 1
      %p250 = scmp.ne.s32.totalorder %s245, %s247
      %p251 = scmp.eq.s32.totalorder %s22, 0
      %p252 = por %p250, %p251
      %p253 = scmp.ne.s32.totalorder %s245, %s247
      %p254 = scmp.eq.s32.totalorder %s27, 1
      %p255 = por %p253, %p254
      %p256 = scmp.ne.s32.totalorder %s247, %s248
      %p257 = scmp.eq.s32.totalorder %s27, 0
      %p258 = por %p256, %p257
      %p259 = scmp.ne.s32.totalorder %s247, %s248
      %p260 = scmp.eq.s32.totalorder %s28, 1
      %p261 = por %p259, %p260
      %p263 = scmp.ne.s32.totalorder %s248, %s262
      %p264 = scmp.eq.s32.totalorder %s28, 0
      %p265 = por %p263, %p264
      %s267 = sadd.s32 %s266, 1
      %p270 = scmp.eq.s32.totalorder %s22, 1
      %p271 = scmp.ne.s32.totalorder %s266, %s268
      %p272 = scmp.eq.s32.totalorder %s22, 0
      %p273 = por %p271, %p272
      %p274 = scmp.ne.s32.totalorder %s266, %s268
      %p275 = scmp.eq.s32.totalorder %s27, 1
      %p276 = por %p274, %p275
      %p277 = scmp.ne.s32.totalorder %s268, %s269
      %p278 = scmp.eq.s32.totalorder %s27, 0
      %p279 = por %p277, %p278
      %p280 = scmp.ne.s32.totalorder %s268, %s269
      %p281 = scmp.eq.s32.totalorder %s28, 1
      %p282 = por %p280, %p281
      %p284 = scmp.ne.s32.totalorder %s269, %s283
      %p285 = scmp.eq.s32.totalorder %s28, 0
      %p286 = por %p284, %p285
      %s288 = sadd.s32 %s287, 1
      %p291 = scmp.eq.s32.totalorder %s22, 1
      %p292 = scmp.ne.s32.totalorder %s287, %s289
      %p293 = scmp.eq.s32.totalorder %s22, 0
      %p294 = por %p292, %p293
      %p295 = scmp.ne.s32.totalorder %s287, %s289
      %p296 = scmp.eq.s32.totalorder %s27, 1
      %p297 = por %p295, %p296
      %p298 = scmp.ne.s32.totalorder %s289, %s290
      %p299 = scmp.eq.s32.totalorder %s27, 0
      %p300 = por %p298, %p299
      %p301 = scmp.ne.s32.totalorder %s289, %s290
      %p302 = scmp.eq.s32.totalorder %s28, 1
      %p303 = por %p301, %p302
      %p305 = scmp.ne.s32.totalorder %s290, %s304
      %p306 = scmp.eq.s32.totalorder %s28, 0
      %p307 = por %p305, %p306
      %s308 = ssub.s32 %s22, %s29
      %p309 = scmp.eq.s32.totalorder %s308, 0
      %s311 = sadd.s32 %s310, 1
      %s312 = scalar_select %p309, %s310, %s311
      %p315 = pneg %p309
      %p316 = scmp.eq.s32.totalorder %s22, 1
      %p317 = por %p315, %p316
      %p318 = scmp.ne.s32.totalorder %s310, %s313
      %p319 = scmp.eq.s32.totalorder %s22, 0
      %p320 = por %p318, %p319
      %p321 = scmp.ne.s32.totalorder %s310, %s313
      %p322 = scmp.eq.s32.totalorder %s27, 1
      %p323 = por %p321, %p322
      %p324 = scmp.ne.s32.totalorder %s313, %s314
      %p325 = scmp.eq.s32.totalorder %s27, 0
      %p326 = por %p324, %p325
      %p327 = scmp.ne.s32.totalorder %s313, %s314
      %p328 = scmp.eq.s32.totalorder %s28, 1
      %p329 = por %p327, %p328
      %p331 = scmp.ne.s32.totalorder %s314, %s330
      %p332 = scmp.eq.s32.totalorder %s28, 0
      %p333 = por %p331, %p332
      %p334 = scmp.le.s32.totalorder 1, %s22
      %p335 = scmp.lt.s32.totalorder %s22, 3
      %p336 = pnand %p334, %p335
      %p337 = pneg %p336
      // Predicated region
      $region9: #{cae_encoder_forward.1} parent=5 // pred_check
        _
      $region10: #{cae_encoder_forward.1} parent=5 // pred_check_branch
        %339 = sbr.rel (%p336) target = $region12
      $region11: #{cae_encoder_forward.1} parent=5 // pred_region
        %s340 = ssub.s32 %s22, 1
        // Predicated region
        $region13: #{cae_encoder_forward.1} parent=11 // pred_check
          %p341 = pneg %p69
        $region14: #{cae_encoder_forward.1} parent=11 // pred_check_branch
          %343 = sbr.rel (%p341) target = $region16
        $region15: #{cae_encoder_forward.1} parent=11 // pred_region
          _
        $region16: #{cae_encoder_forward.1} parent=11 // pred_fallthru
          _
        // Predicated region
        $region17: #{cae_encoder_forward.1} parent=11 // pred_check
          %p344 = pneg %p90
        $region18: #{cae_encoder_forward.1} parent=11 // pred_check_branch
          %346 = sbr.rel (%p344) target = $region20
        $region19: #{cae_encoder_forward.1} parent=11 // pred_region
          _
        $region20: #{cae_encoder_forward.1} parent=11 // pred_fallthru
          _
        // Predicated region
        $region21: #{cae_encoder_forward.1} parent=11 // pred_check
          %p347 = pneg %p111
        $region22: #{cae_encoder_forward.1} parent=11 // pred_check_branch
          %349 = sbr.rel (%p347) target = $region24
        $region23: #{cae_encoder_forward.1} parent=11 // pred_region
          _
        $region24: #{cae_encoder_forward.1} parent=11 // pred_fallthru
          _
        // Predicated region
        $region25: #{cae_encoder_forward.1} parent=11 // pred_check
          %p350 = pneg %p132
        $region26: #{cae_encoder_forward.1} parent=11 // pred_check_branch
          %352 = sbr.rel (%p350) target = $region28
        $region27: #{cae_encoder_forward.1} parent=11 // pred_region
          _
        $region28: #{cae_encoder_forward.1} parent=11 // pred_fallthru
          _
        // Predicated region
        $region29: #{cae_encoder_forward.1} parent=11 // pred_check
          %p353 = pneg %p153
        $region30: #{cae_encoder_forward.1} parent=11 // pred_check_branch
          %355 = sbr.rel (%p353) target = $region32
        $region31: #{cae_encoder_forward.1} parent=11 // pred_region
          _
        $region32: #{cae_encoder_forward.1} parent=11 // pred_fallthru
          _
        // Predicated region
        $region33: #{cae_encoder_forward.1} parent=11 // pred_check
          %p356 = pneg %p174
        $region34: #{cae_encoder_forward.1} parent=11 // pred_check_branch
          %358 = sbr.rel (%p356) target = $region36
        $region35: #{cae_encoder_forward.1} parent=11 // pred_region
          _
        $region36: #{cae_encoder_forward.1} parent=11 // pred_fallthru
          _
        // Predicated region
        $region37: #{cae_encoder_forward.1} parent=11 // pred_check
          %p359 = pneg %p195
        $region38: #{cae_encoder_forward.1} parent=11 // pred_check_branch
          %361 = sbr.rel (%p359) target = $region40
        $region39: #{cae_encoder_forward.1} parent=11 // pred_region
          _
        $region40: #{cae_encoder_forward.1} parent=11 // pred_fallthru
          _
        // Predicated region
        $region41: #{cae_encoder_forward.1} parent=11 // pred_check
          %p362 = pneg %p216
        $region42: #{cae_encoder_forward.1} parent=11 // pred_check_branch
          %364 = sbr.rel (%p362) target = $region44
        $region43: #{cae_encoder_forward.1} parent=11 // pred_region
          _
        $region44: #{cae_encoder_forward.1} parent=11 // pred_fallthru
          _
        // Predicated region
        $region45: #{cae_encoder_forward.1} parent=11 // pred_check
          %p365 = pneg %p237
        $region46: #{cae_encoder_forward.1} parent=11 // pred_check_branch
          %367 = sbr.rel (%p365) target = $region48
        $region47: #{cae_encoder_forward.1} parent=11 // pred_region
          _
        $region48: #{cae_encoder_forward.1} parent=11 // pred_fallthru
          _
        // Predicated region
        $region49: #{cae_encoder_forward.1} parent=11 // pred_check
          %p368 = pneg %p258
        $region50: #{cae_encoder_forward.1} parent=11 // pred_check_branch
          %370 = sbr.rel (%p368) target = $region52
        $region51: #{cae_encoder_forward.1} parent=11 // pred_region
          _
        $region52: #{cae_encoder_forward.1} parent=11 // pred_fallthru
          _
        // Predicated region
        $region53: #{cae_encoder_forward.1} parent=11 // pred_check
          %p371 = pneg %p279
        $region54: #{cae_encoder_forward.1} parent=11 // pred_check_branch
          %373 = sbr.rel (%p371) target = $region56
        $region55: #{cae_encoder_forward.1} parent=11 // pred_region
          _
        $region56: #{cae_encoder_forward.1} parent=11 // pred_fallthru
          _
        // Predicated region
        $region57: #{cae_encoder_forward.1} parent=11 // pred_check
          %p374 = pneg %p300
        $region58: #{cae_encoder_forward.1} parent=11 // pred_check_branch
          %376 = sbr.rel (%p374) target = $region60
        $region59: #{cae_encoder_forward.1} parent=11 // pred_region
          _
        $region60: #{cae_encoder_forward.1} parent=11 // pred_fallthru
          _
      $region12: #{cae_encoder_forward.1} parent=5 // pred_fallthru
        _
      %p377 = scmp.lt.s32.totalorder %s22, 2
      // Predicated region
      $region61: #{cae_encoder_forward.1} parent=5 // pred_check
        %p378 = pneg %p377
      $region62: #{cae_encoder_forward.1} parent=5 // pred_check_branch
        %380 = sbr.rel (%p378) target = $region64
      $region63: #{cae_encoder_forward.1} parent=5 // pred_region
        // Predicated region
        $region65: #{cae_encoder_forward.1} parent=63 // pred_check
          %p381 = pneg %p42
        $region66: #{cae_encoder_forward.1} parent=63 // pred_check_branch
          %383 = sbr.rel (%p381) target = $region68
        $region67: #{cae_encoder_forward.1} parent=63 // pred_region
          %s384 = sand.u32 %s32, 1
          %s385 = sand.u32 %s32, 1
          %s386 = smul.addr %s385, 128
          %s387 = scalar_lea.vmem [#allocation6], %s386
          %s388 = smul.addr %s22, 8
          %s389 = scalar_lea.vmem %s0, %s388
          // Predicated region
          $region69: #{cae_encoder_forward.1} parent=67 // pred_check
            _
          $region70: #{cae_encoder_forward.1} parent=67 // pred_check_branch
            %391 = sbr.rel (0) target = $region72
          $region71: #{cae_encoder_forward.1} parent=67 // pred_region
            // Predicated region
            $region73: #{cae_encoder_forward.1} parent=71 // pred_check
              _
            $region74: #{cae_encoder_forward.1} parent=71 // pred_check_branch
              %393 = sbr.rel (0) target = $region76
            $region75: #{cae_encoder_forward.1} parent=71 // pred_region
              // Predicated region
              $region88: #{cae_encoder_forward.1} parent=75 // pred_check
                _
              $region89: #{cae_encoder_forward.1} parent=75 // pred_check_branch
                %439 = sbr.rel (0) target = $region91
              $region90: #{cae_encoder_forward.1} parent=75 // pred_region
                loop: start=0, step=1, limit=1
                $region92: #{cae_encoder_forward.1} parent=90 // loop_pre_header
                  _
                $region93: #{cae_encoder_forward.1} parent=90 // loop_header
                  %s441 = sphi 0, %s445
                  %p442 = scmp.ge.s32.totalorder %s441, 1
                  %s446 = sphi %s389, %s389
                  %s447 = sphi %s387, %s387
                $region94: #{cae_encoder_forward.1} parent=90 // loop_header_branch
                  %444 = sbr.rel (%p442) target = $region98
                $region95: #{cae_encoder_forward.1} parent=90 // loop_body
                  %v448 = vld [vmem:[%s446] sm:$0xff]
                  %449 = vst [vmem:[%s447] sm:$0xff] %v448
                  %v450 = vld [vmem:[%s446 + $0x10] sm:$0xff]
                  %451 = vst [vmem:[%s447 + $0x8] sm:$0xff] %v450
                  %v452 = vld [vmem:[%s446 + $0x20] sm:$0xff]
                  %453 = vst [vmem:[%s447 + $0x10] sm:$0xff] %v452
                  %v454 = vld [vmem:[%s446 + $0x30] sm:$0xff]
                  %455 = vst [vmem:[%s447 + $0x18] sm:$0xff] %v454
                  %v456 = vld [vmem:[%s446 + $0x40] sm:$0xff]
                  %457 = vst [vmem:[%s447 + $0x20] sm:$0xff] %v456
                  %v458 = vld [vmem:[%s446 + $0x50] sm:$0xff]
                  %459 = vst [vmem:[%s447 + $0x28] sm:$0xff] %v458
                  %v460 = vld [vmem:[%s446 + $0x60] sm:$0xff]
                  %461 = vst [vmem:[%s447 + $0x30] sm:$0xff] %v460
                  %v462 = vld [vmem:[%s446 + $0x70] sm:$0xff]
                  %463 = vst [vmem:[%s447 + $0x38] sm:$0xff] %v462
                  %v464 = vld [vmem:[%s446 + $0x80] sm:$0xff]
                  %465 = vst [vmem:[%s447 + $0x40] sm:$0xff] %v464
                  %v466 = vld [vmem:[%s446 + $0x90] sm:$0xff]
                  %467 = vst [vmem:[%s447 + $0x48] sm:$0xff] %v466
                  %v468 = vld [vmem:[%s446 + $0xa0] sm:$0xff]
                  %469 = vst [vmem:[%s447 + $0x50] sm:$0xff] %v468
                  %v470 = vld [vmem:[%s446 + $0xb0] sm:$0xff]
                  %471 = vst [vmem:[%s447 + $0x58] sm:$0xff] %v470
                  %v472 = vld [vmem:[%s446 + $0xc0] sm:$0xff]
                  %473 = vst [vmem:[%s447 + $0x60] sm:$0xff] %v472
                  %v474 = vld [vmem:[%s446 + $0xd0] sm:$0xff]
                  %475 = vst [vmem:[%s447 + $0x68] sm:$0xff] %v474
                  %v476 = vld [vmem:[%s446 + $0xe0] sm:$0xff]
                  %477 = vst [vmem:[%s447 + $0x70] sm:$0xff] %v476
                  %v478 = vld [vmem:[%s446 + $0xf0] sm:$0xff]
                  %479 = vst [vmem:[%s447 + $0x78] sm:$0xff] %v478
                $region96: #{cae_encoder_forward.1} parent=90 // loop_footer
                  %s445 = sadd.s32 1, %s441
                $region97: #{cae_encoder_forward.1} parent=90 // loop_footer_branch
                  %440 = sbr.rel target = $region93
                $region98: #{cae_encoder_forward.1} parent=90 // loop_exit
                  _
              $region91: #{cae_encoder_forward.1} parent=75 // pred_fallthru
                _
              // Predicated region
              $region99: #{cae_encoder_forward.1} parent=75 // pred_check
                _
              $region100: #{cae_encoder_forward.1} parent=75 // pred_check_branch
                %481 = sbr.rel target = $region102
              $region101: #{cae_encoder_forward.1} parent=75 // pred_region
                _
              $region102: #{cae_encoder_forward.1} parent=75 // pred_fallthru
                _
            $region76: #{cae_encoder_forward.1} parent=71 // pred_fallthru
              _
            // Predicated region
            $region77: #{cae_encoder_forward.1} parent=71 // pred_check
              _
            $region78: #{cae_encoder_forward.1} parent=71 // pred_check_branch
              %395 = sbr.rel target = $region80
            $region79: #{cae_encoder_forward.1} parent=71 // pred_region
              %s397 = ssub.s32 256, 1
              loop: start=0, step=1, limit=1
              $region81: #{cae_encoder_forward.1} parent=79 // loop_pre_header
                _
              $region82: #{cae_encoder_forward.1} parent=79 // loop_header
                %s399 = sphi 0, %s403
                %p400 = scmp.ge.s32.totalorder %s399, 1
                %s404 = sphi %s389, %s389
                %s405 = sphi %s387, %s387
              $region83: #{cae_encoder_forward.1} parent=79 // loop_header_branch
                %402 = sbr.rel (%p400) target = $region87
              $region84: #{cae_encoder_forward.1} parent=79 // loop_body
                %v406 = vld [vmem:[%s404] sm:%s397]
                %407 = vst [vmem:[%s405] sm:%s397] %v406
                %v408 = vld [vmem:[%s404 + $0x10] sm:%s397]
                %409 = vst [vmem:[%s405 + $0x8] sm:%s397] %v408
                %v410 = vld [vmem:[%s404 + $0x20] sm:%s397]
                %411 = vst [vmem:[%s405 + $0x10] sm:%s397] %v410
                %v412 = vld [vmem:[%s404 + $0x30] sm:%s397]
                %413 = vst [vmem:[%s405 + $0x18] sm:%s397] %v412
                %v414 = vld [vmem:[%s404 + $0x40] sm:%s397]
                %415 = vst [vmem:[%s405 + $0x20] sm:%s397] %v414
                %v416 = vld [vmem:[%s404 + $0x50] sm:%s397]
                %417 = vst [vmem:[%s405 + $0x28] sm:%s397] %v416
                %v418 = vld [vmem:[%s404 + $0x60] sm:%s397]
                %419 = vst [vmem:[%s405 + $0x30] sm:%s397] %v418
                %v420 = vld [vmem:[%s404 + $0x70] sm:%s397]
                %421 = vst [vmem:[%s405 + $0x38] sm:%s397] %v420
                %v422 = vld [vmem:[%s404 + $0x80] sm:%s397]
                %423 = vst [vmem:[%s405 + $0x40] sm:%s397] %v422
                %v424 = vld [vmem:[%s404 + $0x90] sm:%s397]
                %425 = vst [vmem:[%s405 + $0x48] sm:%s397] %v424
                %v426 = vld [vmem:[%s404 + $0xa0] sm:%s397]
                %427 = vst [vmem:[%s405 + $0x50] sm:%s397] %v426
                %v428 = vld [vmem:[%s404 + $0xb0] sm:%s397]
                %429 = vst [vmem:[%s405 + $0x58] sm:%s397] %v428
                %v430 = vld [vmem:[%s404 + $0xc0] sm:%s397]
                %431 = vst [vmem:[%s405 + $0x60] sm:%s397] %v430
                %v432 = vld [vmem:[%s404 + $0xd0] sm:%s397]
                %433 = vst [vmem:[%s405 + $0x68] sm:%s397] %v432
                %v434 = vld [vmem:[%s404 + $0xe0] sm:%s397]
                %435 = vst [vmem:[%s405 + $0x70] sm:%s397] %v434
                %v436 = vld [vmem:[%s404 + $0xf0] sm:%s397]
                %437 = vst [vmem:[%s405 + $0x78] sm:%s397] %v436
              $region85: #{cae_encoder_forward.1} parent=79 // loop_footer
                %s403 = sadd.s32 1, %s399
              $region86: #{cae_encoder_forward.1} parent=79 // loop_footer_branch
                %398 = sbr.rel target = $region82
              $region87: #{cae_encoder_forward.1} parent=79 // loop_exit
                _
            $region80: #{cae_encoder_forward.1} parent=71 // pred_fallthru
              _
          $region72: #{cae_encoder_forward.1} parent=67 // pred_fallthru
            _
          %482 = vnop
        $region68: #{cae_encoder_forward.1} parent=63 // pred_fallthru
          _
      $region64: #{cae_encoder_forward.1} parent=5 // pred_fallthru
        _
      %p483 = scmp.le.s32.totalorder 1, %s22
      %p484 = scmp.lt.s32.totalorder %s22, 3
      %p485 = pnand %p483, %p484
      %p486 = pneg %p485
      // Predicated region
      $region103: #{cae_encoder_forward.1} parent=5 // pred_check
        _
      $region104: #{cae_encoder_forward.1} parent=5 // pred_check_branch
        %488 = sbr.rel (%p485) target = $region106
      $region105: #{cae_encoder_forward.1} parent=5 // pred_region
        %s489 = ssub.s32 %s22, 1
        %s490 = sand.u32 %s35, 1
        %s491 = sand.u32 %s35, 1
        %s492 = smul.addr %s491, 128
        %s493 = scalar_lea.vmem [#allocation6], %s492
        // Predicated region
        $region107: #{cae_encoder_forward.1} parent=105 // pred_check
          %p494 = pneg %p48
        $region108: #{cae_encoder_forward.1} parent=105 // pred_check_branch
          %496 = sbr.rel (%p494) target = $region110
        $region109: #{cae_encoder_forward.1} parent=105 // pred_region
          _
        $region110: #{cae_encoder_forward.1} parent=105 // pred_fallthru
          _
        %s497 = sand.u32 %s35, 1
        %s498 = sand.u32 %s35, 1
        %s499 = smul.addr %s498, 128
        %s500 = scalar_lea.vmem [#allocation6], %s499
        %p501 = pneg %p48
        %p502 = pneg %p45
        %p503 = pneg %p69
        %p504 = pneg %p66
        %p505 = pneg %p90
        %p506 = pneg %p87
        %p507 = pneg %p111
        %p508 = pneg %p108
        %p509 = pneg %p132
        %p510 = pneg %p129
        %p511 = pneg %p153
        %p512 = pneg %p150
        %p513 = pneg %p174
        %p514 = pneg %p171
        %p515 = pneg %p195
        %p516 = pneg %p192
        %p517 = pneg %p216
        %p518 = pneg %p213
        %p519 = pneg %p237
        %p520 = pneg %p234
        %p521 = pneg %p258
        %p522 = pneg %p255
        %p523 = pneg %p279
        %p524 = pneg %p276
        %p525 = pneg %p300
        %p526 = pneg %p297
        %p527 = pneg %p326
        %p528 = pneg %p323
        %s529 = sand.u32 %s313, 1
        %s530 = scalar_lea.sflag [#allocation8], %s529
        %s531 = sand.u32 %s313, 1
        %s532 = smul.addr %s531, 8
        %s533 = scalar_lea.vmem [#allocation7], %s532
        %v535 = vld [vmem:[%s493] sm:$0xff]
        %v536 = vld [vmem:[%s493 + $0x8] sm:$0xff]
        %v537 = vld [vmem:[%s493 + $0x10] sm:$0xff]
        %v538 = vld [vmem:[%s493 + $0x18] sm:$0xff]
        %v539 = vld [vmem:[%s493 + $0x20] sm:$0xff]
        %v540 = vld [vmem:[%s493 + $0x28] sm:$0xff]
        %v541 = vld [vmem:[%s493 + $0x30] sm:$0xff]
        %v542 = vld [vmem:[%s493 + $0x38] sm:$0xff]
        %v543 = vld [vmem:[%s493 + $0x40] sm:$0xff]
        %v544 = vld [vmem:[%s493 + $0x48] sm:$0xff]
        %v545 = vld [vmem:[%s493 + $0x50] sm:$0xff]
        %v546 = vld [vmem:[%s493 + $0x58] sm:$0xff]
        %v547 = vld [vmem:[%s493 + $0x60] sm:$0xff]
        %v548 = vld [vmem:[%s493 + $0x68] sm:$0xff]
        %v549 = vld [vmem:[%s493 + $0x70] sm:$0xff]
        %v550 = vld [vmem:[%s493 + $0x78] sm:$0xff]
        %vm551 = vcmask 523264
        %552 = vst.msk [vmem:[#allocation2] sm:$0xff] %vm551, 0.0
        %s553 = scalar_lea.vmem [#allocation2], 136
        %554 = vst.msk [vmem:[%s553] sm:$0xff] %vm551, 0.0
        %s555 = scalar_lea.vmem [#allocation2], 8
        %556 = vst.msk [vmem:[%s555] sm:$0xff] %vm551, %v535
        %557 = vst.msk [vmem:[%s555 + $0x8] sm:$0xff] %vm551, %v536
        %558 = vst.msk [vmem:[%s555 + $0x10] sm:$0xff] %vm551, %v537
        %559 = vst.msk [vmem:[%s555 + $0x18] sm:$0xff] %vm551, %v538
        %560 = vst.msk [vmem:[%s555 + $0x20] sm:$0xff] %vm551, %v539
        %561 = vst.msk [vmem:[%s555 + $0x28] sm:$0xff] %vm551, %v540
        %562 = vst.msk [vmem:[%s555 + $0x30] sm:$0xff] %vm551, %v541
        %563 = vst.msk [vmem:[%s555 + $0x38] sm:$0xff] %vm551, %v542
        %564 = vst.msk [vmem:[%s555 + $0x40] sm:$0xff] %vm551, %v543
        %565 = vst.msk [vmem:[%s555 + $0x48] sm:$0xff] %vm551, %v544
        %566 = vst.msk [vmem:[%s555 + $0x50] sm:$0xff] %vm551, %v545
        %567 = vst.msk [vmem:[%s555 + $0x58] sm:$0xff] %vm551, %v546
        %568 = vst.msk [vmem:[%s555 + $0x60] sm:$0xff] %vm551, %v547
        %569 = vst.msk [vmem:[%s555 + $0x68] sm:$0xff] %vm551, %v548
        %570 = vst.msk [vmem:[%s555 + $0x70] sm:$0xff] %vm551, %v549
        %571 = vst.msk [vmem:[%s555 + $0x78] sm:$0xff] %vm551, %v550
        %v572 = vld [vmem:[#allocation2] sm:$0xff]
        %v573 = vld [vmem:[#allocation2 + $0x8] sm:$0xff]
        %v574 = vld [vmem:[#allocation2 + $0x10] sm:$0xff]
        %v575 = vld [vmem:[#allocation2 + $0x18] sm:$0xff]
        %v576 = vld [vmem:[#allocation2 + $0x20] sm:$0xff]
        %v577 = vld [vmem:[#allocation2 + $0x28] sm:$0xff]
        %v578 = vld [vmem:[#allocation2 + $0x30] sm:$0xff]
        %v579 = vld [vmem:[#allocation2 + $0x38] sm:$0xff]
        %v580 = vld [vmem:[#allocation2 + $0x40] sm:$0xff]
        %v581 = vld [vmem:[#allocation2 + $0x48] sm:$0xff]
        %v582 = vld [vmem:[#allocation2 + $0x50] sm:$0xff]
        %v583 = vld [vmem:[#allocation2 + $0x58] sm:$0xff]
        %v584 = vld [vmem:[#allocation2 + $0x60] sm:$0xff]
        %v585 = vld [vmem:[#allocation2 + $0x68] sm:$0xff]
        %v586 = vld [vmem:[#allocation2 + $0x70] sm:$0xff]
        %v587 = vld [vmem:[#allocation2 + $0x78] sm:$0xff]
        %v588 = vpack.c.bf16 %v573, %v572
        %v589 = vpack.c.bf16 %v575, %v574
        %v590 = vpack.c.bf16 %v577, %v576
        %v591 = vpack.c.bf16 %v579, %v578
        %v592 = vpack.c.bf16 %v581, %v580
        %v593 = vpack.c.bf16 %v583, %v582
        %v594 = vpack.c.bf16 %v585, %v584
        %v595 = vpack.c.bf16 %v587, %v586
        %v596 = vld [vmem:[%s1] sm:$0xf]
        %v597 = vld [vmem:[%s1 + $0x4] sm:$0xf]
        %v598 = vld [vmem:[%s1 + $0x8] sm:$0xf]
        %v599 = vld [vmem:[%s1 + $0xc] sm:$0xf]
        %v600 = vld [vmem:[%s1 + $0x10] sm:$0xf]
        %v601 = vld [vmem:[%s1 + $0x14] sm:$0xf]
        %v602 = vld [vmem:[%s1 + $0x18] sm:$0xf]
        %v603 = vld [vmem:[%s1 + $0x1c] sm:$0xf]
        %v604 = vld [vmem:[%s555] sm:$0xff]
        %v605 = vld [vmem:[%s555 + $0x8] sm:$0xff]
        %v606 = vld [vmem:[%s555 + $0x10] sm:$0xff]
        %v607 = vld [vmem:[%s555 + $0x18] sm:$0xff]
        %v608 = vld [vmem:[%s555 + $0x20] sm:$0xff]
        %v609 = vld [vmem:[%s555 + $0x28] sm:$0xff]
        %v610 = vld [vmem:[%s555 + $0x30] sm:$0xff]
        %v611 = vld [vmem:[%s555 + $0x38] sm:$0xff]
        %v612 = vld [vmem:[%s555 + $0x40] sm:$0xff]
        %v613 = vld [vmem:[%s555 + $0x48] sm:$0xff]
        %v614 = vld [vmem:[%s555 + $0x50] sm:$0xff]
        %v615 = vld [vmem:[%s555 + $0x58] sm:$0xff]
        %v616 = vld [vmem:[%s555 + $0x60] sm:$0xff]
        %v617 = vld [vmem:[%s555 + $0x68] sm:$0xff]
        %v618 = vld [vmem:[%s555 + $0x70] sm:$0xff]
        %v619 = vld [vmem:[%s555 + $0x78] sm:$0xff]
        %v620 = vpack.c.bf16 %v605, %v604
        %v621 = vpack.c.bf16 %v607, %v606
        %v622 = vpack.c.bf16 %v609, %v608
        %v623 = vpack.c.bf16 %v611, %v610
        %v624 = vpack.c.bf16 %v613, %v612
        %v625 = vpack.c.bf16 %v615, %v614
        %v626 = vpack.c.bf16 %v617, %v616
        %v627 = vpack.c.bf16 %v619, %v618
        %s628 = scalar_lea.vmem %s1, 32
        %v629 = vld [vmem:[%s628] sm:$0xf]
        %v630 = vld [vmem:[%s628 + $0x4] sm:$0xf]
        %v631 = vld [vmem:[%s628 + $0x8] sm:$0xf]
        %v632 = vld [vmem:[%s628 + $0xc] sm:$0xf]
        %v633 = vld [vmem:[%s628 + $0x10] sm:$0xf]
        %v634 = vld [vmem:[%s628 + $0x14] sm:$0xf]
        %v635 = vld [vmem:[%s628 + $0x18] sm:$0xf]
        %v636 = vld [vmem:[%s628 + $0x1c] sm:$0xf]
        %v645 = vunpack.c.l.b16 %v629
        %v646 = vunpack.c.l.b16 %v630
        %v647 = vunpack.c.l.b16 %v631
        %v648 = vunpack.c.l.b16 %v632
        %v649 = vunpack.c.l.b16 %v633
        %v650 = vunpack.c.l.b16 %v634
        %v651 = vunpack.c.l.b16 %v635
        %v652 = vunpack.c.l.b16 %v636
        %v653 = vpack.c.b16 %v646, %v645
        %v654 = vpack.c.b16 %v648, %v647
        %v655 = vpack.c.b16 %v650, %v649
        %v656 = vpack.c.b16 %v652, %v651
        %v662 = vsel %vm551, %v620, 0
        %v665 = vsel %vm551, %v621, 0
        %v668 = vsel %vm551, %v622, 0
        %v671 = vsel %vm551, %v623, 0
        %v674 = vsel %vm551, %v624, 0
        %v677 = vsel %vm551, %v625, 0
        %v680 = vsel %vm551, %v626, 0
        %v683 = vsel %vm551, %v627, 0
        %685 = vmatpush.bf16.msra.mxu0 0
        %686 = vmatpush.bf16.msra.mxu0 0
        %687 = vmatpush.bf16.msra.mxu0 0
        %688 = vmatpush.bf16.msra.mxu0 0
        %689 = vmatpush.bf16.msra.mxu0 %v656
        %690 = vmatpush.bf16.msra.mxu0 %v655
        %691 = vmatpush.bf16.msra.mxu0 %v654
        %692 = vmatpush.bf16.msra.mxu0 %v653
        %693 = vmatmul.bf16.gmra.mxu0 %v662
        %v694 = vpop.f32.mrf.mxu0
        %v695 = vadd.f32 0.0, %v694
        %v696 = vpop.f32.mrf.mxu0
        %v697 = vadd.f32 0.0, %v696
        %698 = vmatmul.bf16.gmra.mxu0 %v665
        %v699 = vpop.f32.mrf.mxu0
        %v700 = vadd.f32 0.0, %v699
        %v701 = vpop.f32.mrf.mxu0
        %v702 = vadd.f32 0.0, %v701
        %703 = vmatmul.bf16.gmra.mxu0 %v668
        %v704 = vpop.f32.mrf.mxu0
        %v705 = vadd.f32 0.0, %v704
        %v706 = vpop.f32.mrf.mxu0
        %v707 = vadd.f32 0.0, %v706
        %708 = vmatmul.bf16.gmra.mxu0 %v671
        %v709 = vpop.f32.mrf.mxu0
        %v710 = vadd.f32 0.0, %v709
        %v711 = vpop.f32.mrf.mxu0
        %v712 = vadd.f32 0.0, %v711
        %713 = vmatmul.bf16.gmra.mxu0 %v674
        %v714 = vpop.f32.mrf.mxu0
        %v715 = vadd.f32 0.0, %v714
        %v716 = vpop.f32.mrf.mxu0
        %v717 = vadd.f32 0.0, %v716
        %718 = vmatmul.bf16.gmra.mxu0 %v677
        %v719 = vpop.f32.mrf.mxu0
        %v720 = vadd.f32 0.0, %v719
        %v721 = vpop.f32.mrf.mxu0
        %v722 = vadd.f32 0.0, %v721
        %723 = vmatmul.bf16.gmra.mxu0 %v680
        %v724 = vpop.f32.mrf.mxu0
        %v725 = vadd.f32 0.0, %v724
        %v726 = vpop.f32.mrf.mxu0
        %v727 = vadd.f32 0.0, %v726
        %728 = vmatmul.bf16.gmra.mxu0 %v683
        %v729 = vpop.f32.mrf.mxu0
        %v730 = vadd.f32 0.0, %v729
        %v731 = vpop.f32.mrf.mxu0
        %v732 = vadd.f32 0.0, %v731
        %733 = vdwg.mxu0
        %v742 = vunpack.c.l.b16 %v596
        %v743 = vunpack.c.l.b16 %v597
        %v744 = vunpack.c.l.b16 %v598
        %v745 = vunpack.c.l.b16 %v599
        %v746 = vunpack.c.l.b16 %v600
        %v747 = vunpack.c.l.b16 %v601
        %v748 = vunpack.c.l.b16 %v602
        %v749 = vunpack.c.l.b16 %v603
        %v750 = vpack.c.b16 %v743, %v742
        %v751 = vpack.c.b16 %v745, %v744
        %v752 = vpack.c.b16 %v747, %v746
        %v753 = vpack.c.b16 %v749, %v748
        %v759 = vsel %vm551, %v588, 0
        %v762 = vsel %vm551, %v589, 0
        %v765 = vsel %vm551, %v590, 0
        %v768 = vsel %vm551, %v591, 0
        %v771 = vsel %vm551, %v592, 0
        %v774 = vsel %vm551, %v593, 0
        %v777 = vsel %vm551, %v594, 0
        %v780 = vsel %vm551, %v595, 0
        %782 = vmatpush.bf16.msra.mxu0 0
        %783 = vmatpush.bf16.msra.mxu0 0
        %784 = vmatpush.bf16.msra.mxu0 0
        %785 = vmatpush.bf16.msra.mxu0 0
        %786 = vmatpush.bf16.msra.mxu0 %v753
        %787 = vmatpush.bf16.msra.mxu0 %v752
        %788 = vmatpush.bf16.msra.mxu0 %v751
        %789 = vmatpush.bf16.msra.mxu0 %v750
        %790 = vmatmul.bf16.gmra.mxu0 %v759
        %v791 = vpop.f32.mrf.mxu0
        %v792 = vadd.f32 %v695, %v791
        %v793 = vpop.f32.mrf.mxu0
        %v794 = vadd.f32 %v697, %v793
        %795 = vmatmul.bf16.gmra.mxu0 %v762
        %v796 = vpop.f32.mrf.mxu0
        %v797 = vadd.f32 %v700, %v796
        %v798 = vpop.f32.mrf.mxu0
        %v799 = vadd.f32 %v702, %v798
        %800 = vmatmul.bf16.gmra.mxu0 %v765
        %v801 = vpop.f32.mrf.mxu0
        %v802 = vadd.f32 %v705, %v801
        %v803 = vpop.f32.mrf.mxu0
        %v804 = vadd.f32 %v707, %v803
        %805 = vmatmul.bf16.gmra.mxu0 %v768
        %v806 = vpop.f32.mrf.mxu0
        %v807 = vadd.f32 %v710, %v806
        %v808 = vpop.f32.mrf.mxu0
        %v809 = vadd.f32 %v712, %v808
        %810 = vmatmul.bf16.gmra.mxu0 %v771
        %v811 = vpop.f32.mrf.mxu0
        %v812 = vadd.f32 %v715, %v811
        %v813 = vpop.f32.mrf.mxu0
        %v814 = vadd.f32 %v717, %v813
        %815 = vmatmul.bf16.gmra.mxu0 %v774
        %v816 = vpop.f32.mrf.mxu0
        %v817 = vadd.f32 %v720, %v816
        %v818 = vpop.f32.mrf.mxu0
        %v819 = vadd.f32 %v722, %v818
        %820 = vmatmul.bf16.gmra.mxu0 %v777
        %v821 = vpop.f32.mrf.mxu0
        %v822 = vadd.f32 %v725, %v821
        %v823 = vpop.f32.mrf.mxu0
        %v824 = vadd.f32 %v727, %v823
        %825 = vmatmul.bf16.gmra.mxu0 %v780
        %v826 = vpop.f32.mrf.mxu0
        %v827 = vadd.f32 %v730, %v826
        %v828 = vpop.f32.mrf.mxu0
        %v829 = vadd.f32 %v732, %v828
        %830 = vdwg.mxu0
        %s831 = scalar_lea.vmem [#allocation2], 16
        %v832 = vld [vmem:[%s831] sm:$0xff]
        %v833 = vld [vmem:[%s831 + $0x8] sm:$0xff]
        %v834 = vld [vmem:[%s831 + $0x10] sm:$0xff]
        %v835 = vld [vmem:[%s831 + $0x18] sm:$0xff]
        %v836 = vld [vmem:[%s831 + $0x20] sm:$0xff]
        %v837 = vld [vmem:[%s831 + $0x28] sm:$0xff]
        %v838 = vld [vmem:[%s831 + $0x30] sm:$0xff]
        %v839 = vld [vmem:[%s831 + $0x38] sm:$0xff]
        %v840 = vld [vmem:[%s831 + $0x40] sm:$0xff]
        %v841 = vld [vmem:[%s831 + $0x48] sm:$0xff]
        %v842 = vld [vmem:[%s831 + $0x50] sm:$0xff]
        %v843 = vld [vmem:[%s831 + $0x58] sm:$0xff]
        %v844 = vld [vmem:[%s831 + $0x60] sm:$0xff]
        %v845 = vld [vmem:[%s831 + $0x68] sm:$0xff]
        %v846 = vld [vmem:[%s831 + $0x70] sm:$0xff]
        %v847 = vld [vmem:[%s831 + $0x78] sm:$0xff]
        %v848 = vpack.c.bf16 %v833, %v832
        %v849 = vpack.c.bf16 %v835, %v834
        %v850 = vpack.c.bf16 %v837, %v836
        %v851 = vpack.c.bf16 %v839, %v838
        %v852 = vpack.c.bf16 %v841, %v840
        %v853 = vpack.c.bf16 %v843, %v842
        %v854 = vpack.c.bf16 %v845, %v844
        %v855 = vpack.c.bf16 %v847, %v846
        %s856 = scalar_lea.vmem %s1, 64
        %v857 = vld [vmem:[%s856] sm:$0xf]
        %v858 = vld [vmem:[%s856 + $0x4] sm:$0xf]
        %v859 = vld [vmem:[%s856 + $0x8] sm:$0xf]
        %v860 = vld [vmem:[%s856 + $0xc] sm:$0xf]
        %v861 = vld [vmem:[%s856 + $0x10] sm:$0xf]
        %v862 = vld [vmem:[%s856 + $0x14] sm:$0xf]
        %v863 = vld [vmem:[%s856 + $0x18] sm:$0xf]
        %v864 = vld [vmem:[%s856 + $0x1c] sm:$0xf]
        %v873 = vunpack.c.l.b16 %v857
        %v874 = vunpack.c.l.b16 %v858
        %v875 = vunpack.c.l.b16 %v859
        %v876 = vunpack.c.l.b16 %v860
        %v877 = vunpack.c.l.b16 %v861
        %v878 = vunpack.c.l.b16 %v862
        %v879 = vunpack.c.l.b16 %v863
        %v880 = vunpack.c.l.b16 %v864
        %v881 = vpack.c.b16 %v874, %v873
        %v882 = vpack.c.b16 %v876, %v875
        %v883 = vpack.c.b16 %v878, %v877
        %v884 = vpack.c.b16 %v880, %v879
        %v890 = vsel %vm551, %v848, 0
        %v893 = vsel %vm551, %v849, 0
        %v896 = vsel %vm551, %v850, 0
        %v899 = vsel %vm551, %v851, 0
        %v902 = vsel %vm551, %v852, 0
        %v905 = vsel %vm551, %v853, 0
        %v908 = vsel %vm551, %v854, 0
        %v911 = vsel %vm551, %v855, 0
        %913 = vmatpush.bf16.msra.mxu0 0
        %914 = vmatpush.bf16.msra.mxu0 0
        %915 = vmatpush.bf16.msra.mxu0 0
        %916 = vmatpush.bf16.msra.mxu0 0
        %917 = vmatpush.bf16.msra.mxu0 %v884
        %918 = vmatpush.bf16.msra.mxu0 %v883
        %919 = vmatpush.bf16.msra.mxu0 %v882
        %920 = vmatpush.bf16.msra.mxu0 %v881
        %921 = vmatmul.bf16.gmra.mxu0 %v890
        %v922 = vpop.f32.mrf.mxu0
        %v923 = vadd.f32 0.0, %v922
        %v924 = vpop.f32.mrf.mxu0
        %v925 = vadd.f32 0.0, %v924
        %926 = vmatmul.bf16.gmra.mxu0 %v893
        %v927 = vpop.f32.mrf.mxu0
        %v928 = vadd.f32 0.0, %v927
        %v929 = vpop.f32.mrf.mxu0
        %v930 = vadd.f32 0.0, %v929
        %931 = vmatmul.bf16.gmra.mxu0 %v896
        %v932 = vpop.f32.mrf.mxu0
        %v933 = vadd.f32 0.0, %v932
        %v934 = vpop.f32.mrf.mxu0
        %v935 = vadd.f32 0.0, %v934
        %936 = vmatmul.bf16.gmra.mxu0 %v899
        %v937 = vpop.f32.mrf.mxu0
        %v938 = vadd.f32 0.0, %v937
        %v939 = vpop.f32.mrf.mxu0
        %v940 = vadd.f32 0.0, %v939
        %941 = vmatmul.bf16.gmra.mxu0 %v902
        %v942 = vpop.f32.mrf.mxu0
        %v943 = vadd.f32 0.0, %v942
        %v944 = vpop.f32.mrf.mxu0
        %v945 = vadd.f32 0.0, %v944
        %946 = vmatmul.bf16.gmra.mxu0 %v905
        %v947 = vpop.f32.mrf.mxu0
        %v948 = vadd.f32 0.0, %v947
        %v949 = vpop.f32.mrf.mxu0
        %v950 = vadd.f32 0.0, %v949
        %951 = vmatmul.bf16.gmra.mxu0 %v908
        %v952 = vpop.f32.mrf.mxu0
        %v953 = vadd.f32 0.0, %v952
        %v954 = vpop.f32.mrf.mxu0
        %v955 = vadd.f32 0.0, %v954
        %956 = vmatmul.bf16.gmra.mxu0 %v911
        %v957 = vpop.f32.mrf.mxu0
        %v958 = vadd.f32 0.0, %v957
        %v959 = vpop.f32.mrf.mxu0
        %v960 = vadd.f32 0.0, %v959
        %961 = vdwg.mxu0
        %v962 = vadd.f32 %v792, %v923
        %v963 = vadd.f32 %v794, %v925
        %v964 = vadd.f32 %v797, %v928
        %v965 = vadd.f32 %v799, %v930
        %v966 = vadd.f32 %v802, %v933
        %v967 = vadd.f32 %v804, %v935
        %v968 = vadd.f32 %v807, %v938
        %v969 = vadd.f32 %v809, %v940
        %v970 = vadd.f32 %v812, %v943
        %v971 = vadd.f32 %v814, %v945
        %v972 = vadd.f32 %v817, %v948
        %v973 = vadd.f32 %v819, %v950
        %v974 = vadd.f32 %v822, %v953
        %v975 = vadd.f32 %v824, %v955
        %v976 = vadd.f32 %v827, %v958
        %v977 = vadd.f32 %v829, %v960
        %v978 = vld [vmem:[%s2] sm:$0x1]
        %v980 = vperm.slane %v978, 0
        %v982 = vadd.f32 %v962, %v980
        %v983 = vadd.f32 %v963, %v980
        %v984 = vadd.f32 %v964, %v980
        %v985 = vadd.f32 %v965, %v980
        %v986 = vadd.f32 %v966, %v980
        %v987 = vadd.f32 %v967, %v980
        %v988 = vadd.f32 %v968, %v980
        %v989 = vadd.f32 %v969, %v980
        %v990 = vadd.f32 %v970, %v980
        %v991 = vadd.f32 %v971, %v980
        %v992 = vadd.f32 %v972, %v980
        %v993 = vadd.f32 %v973, %v980
        %v994 = vadd.f32 %v974, %v980
        %v995 = vadd.f32 %v975, %v980
        %v996 = vadd.f32 %v976, %v980
        %v997 = vadd.f32 %v977, %v980
        %v998 = vmax.f32 %v982, 0.0
        %v999 = vmax.f32 %v983, 0.0
        %v1000 = vmax.f32 %v984, 0.0
        %v1001 = vmax.f32 %v985, 0.0
        %v1002 = vmax.f32 %v986, 0.0
        %v1003 = vmax.f32 %v987, 0.0
        %v1004 = vmax.f32 %v988, 0.0
        %v1005 = vmax.f32 %v989, 0.0
        %v1006 = vmax.f32 %v990, 0.0
        %v1007 = vmax.f32 %v991, 0.0
        %v1008 = vmax.f32 %v992, 0.0
        %v1009 = vmax.f32 %v993, 0.0
        %v1010 = vmax.f32 %v994, 0.0
        %v1011 = vmax.f32 %v995, 0.0
        %v1012 = vmax.f32 %v996, 0.0
        %v1013 = vmax.f32 %v997, 0.0
        %1014 = vst [vmem:[#allocation3] sm:$0xff] 0.0
        %s1015 = scalar_lea.vmem [#allocation3], 136
        %1016 = vst [vmem:[%s1015] sm:$0xff] 0.0
        %s1017 = scalar_lea.vmem [#allocation3], 8
        %1018 = vst [vmem:[%s1017] sm:$0xff] %v998
        %1019 = vst [vmem:[%s1017 + $0x8] sm:$0xff] %v999
        %1020 = vst [vmem:[%s1017 + $0x10] sm:$0xff] %v1000
        %1021 = vst [vmem:[%s1017 + $0x18] sm:$0xff] %v1001
        %1022 = vst [vmem:[%s1017 + $0x20] sm:$0xff] %v1002
        %1023 = vst [vmem:[%s1017 + $0x28] sm:$0xff] %v1003
        %1024 = vst [vmem:[%s1017 + $0x30] sm:$0xff] %v1004
        %1025 = vst [vmem:[%s1017 + $0x38] sm:$0xff] %v1005
        %1026 = vst [vmem:[%s1017 + $0x40] sm:$0xff] %v1006
        %1027 = vst [vmem:[%s1017 + $0x48] sm:$0xff] %v1007
        %1028 = vst [vmem:[%s1017 + $0x50] sm:$0xff] %v1008
        %1029 = vst [vmem:[%s1017 + $0x58] sm:$0xff] %v1009
        %1030 = vst [vmem:[%s1017 + $0x60] sm:$0xff] %v1010
        %1031 = vst [vmem:[%s1017 + $0x68] sm:$0xff] %v1011
        %1032 = vst [vmem:[%s1017 + $0x70] sm:$0xff] %v1012
        %1033 = vst [vmem:[%s1017 + $0x78] sm:$0xff] %v1013
        %v1034 = vld [vmem:[#allocation3] sm:$0xff]
        %v1035 = vld [vmem:[#allocation3 + $0x8] sm:$0xff]
        %v1036 = vld [vmem:[#allocation3 + $0x10] sm:$0xff]
        %v1037 = vld [vmem:[#allocation3 + $0x18] sm:$0xff]
        %v1038 = vld [vmem:[#allocation3 + $0x20] sm:$0xff]
        %v1039 = vld [vmem:[#allocation3 + $0x28] sm:$0xff]
        %v1040 = vld [vmem:[#allocation3 + $0x30] sm:$0xff]
        %v1041 = vld [vmem:[#allocation3 + $0x38] sm:$0xff]
        %v1042 = vld [vmem:[#allocation3 + $0x40] sm:$0xff]
        %v1043 = vld [vmem:[#allocation3 + $0x48] sm:$0xff]
        %v1044 = vld [vmem:[#allocation3 + $0x50] sm:$0xff]
        %v1045 = vld [vmem:[#allocation3 + $0x58] sm:$0xff]
        %v1046 = vld [vmem:[#allocation3 + $0x60] sm:$0xff]
        %v1047 = vld [vmem:[#allocation3 + $0x68] sm:$0xff]
        %v1048 = vld [vmem:[#allocation3 + $0x70] sm:$0xff]
        %v1049 = vld [vmem:[#allocation3 + $0x78] sm:$0xff]
        %v1050 = vpack.c.bf16 %v1035, %v1034
        %v1051 = vpack.c.bf16 %v1037, %v1036
        %v1052 = vpack.c.bf16 %v1039, %v1038
        %v1053 = vpack.c.bf16 %v1041, %v1040
        %v1054 = vpack.c.bf16 %v1043, %v1042
        %v1055 = vpack.c.bf16 %v1045, %v1044
        %v1056 = vpack.c.bf16 %v1047, %v1046
        %v1057 = vpack.c.bf16 %v1049, %v1048
        %v1058 = vld [vmem:[%s3] sm:$0xf]
        %v1059 = vld [vmem:[%s3 + $0x4] sm:$0xf]
        %v1060 = vld [vmem:[%s3 + $0x8] sm:$0xf]
        %v1061 = vld [vmem:[%s3 + $0xc] sm:$0xf]
        %v1062 = vld [vmem:[%s3 + $0x10] sm:$0xf]
        %v1063 = vld [vmem:[%s3 + $0x14] sm:$0xf]
        %v1064 = vld [vmem:[%s3 + $0x18] sm:$0xf]
        %v1065 = vld [vmem:[%s3 + $0x1c] sm:$0xf]
        %v1066 = vld [vmem:[%s3 + $0x20] sm:$0xf]
        %v1067 = vld [vmem:[%s3 + $0x24] sm:$0xf]
        %v1068 = vld [vmem:[%s3 + $0x28] sm:$0xf]
        %v1069 = vld [vmem:[%s3 + $0x2c] sm:$0xf]
        %v1070 = vld [vmem:[%s3 + $0x30] sm:$0xf]
        %v1071 = vld [vmem:[%s3 + $0x34] sm:$0xf]
        %v1072 = vld [vmem:[%s3 + $0x38] sm:$0xf]
        %v1073 = vld [vmem:[%s3 + $0x3c] sm:$0xf]
        %v1074 = vld [vmem:[%s1017] sm:$0xff]
        %v1075 = vld [vmem:[%s1017 + $0x8] sm:$0xff]
        %v1076 = vld [vmem:[%s1017 + $0x10] sm:$0xff]
        %v1077 = vld [vmem:[%s1017 + $0x18] sm:$0xff]
        %v1078 = vld [vmem:[%s1017 + $0x20] sm:$0xff]
        %v1079 = vld [vmem:[%s1017 + $0x28] sm:$0xff]
        %v1080 = vld [vmem:[%s1017 + $0x30] sm:$0xff]
        %v1081 = vld [vmem:[%s1017 + $0x38] sm:$0xff]
        %v1082 = vld [vmem:[%s1017 + $0x40] sm:$0xff]
        %v1083 = vld [vmem:[%s1017 + $0x48] sm:$0xff]
        %v1084 = vld [vmem:[%s1017 + $0x50] sm:$0xff]
        %v1085 = vld [vmem:[%s1017 + $0x58] sm:$0xff]
        %v1086 = vld [vmem:[%s1017 + $0x60] sm:$0xff]
        %v1087 = vld [vmem:[%s1017 + $0x68] sm:$0xff]
        %v1088 = vld [vmem:[%s1017 + $0x70] sm:$0xff]
        %v1089 = vld [vmem:[%s1017 + $0x78] sm:$0xff]
        %v1090 = vpack.c.bf16 %v1075, %v1074
        %v1091 = vpack.c.bf16 %v1077, %v1076
        %v1092 = vpack.c.bf16 %v1079, %v1078
        %v1093 = vpack.c.bf16 %v1081, %v1080
        %v1094 = vpack.c.bf16 %v1083, %v1082
        %v1095 = vpack.c.bf16 %v1085, %v1084
        %v1096 = vpack.c.bf16 %v1087, %v1086
        %v1097 = vpack.c.bf16 %v1089, %v1088
        %s1098 = scalar_lea.vmem %s3, 64
        %v1099 = vld [vmem:[%s1098] sm:$0xf]
        %v1100 = vld [vmem:[%s1098 + $0x4] sm:$0xf]
        %v1101 = vld [vmem:[%s1098 + $0x8] sm:$0xf]
        %v1102 = vld [vmem:[%s1098 + $0xc] sm:$0xf]
        %v1103 = vld [vmem:[%s1098 + $0x10] sm:$0xf]
        %v1104 = vld [vmem:[%s1098 + $0x14] sm:$0xf]
        %v1105 = vld [vmem:[%s1098 + $0x18] sm:$0xf]
        %v1106 = vld [vmem:[%s1098 + $0x1c] sm:$0xf]
        %v1107 = vld [vmem:[%s1098 + $0x20] sm:$0xf]
        %v1108 = vld [vmem:[%s1098 + $0x24] sm:$0xf]
        %v1109 = vld [vmem:[%s1098 + $0x28] sm:$0xf]
        %v1110 = vld [vmem:[%s1098 + $0x2c] sm:$0xf]
        %v1111 = vld [vmem:[%s1098 + $0x30] sm:$0xf]
        %v1112 = vld [vmem:[%s1098 + $0x34] sm:$0xf]
        %v1113 = vld [vmem:[%s1098 + $0x38] sm:$0xf]
        %v1114 = vld [vmem:[%s1098 + $0x3c] sm:$0xf]
        %v1131 = vunpack.c.l.b16 %v1099
        %v1132 = vunpack.c.l.b16 %v1100
        %v1133 = vunpack.c.l.b16 %v1101
        %v1134 = vunpack.c.l.b16 %v1102
        %v1135 = vunpack.c.l.b16 %v1103
        %v1136 = vunpack.c.l.b16 %v1104
        %v1137 = vunpack.c.l.b16 %v1105
        %v1138 = vunpack.c.l.b16 %v1106
        %v1139 = vunpack.c.l.b16 %v1107
        %v1140 = vunpack.c.l.b16 %v1108
        %v1141 = vunpack.c.l.b16 %v1109
        %v1142 = vunpack.c.l.b16 %v1110
        %v1143 = vunpack.c.l.b16 %v1111
        %v1144 = vunpack.c.l.b16 %v1112
        %v1145 = vunpack.c.l.b16 %v1113
        %v1146 = vunpack.c.l.b16 %v1114
        %v1147 = vpack.c.b16 %v1132, %v1131
        %v1148 = vpack.c.b16 %v1134, %v1133
        %v1149 = vpack.c.b16 %v1136, %v1135
        %v1150 = vpack.c.b16 %v1138, %v1137
        %v1151 = vpack.c.b16 %v1140, %v1139
        %v1152 = vpack.c.b16 %v1142, %v1141
        %v1153 = vpack.c.b16 %v1144, %v1143
        %v1154 = vpack.c.b16 %v1146, %v1145
        %1163 = vmatpush.bf16.msra.mxu0 %v1154
        %1164 = vmatpush.bf16.msra.mxu0 %v1153
        %1165 = vmatpush.bf16.msra.mxu0 %v1152
        %1166 = vmatpush.bf16.msra.mxu0 %v1151
        %1167 = vmatpush.bf16.msra.mxu0 %v1150
        %1168 = vmatpush.bf16.msra.mxu0 %v1149
        %1169 = vmatpush.bf16.msra.mxu0 %v1148
        %1170 = vmatpush.bf16.msra.mxu0 %v1147
        %1171 = vmatmul.bf16.gmra.mxu0 %v1090
        %v1172 = vpop.f32.mrf.mxu0
        %v1173 = vadd.f32 0.0, %v1172
        %v1174 = vpop.f32.mrf.mxu0
        %v1175 = vadd.f32 0.0, %v1174
        %1176 = vmatmul.bf16.gmra.mxu0 %v1091
        %v1177 = vpop.f32.mrf.mxu0
        %v1178 = vadd.f32 0.0, %v1177
        %v1179 = vpop.f32.mrf.mxu0
        %v1180 = vadd.f32 0.0, %v1179
        %1181 = vmatmul.bf16.gmra.mxu0 %v1092
        %v1182 = vpop.f32.mrf.mxu0
        %v1183 = vadd.f32 0.0, %v1182
        %v1184 = vpop.f32.mrf.mxu0
        %v1185 = vadd.f32 0.0, %v1184
        %1186 = vmatmul.bf16.gmra.mxu0 %v1093
        %v1187 = vpop.f32.mrf.mxu0
        %v1188 = vadd.f32 0.0, %v1187
        %v1189 = vpop.f32.mrf.mxu0
        %v1190 = vadd.f32 0.0, %v1189
        %1191 = vmatmul.bf16.gmra.mxu0 %v1094
        %v1192 = vpop.f32.mrf.mxu0
        %v1193 = vadd.f32 0.0, %v1192
        %v1194 = vpop.f32.mrf.mxu0
        %v1195 = vadd.f32 0.0, %v1194
        %1196 = vmatmul.bf16.gmra.mxu0 %v1095
        %v1197 = vpop.f32.mrf.mxu0
        %v1198 = vadd.f32 0.0, %v1197
        %v1199 = vpop.f32.mrf.mxu0
        %v1200 = vadd.f32 0.0, %v1199
        %1201 = vmatmul.bf16.gmra.mxu0 %v1096
        %v1202 = vpop.f32.mrf.mxu0
        %v1203 = vadd.f32 0.0, %v1202
        %v1204 = vpop.f32.mrf.mxu0
        %v1205 = vadd.f32 0.0, %v1204
        %1206 = vmatmul.bf16.gmra.mxu0 %v1097
        %v1207 = vpop.f32.mrf.mxu0
        %v1208 = vadd.f32 0.0, %v1207
        %v1209 = vpop.f32.mrf.mxu0
        %v1210 = vadd.f32 0.0, %v1209
        %1211 = vdwg.mxu0
        %v1228 = vunpack.c.l.b16 %v1058
        %v1229 = vunpack.c.l.b16 %v1059
        %v1230 = vunpack.c.l.b16 %v1060
        %v1231 = vunpack.c.l.b16 %v1061
        %v1232 = vunpack.c.l.b16 %v1062
        %v1233 = vunpack.c.l.b16 %v1063
        %v1234 = vunpack.c.l.b16 %v1064
        %v1235 = vunpack.c.l.b16 %v1065
        %v1236 = vunpack.c.l.b16 %v1066
        %v1237 = vunpack.c.l.b16 %v1067
        %v1238 = vunpack.c.l.b16 %v1068
        %v1239 = vunpack.c.l.b16 %v1069
        %v1240 = vunpack.c.l.b16 %v1070
        %v1241 = vunpack.c.l.b16 %v1071
        %v1242 = vunpack.c.l.b16 %v1072
        %v1243 = vunpack.c.l.b16 %v1073
        %v1244 = vpack.c.b16 %v1229, %v1228
        %v1245 = vpack.c.b16 %v1231, %v1230
        %v1246 = vpack.c.b16 %v1233, %v1232
        %v1247 = vpack.c.b16 %v1235, %v1234
        %v1248 = vpack.c.b16 %v1237, %v1236
        %v1249 = vpack.c.b16 %v1239, %v1238
        %v1250 = vpack.c.b16 %v1241, %v1240
        %v1251 = vpack.c.b16 %v1243, %v1242
        %1260 = vmatpush.bf16.msra.mxu0 %v1251
        %1261 = vmatpush.bf16.msra.mxu0 %v1250
        %1262 = vmatpush.bf16.msra.mxu0 %v1249
        %1263 = vmatpush.bf16.msra.mxu0 %v1248
        %1264 = vmatpush.bf16.msra.mxu0 %v1247
        %1265 = vmatpush.bf16.msra.mxu0 %v1246
        %1266 = vmatpush.bf16.msra.mxu0 %v1245
        %1267 = vmatpush.bf16.msra.mxu0 %v1244
        %1268 = vmatmul.bf16.gmra.mxu0 %v1050
        %v1269 = vpop.f32.mrf.mxu0
        %v1270 = vadd.f32 %v1173, %v1269
        %v1271 = vpop.f32.mrf.mxu0
        %v1272 = vadd.f32 %v1175, %v1271
        %1273 = vmatmul.bf16.gmra.mxu0 %v1051
        %v1274 = vpop.f32.mrf.mxu0
        %v1275 = vadd.f32 %v1178, %v1274
        %v1276 = vpop.f32.mrf.mxu0
        %v1277 = vadd.f32 %v1180, %v1276
        %1278 = vmatmul.bf16.gmra.mxu0 %v1052
        %v1279 = vpop.f32.mrf.mxu0
        %v1280 = vadd.f32 %v1183, %v1279
        %v1281 = vpop.f32.mrf.mxu0
        %v1282 = vadd.f32 %v1185, %v1281
        %1283 = vmatmul.bf16.gmra.mxu0 %v1053
        %v1284 = vpop.f32.mrf.mxu0
        %v1285 = vadd.f32 %v1188, %v1284
        %v1286 = vpop.f32.mrf.mxu0
        %v1287 = vadd.f32 %v1190, %v1286
        %1288 = vmatmul.bf16.gmra.mxu0 %v1054
        %v1289 = vpop.f32.mrf.mxu0
        %v1290 = vadd.f32 %v1193, %v1289
        %v1291 = vpop.f32.mrf.mxu0
        %v1292 = vadd.f32 %v1195, %v1291
        %1293 = vmatmul.bf16.gmra.mxu0 %v1055
        %v1294 = vpop.f32.mrf.mxu0
        %v1295 = vadd.f32 %v1198, %v1294
        %v1296 = vpop.f32.mrf.mxu0
        %v1297 = vadd.f32 %v1200, %v1296
        %1298 = vmatmul.bf16.gmra.mxu0 %v1056
        %v1299 = vpop.f32.mrf.mxu0
        %v1300 = vadd.f32 %v1203, %v1299
        %v1301 = vpop.f32.mrf.mxu0
        %v1302 = vadd.f32 %v1205, %v1301
        %1303 = vmatmul.bf16.gmra.mxu0 %v1057
        %v1304 = vpop.f32.mrf.mxu0
        %v1305 = vadd.f32 %v1208, %v1304
        %v1306 = vpop.f32.mrf.mxu0
        %v1307 = vadd.f32 %v1210, %v1306
        %1308 = vdwg.mxu0
        %s1309 = scalar_lea.vmem [#allocation3], 16
        %v1310 = vld [vmem:[%s1309] sm:$0xff]
        %v1311 = vld [vmem:[%s1309 + $0x8] sm:$0xff]
        %v1312 = vld [vmem:[%s1309 + $0x10] sm:$0xff]
        %v1313 = vld [vmem:[%s1309 + $0x18] sm:$0xff]
        %v1314 = vld [vmem:[%s1309 + $0x20] sm:$0xff]
        %v1315 = vld [vmem:[%s1309 + $0x28] sm:$0xff]
        %v1316 = vld [vmem:[%s1309 + $0x30] sm:$0xff]
        %v1317 = vld [vmem:[%s1309 + $0x38] sm:$0xff]
        %v1318 = vld [vmem:[%s1309 + $0x40] sm:$0xff]
        %v1319 = vld [vmem:[%s1309 + $0x48] sm:$0xff]
        %v1320 = vld [vmem:[%s1309 + $0x50] sm:$0xff]
        %v1321 = vld [vmem:[%s1309 + $0x58] sm:$0xff]
        %v1322 = vld [vmem:[%s1309 + $0x60] sm:$0xff]
        %v1323 = vld [vmem:[%s1309 + $0x68] sm:$0xff]
        %v1324 = vld [vmem:[%s1309 + $0x70] sm:$0xff]
        %v1325 = vld [vmem:[%s1309 + $0x78] sm:$0xff]
        %v1326 = vpack.c.bf16 %v1311, %v1310
        %v1327 = vpack.c.bf16 %v1313, %v1312
        %v1328 = vpack.c.bf16 %v1315, %v1314
        %v1329 = vpack.c.bf16 %v1317, %v1316
        %v1330 = vpack.c.bf16 %v1319, %v1318
        %v1331 = vpack.c.bf16 %v1321, %v1320
        %v1332 = vpack.c.bf16 %v1323, %v1322
        %v1333 = vpack.c.bf16 %v1325, %v1324
        %s1334 = scalar_lea.vmem %s3, 128
        %v1335 = vld [vmem:[%s1334] sm:$0xf]
        %v1336 = vld [vmem:[%s1334 + $0x4] sm:$0xf]
        %v1337 = vld [vmem:[%s1334 + $0x8] sm:$0xf]
        %v1338 = vld [vmem:[%s1334 + $0xc] sm:$0xf]
        %v1339 = vld [vmem:[%s1334 + $0x10] sm:$0xf]
        %v1340 = vld [vmem:[%s1334 + $0x14] sm:$0xf]
        %v1341 = vld [vmem:[%s1334 + $0x18] sm:$0xf]
        %v1342 = vld [vmem:[%s1334 + $0x1c] sm:$0xf]
        %v1343 = vld [vmem:[%s1334 + $0x20] sm:$0xf]
        %v1344 = vld [vmem:[%s1334 + $0x24] sm:$0xf]
        %v1345 = vld [vmem:[%s1334 + $0x28] sm:$0xf]
        %v1346 = vld [vmem:[%s1334 + $0x2c] sm:$0xf]
        %v1347 = vld [vmem:[%s1334 + $0x30] sm:$0xf]
        %v1348 = vld [vmem:[%s1334 + $0x34] sm:$0xf]
        %v1349 = vld [vmem:[%s1334 + $0x38] sm:$0xf]
        %v1350 = vld [vmem:[%s1334 + $0x3c] sm:$0xf]
        %v1367 = vunpack.c.l.b16 %v1335
        %v1368 = vunpack.c.l.b16 %v1336
        %v1369 = vunpack.c.l.b16 %v1337
        %v1370 = vunpack.c.l.b16 %v1338
        %v1371 = vunpack.c.l.b16 %v1339
        %v1372 = vunpack.c.l.b16 %v1340
        %v1373 = vunpack.c.l.b16 %v1341
        %v1374 = vunpack.c.l.b16 %v1342
        %v1375 = vunpack.c.l.b16 %v1343
        %v1376 = vunpack.c.l.b16 %v1344
        %v1377 = vunpack.c.l.b16 %v1345
        %v1378 = vunpack.c.l.b16 %v1346
        %v1379 = vunpack.c.l.b16 %v1347
        %v1380 = vunpack.c.l.b16 %v1348
        %v1381 = vunpack.c.l.b16 %v1349
        %v1382 = vunpack.c.l.b16 %v1350
        %v1383 = vpack.c.b16 %v1368, %v1367
        %v1384 = vpack.c.b16 %v1370, %v1369
        %v1385 = vpack.c.b16 %v1372, %v1371
        %v1386 = vpack.c.b16 %v1374, %v1373
        %v1387 = vpack.c.b16 %v1376, %v1375
        %v1388 = vpack.c.b16 %v1378, %v1377
        %v1389 = vpack.c.b16 %v1380, %v1379
        %v1390 = vpack.c.b16 %v1382, %v1381
        %1399 = vmatpush.bf16.msra.mxu0 %v1390
        %1400 = vmatpush.bf16.msra.mxu0 %v1389
        %1401 = vmatpush.bf16.msra.mxu0 %v1388
        %1402 = vmatpush.bf16.msra.mxu0 %v1387
        %1403 = vmatpush.bf16.msra.mxu0 %v1386
        %1404 = vmatpush.bf16.msra.mxu0 %v1385
        %1405 = vmatpush.bf16.msra.mxu0 %v1384
        %1406 = vmatpush.bf16.msra.mxu0 %v1383
        %1407 = vmatmul.bf16.gmra.mxu0 %v1326
        %v1408 = vpop.f32.mrf.mxu0
        %v1409 = vadd.f32 0.0, %v1408
        %v1410 = vpop.f32.mrf.mxu0
        %v1411 = vadd.f32 0.0, %v1410
        %1412 = vmatmul.bf16.gmra.mxu0 %v1327
        %v1413 = vpop.f32.mrf.mxu0
        %v1414 = vadd.f32 0.0, %v1413
        %v1415 = vpop.f32.mrf.mxu0
        %v1416 = vadd.f32 0.0, %v1415
        %1417 = vmatmul.bf16.gmra.mxu0 %v1328
        %v1418 = vpop.f32.mrf.mxu0
        %v1419 = vadd.f32 0.0, %v1418
        %v1420 = vpop.f32.mrf.mxu0
        %v1421 = vadd.f32 0.0, %v1420
        %1422 = vmatmul.bf16.gmra.mxu0 %v1329
        %v1423 = vpop.f32.mrf.mxu0
        %v1424 = vadd.f32 0.0, %v1423
        %v1425 = vpop.f32.mrf.mxu0
        %v1426 = vadd.f32 0.0, %v1425
        %1427 = vmatmul.bf16.gmra.mxu0 %v1330
        %v1428 = vpop.f32.mrf.mxu0
        %v1429 = vadd.f32 0.0, %v1428
        %v1430 = vpop.f32.mrf.mxu0
        %v1431 = vadd.f32 0.0, %v1430
        %1432 = vmatmul.bf16.gmra.mxu0 %v1331
        %v1433 = vpop.f32.mrf.mxu0
        %v1434 = vadd.f32 0.0, %v1433
        %v1435 = vpop.f32.mrf.mxu0
        %v1436 = vadd.f32 0.0, %v1435
        %1437 = vmatmul.bf16.gmra.mxu0 %v1332
        %v1438 = vpop.f32.mrf.mxu0
        %v1439 = vadd.f32 0.0, %v1438
        %v1440 = vpop.f32.mrf.mxu0
        %v1441 = vadd.f32 0.0, %v1440
        %1442 = vmatmul.bf16.gmra.mxu0 %v1333
        %v1443 = vpop.f32.mrf.mxu0
        %v1444 = vadd.f32 0.0, %v1443
        %v1445 = vpop.f32.mrf.mxu0
        %v1446 = vadd.f32 0.0, %v1445
        %1447 = vdwg.mxu0
        %v1448 = vadd.f32 %v1270, %v1409
        %v1449 = vadd.f32 %v1272, %v1411
        %v1450 = vadd.f32 %v1275, %v1414
        %v1451 = vadd.f32 %v1277, %v1416
        %v1452 = vadd.f32 %v1280, %v1419
        %v1453 = vadd.f32 %v1282, %v1421
        %v1454 = vadd.f32 %v1285, %v1424
        %v1455 = vadd.f32 %v1287, %v1426
        %v1456 = vadd.f32 %v1290, %v1429
        %v1457 = vadd.f32 %v1292, %v1431
        %v1458 = vadd.f32 %v1295, %v1434
        %v1459 = vadd.f32 %v1297, %v1436
        %v1460 = vadd.f32 %v1300, %v1439
        %v1461 = vadd.f32 %v1302, %v1441
        %v1462 = vadd.f32 %v1305, %v1444
        %v1463 = vadd.f32 %v1307, %v1446
        %v1464 = vld [vmem:[%s4] sm:$0x1]
        %v1466 = vperm.slane %v1464, 0
        %v1468 = vadd.f32 %v1448, %v1466
        %v1469 = vadd.f32 %v1449, %v1466
        %v1470 = vadd.f32 %v1450, %v1466
        %v1471 = vadd.f32 %v1451, %v1466
        %v1472 = vadd.f32 %v1452, %v1466
        %v1473 = vadd.f32 %v1453, %v1466
        %v1474 = vadd.f32 %v1454, %v1466
        %v1475 = vadd.f32 %v1455, %v1466
        %v1476 = vadd.f32 %v1456, %v1466
        %v1477 = vadd.f32 %v1457, %v1466
        %v1478 = vadd.f32 %v1458, %v1466
        %v1479 = vadd.f32 %v1459, %v1466
        %v1480 = vadd.f32 %v1460, %v1466
        %v1481 = vadd.f32 %v1461, %v1466
        %v1482 = vadd.f32 %v1462, %v1466
        %v1483 = vadd.f32 %v1463, %v1466
        %v1484 = vmax.f32 %v1468, 0.0
        %v1485 = vmax.f32 %v1469, 0.0
        %v1486 = vmax.f32 %v1470, 0.0
        %v1487 = vmax.f32 %v1471, 0.0
        %v1488 = vmax.f32 %v1472, 0.0
        %v1489 = vmax.f32 %v1473, 0.0
        %v1490 = vmax.f32 %v1474, 0.0
        %v1491 = vmax.f32 %v1475, 0.0
        %v1492 = vmax.f32 %v1476, 0.0
        %v1493 = vmax.f32 %v1477, 0.0
        %v1494 = vmax.f32 %v1478, 0.0
        %v1495 = vmax.f32 %v1479, 0.0
        %v1496 = vmax.f32 %v1480, 0.0
        %v1497 = vmax.f32 %v1481, 0.0
        %v1498 = vmax.f32 %v1482, 0.0
        %v1499 = vmax.f32 %v1483, 0.0
        %v1500 = vmax.f32 %v1484, %v1485
        %v1501 = vmax.f32 %v1486, %v1487
        %v1502 = vmax.f32 %v1488, %v1489
        %v1503 = vmax.f32 %v1490, %v1491
        %v1504 = vmax.f32 %v1492, %v1493
        %v1505 = vmax.f32 %v1494, %v1495
        %v1506 = vmax.f32 %v1496, %v1497
        %v1507 = vmax.f32 %v1498, %v1499
        %v1508 = vpack.c.bf16 %v1501, %v1500
        %v1509 = vpack.c.bf16 %v1503, %v1502
        %v1510 = vpack.c.bf16 %v1505, %v1504
        %v1511 = vpack.c.bf16 %v1507, %v1506
        %v1512 = vld [vmem:[%s5] sm:$0xf]
        %v1513 = vld [vmem:[%s5 + $0x4] sm:$0xf]
        %v1514 = vld [vmem:[%s5 + $0x8] sm:$0xf]
        %v1515 = vld [vmem:[%s5 + $0xc] sm:$0xf]
        %v1516 = vld [vmem:[%s5 + $0x10] sm:$0xf]
        %v1517 = vld [vmem:[%s5 + $0x14] sm:$0xf]
        %v1518 = vld [vmem:[%s5 + $0x18] sm:$0xf]
        %v1519 = vld [vmem:[%s5 + $0x1c] sm:$0xf]
        %v1520 = vld [vmem:[%s5 + $0x20] sm:$0xf]
        %v1521 = vld [vmem:[%s5 + $0x24] sm:$0xf]
        %v1522 = vld [vmem:[%s5 + $0x28] sm:$0xf]
        %v1523 = vld [vmem:[%s5 + $0x2c] sm:$0xf]
        %v1524 = vld [vmem:[%s5 + $0x30] sm:$0xf]
        %v1525 = vld [vmem:[%s5 + $0x34] sm:$0xf]
        %v1526 = vld [vmem:[%s5 + $0x38] sm:$0xf]
        %v1527 = vld [vmem:[%s5 + $0x3c] sm:$0xf]
        %v1544 = vunpack.c.l.b16 %v1512
        %v1545 = vunpack.c.l.b16 %v1513
        %v1546 = vunpack.c.l.b16 %v1514
        %v1547 = vunpack.c.l.b16 %v1515
        %v1548 = vunpack.c.l.b16 %v1516
        %v1549 = vunpack.c.l.b16 %v1517
        %v1550 = vunpack.c.l.b16 %v1518
        %v1551 = vunpack.c.l.b16 %v1519
        %v1552 = vunpack.c.l.b16 %v1520
        %v1553 = vunpack.c.l.b16 %v1521
        %v1554 = vunpack.c.l.b16 %v1522
        %v1555 = vunpack.c.l.b16 %v1523
        %v1556 = vunpack.c.l.b16 %v1524
        %v1557 = vunpack.c.l.b16 %v1525
        %v1558 = vunpack.c.l.b16 %v1526
        %v1559 = vunpack.c.l.b16 %v1527
        %v1560 = vpack.c.b16 %v1545, %v1544
        %v1561 = vpack.c.b16 %v1547, %v1546
        %v1562 = vpack.c.b16 %v1549, %v1548
        %v1563 = vpack.c.b16 %v1551, %v1550
        %v1564 = vpack.c.b16 %v1553, %v1552
        %v1565 = vpack.c.b16 %v1555, %v1554
        %v1566 = vpack.c.b16 %v1557, %v1556
        %v1567 = vpack.c.b16 %v1559, %v1558
        %1576 = vmatpush.bf16.msra.mxu0 %v1567
        %1577 = vmatpush.bf16.msra.mxu0 %v1566
        %1578 = vmatpush.bf16.msra.mxu0 %v1565
        %1579 = vmatpush.bf16.msra.mxu0 %v1564
        %1580 = vmatpush.bf16.msra.mxu0 %v1563
        %1581 = vmatpush.bf16.msra.mxu0 %v1562
        %1582 = vmatpush.bf16.msra.mxu0 %v1561
        %1583 = vmatpush.bf16.msra.mxu0 %v1560
        %1584 = vmatmul.bf16.gmra.mxu0 %v1508
        %v1585 = vpop.f32.mrf.mxu0
        %v1586 = vadd.f32 0.0, %v1585
        %v1587 = vpop.f32.mrf.mxu0
        %v1588 = vadd.f32 0.0, %v1587
        %1589 = vmatmul.bf16.gmra.mxu0 %v1509
        %v1590 = vpop.f32.mrf.mxu0
        %v1591 = vadd.f32 0.0, %v1590
        %v1592 = vpop.f32.mrf.mxu0
        %v1593 = vadd.f32 0.0, %v1592
        %1594 = vmatmul.bf16.gmra.mxu0 %v1510
        %v1595 = vpop.f32.mrf.mxu0
        %v1596 = vadd.f32 0.0, %v1595
        %v1597 = vpop.f32.mrf.mxu0
        %v1598 = vadd.f32 0.0, %v1597
        %1599 = vmatmul.bf16.gmra.mxu0 %v1511
        %v1600 = vpop.f32.mrf.mxu0
        %v1601 = vadd.f32 0.0, %v1600
        %v1602 = vpop.f32.mrf.mxu0
        %v1603 = vadd.f32 0.0, %v1602
        %1604 = vdwg.mxu0
        %s1605 = scalar_lea.vmem %s5, 64
        %v1606 = vld [vmem:[%s1605] sm:$0xf]
        %v1607 = vld [vmem:[%s1605 + $0x4] sm:$0xf]
        %v1608 = vld [vmem:[%s1605 + $0x8] sm:$0xf]
        %v1609 = vld [vmem:[%s1605 + $0xc] sm:$0xf]
        %v1610 = vld [vmem:[%s1605 + $0x10] sm:$0xf]
        %v1611 = vld [vmem:[%s1605 + $0x14] sm:$0xf]
        %v1612 = vld [vmem:[%s1605 + $0x18] sm:$0xf]
        %v1613 = vld [vmem:[%s1605 + $0x1c] sm:$0xf]
        %v1614 = vld [vmem:[%s1605 + $0x20] sm:$0xf]
        %v1615 = vld [vmem:[%s1605 + $0x24] sm:$0xf]
        %v1616 = vld [vmem:[%s1605 + $0x28] sm:$0xf]
        %v1617 = vld [vmem:[%s1605 + $0x2c] sm:$0xf]
        %v1618 = vld [vmem:[%s1605 + $0x30] sm:$0xf]
        %v1619 = vld [vmem:[%s1605 + $0x34] sm:$0xf]
        %v1620 = vld [vmem:[%s1605 + $0x38] sm:$0xf]
        %v1621 = vld [vmem:[%s1605 + $0x3c] sm:$0xf]
        %v1638 = vunpack.c.l.b16 %v1606
        %v1639 = vunpack.c.l.b16 %v1607
        %v1640 = vunpack.c.l.b16 %v1608
        %v1641 = vunpack.c.l.b16 %v1609
        %v1642 = vunpack.c.l.b16 %v1610
        %v1643 = vunpack.c.l.b16 %v1611
        %v1644 = vunpack.c.l.b16 %v1612
        %v1645 = vunpack.c.l.b16 %v1613
        %v1646 = vunpack.c.l.b16 %v1614
        %v1647 = vunpack.c.l.b16 %v1615
        %v1648 = vunpack.c.l.b16 %v1616
        %v1649 = vunpack.c.l.b16 %v1617
        %v1650 = vunpack.c.l.b16 %v1618
        %v1651 = vunpack.c.l.b16 %v1619
        %v1652 = vunpack.c.l.b16 %v1620
        %v1653 = vunpack.c.l.b16 %v1621
        %v1654 = vpack.c.b16 %v1639, %v1638
        %v1655 = vpack.c.b16 %v1641, %v1640
        %v1656 = vpack.c.b16 %v1643, %v1642
        %v1657 = vpack.c.b16 %v1645, %v1644
        %v1658 = vpack.c.b16 %v1647, %v1646
        %v1659 = vpack.c.b16 %v1649, %v1648
        %v1660 = vpack.c.b16 %v1651, %v1650
        %v1661 = vpack.c.b16 %v1653, %v1652
        %1670 = vmatpush.bf16.msra.mxu0 %v1661
        %1671 = vmatpush.bf16.msra.mxu0 %v1660
        %1672 = vmatpush.bf16.msra.mxu0 %v1659
        %1673 = vmatpush.bf16.msra.mxu0 %v1658
        %1674 = vmatpush.bf16.msra.mxu0 %v1657
        %1675 = vmatpush.bf16.msra.mxu0 %v1656
        %1676 = vmatpush.bf16.msra.mxu0 %v1655
        %1677 = vmatpush.bf16.msra.mxu0 %v1654
        %1678 = vmatmul.bf16.gmra.mxu0 %v1508
        %v1679 = vpop.f32.mrf.mxu0
        %v1680 = vadd.f32 0.0, %v1679
        %v1681 = vpop.f32.mrf.mxu0
        %v1682 = vadd.f32 0.0, %v1681
        %1683 = vmatmul.bf16.gmra.mxu0 %v1509
        %v1684 = vpop.f32.mrf.mxu0
        %v1685 = vadd.f32 0.0, %v1684
        %v1686 = vpop.f32.mrf.mxu0
        %v1687 = vadd.f32 0.0, %v1686
        %1688 = vmatmul.bf16.gmra.mxu0 %v1510
        %v1689 = vpop.f32.mrf.mxu0
        %v1690 = vadd.f32 0.0, %v1689
        %v1691 = vpop.f32.mrf.mxu0
        %v1692 = vadd.f32 0.0, %v1691
        %1693 = vmatmul.bf16.gmra.mxu0 %v1511
        %v1694 = vpop.f32.mrf.mxu0
        %v1695 = vadd.f32 0.0, %v1694
        %v1696 = vpop.f32.mrf.mxu0
        %v1697 = vadd.f32 0.0, %v1696
        %1698 = vdwg.mxu0
        %v1699 = vmax.f32 %v1586, %v1680
        %v1700 = vmax.f32 %v1588, %v1682
        %v1701 = vmax.f32 %v1591, %v1685
        %v1702 = vmax.f32 %v1593, %v1687
        %v1703 = vmax.f32 %v1596, %v1690
        %v1704 = vmax.f32 %v1598, %v1692
        %v1705 = vmax.f32 %v1601, %v1695
        %v1706 = vmax.f32 %v1603, %v1697
        %1707 = vst.msk [vmem:[#allocation4] sm:$0xff] %vm551, 0.0
        %s1708 = scalar_lea.vmem [#allocation4], 72
        %1709 = vst.msk [vmem:[%s1708] sm:$0xff] %vm551, 0.0
        %s1710 = scalar_lea.vmem [#allocation4], 8
        %1711 = vst.msk [vmem:[%s1710] sm:$0xff] %vm551, %v1699
        %1712 = vst.msk [vmem:[%s1710 + $0x8] sm:$0xff] %vm551, %v1700
        %1713 = vst.msk [vmem:[%s1710 + $0x10] sm:$0xff] %vm551, %v1701
        %1714 = vst.msk [vmem:[%s1710 + $0x18] sm:$0xff] %vm551, %v1702
        %1715 = vst.msk [vmem:[%s1710 + $0x20] sm:$0xff] %vm551, %v1703
        %1716 = vst.msk [vmem:[%s1710 + $0x28] sm:$0xff] %vm551, %v1704
        %1717 = vst.msk [vmem:[%s1710 + $0x30] sm:$0xff] %vm551, %v1705
        %1718 = vst.msk [vmem:[%s1710 + $0x38] sm:$0xff] %vm551, %v1706
        %v1719 = vld [vmem:[#allocation4] sm:$0xff]
        %v1720 = vld [vmem:[#allocation4 + $0x8] sm:$0xff]
        %v1721 = vld [vmem:[#allocation4 + $0x10] sm:$0xff]
        %v1722 = vld [vmem:[#allocation4 + $0x18] sm:$0xff]
        %v1723 = vld [vmem:[#allocation4 + $0x20] sm:$0xff]
        %v1724 = vld [vmem:[#allocation4 + $0x28] sm:$0xff]
        %v1725 = vld [vmem:[#allocation4 + $0x30] sm:$0xff]
        %v1726 = vld [vmem:[#allocation4 + $0x38] sm:$0xff]
        %v1727 = vpack.c.bf16 %v1720, %v1719
        %v1728 = vpack.c.bf16 %v1722, %v1721
        %v1729 = vpack.c.bf16 %v1724, %v1723
        %v1730 = vpack.c.bf16 %v1726, %v1725
        %v1731 = vld [vmem:[%s6] sm:$0xf]
        %v1732 = vld [vmem:[%s6 + $0x4] sm:$0xf]
        %v1733 = vld [vmem:[%s6 + $0x8] sm:$0xf]
        %v1734 = vld [vmem:[%s6 + $0xc] sm:$0xf]
        %v1735 = vld [vmem:[%s6 + $0x10] sm:$0xf]
        %v1736 = vld [vmem:[%s6 + $0x14] sm:$0xf]
        %v1737 = vld [vmem:[%s6 + $0x18] sm:$0xf]
        %v1738 = vld [vmem:[%s6 + $0x1c] sm:$0xf]
        %v1739 = vld [vmem:[%s1710] sm:$0xff]
        %v1740 = vld [vmem:[%s1710 + $0x8] sm:$0xff]
        %v1741 = vld [vmem:[%s1710 + $0x10] sm:$0xff]
        %v1742 = vld [vmem:[%s1710 + $0x18] sm:$0xff]
        %v1743 = vld [vmem:[%s1710 + $0x20] sm:$0xff]
        %v1744 = vld [vmem:[%s1710 + $0x28] sm:$0xff]
        %v1745 = vld [vmem:[%s1710 + $0x30] sm:$0xff]
        %v1746 = vld [vmem:[%s1710 + $0x38] sm:$0xff]
        %v1747 = vpack.c.bf16 %v1740, %v1739
        %v1748 = vpack.c.bf16 %v1742, %v1741
        %v1749 = vpack.c.bf16 %v1744, %v1743
        %v1750 = vpack.c.bf16 %v1746, %v1745
        %s1751 = scalar_lea.vmem %s6, 32
        %v1752 = vld [vmem:[%s1751] sm:$0xf]
        %v1753 = vld [vmem:[%s1751 + $0x4] sm:$0xf]
        %v1754 = vld [vmem:[%s1751 + $0x8] sm:$0xf]
        %v1755 = vld [vmem:[%s1751 + $0xc] sm:$0xf]
        %v1756 = vld [vmem:[%s1751 + $0x10] sm:$0xf]
        %v1757 = vld [vmem:[%s1751 + $0x14] sm:$0xf]
        %v1758 = vld [vmem:[%s1751 + $0x18] sm:$0xf]
        %v1759 = vld [vmem:[%s1751 + $0x1c] sm:$0xf]
        %v1768 = vunpack.c.l.b16 %v1752
        %v1769 = vunpack.c.l.b16 %v1753
        %v1770 = vunpack.c.l.b16 %v1754
        %v1771 = vunpack.c.l.b16 %v1755
        %v1772 = vunpack.c.l.b16 %v1756
        %v1773 = vunpack.c.l.b16 %v1757
        %v1774 = vunpack.c.l.b16 %v1758
        %v1775 = vunpack.c.l.b16 %v1759
        %v1776 = vpack.c.b16 %v1769, %v1768
        %v1777 = vpack.c.b16 %v1771, %v1770
        %v1778 = vpack.c.b16 %v1773, %v1772
        %v1779 = vpack.c.b16 %v1775, %v1774
        %v1785 = vsel %vm551, %v1747, 0
        %v1788 = vsel %vm551, %v1748, 0
        %v1791 = vsel %vm551, %v1749, 0
        %v1794 = vsel %vm551, %v1750, 0
        %1796 = vmatpush.bf16.msra.mxu0 0
        %1797 = vmatpush.bf16.msra.mxu0 0
        %1798 = vmatpush.bf16.msra.mxu0 0
        %1799 = vmatpush.bf16.msra.mxu0 0
        %1800 = vmatpush.bf16.msra.mxu0 %v1779
        %1801 = vmatpush.bf16.msra.mxu0 %v1778
        %1802 = vmatpush.bf16.msra.mxu0 %v1777
        %1803 = vmatpush.bf16.msra.mxu0 %v1776
        %1804 = vmatmul.bf16.gmra.mxu0 %v1785
        %v1805 = vpop.f32.mrf.mxu0
        %v1806 = vadd.f32 0.0, %v1805
        %v1807 = vpop.f32.mrf.mxu0
        %v1808 = vadd.f32 0.0, %v1807
        %1809 = vmatmul.bf16.gmra.mxu0 %v1788
        %v1810 = vpop.f32.mrf.mxu0
        %v1811 = vadd.f32 0.0, %v1810
        %v1812 = vpop.f32.mrf.mxu0
        %v1813 = vadd.f32 0.0, %v1812
        %1814 = vmatmul.bf16.gmra.mxu0 %v1791
        %v1815 = vpop.f32.mrf.mxu0
        %v1816 = vadd.f32 0.0, %v1815
        %v1817 = vpop.f32.mrf.mxu0
        %v1818 = vadd.f32 0.0, %v1817
        %1819 = vmatmul.bf16.gmra.mxu0 %v1794
        %v1820 = vpop.f32.mrf.mxu0
        %v1821 = vadd.f32 0.0, %v1820
        %v1822 = vpop.f32.mrf.mxu0
        %v1823 = vadd.f32 0.0, %v1822
        %1824 = vdwg.mxu0
        %v1833 = vunpack.c.l.b16 %v1731
        %v1834 = vunpack.c.l.b16 %v1732
        %v1835 = vunpack.c.l.b16 %v1733
        %v1836 = vunpack.c.l.b16 %v1734
        %v1837 = vunpack.c.l.b16 %v1735
        %v1838 = vunpack.c.l.b16 %v1736
        %v1839 = vunpack.c.l.b16 %v1737
        %v1840 = vunpack.c.l.b16 %v1738
        %v1841 = vpack.c.b16 %v1834, %v1833
        %v1842 = vpack.c.b16 %v1836, %v1835
        %v1843 = vpack.c.b16 %v1838, %v1837
        %v1844 = vpack.c.b16 %v1840, %v1839
        %v1850 = vsel %vm551, %v1727, 0
        %v1853 = vsel %vm551, %v1728, 0
        %v1856 = vsel %vm551, %v1729, 0
        %v1859 = vsel %vm551, %v1730, 0
        %1861 = vmatpush.bf16.msra.mxu0 0
        %1862 = vmatpush.bf16.msra.mxu0 0
        %1863 = vmatpush.bf16.msra.mxu0 0
        %1864 = vmatpush.bf16.msra.mxu0 0
        %1865 = vmatpush.bf16.msra.mxu0 %v1844
        %1866 = vmatpush.bf16.msra.mxu0 %v1843
        %1867 = vmatpush.bf16.msra.mxu0 %v1842
        %1868 = vmatpush.bf16.msra.mxu0 %v1841
        %1869 = vmatmul.bf16.gmra.mxu0 %v1850
        %v1870 = vpop.f32.mrf.mxu0
        %v1871 = vadd.f32 %v1806, %v1870
        %v1872 = vpop.f32.mrf.mxu0
        %v1873 = vadd.f32 %v1808, %v1872
        %1874 = vmatmul.bf16.gmra.mxu0 %v1853
        %v1875 = vpop.f32.mrf.mxu0
        %v1876 = vadd.f32 %v1811, %v1875
        %v1877 = vpop.f32.mrf.mxu0
        %v1878 = vadd.f32 %v1813, %v1877
        %1879 = vmatmul.bf16.gmra.mxu0 %v1856
        %v1880 = vpop.f32.mrf.mxu0
        %v1881 = vadd.f32 %v1816, %v1880
        %v1882 = vpop.f32.mrf.mxu0
        %v1883 = vadd.f32 %v1818, %v1882
        %1884 = vmatmul.bf16.gmra.mxu0 %v1859
        %v1885 = vpop.f32.mrf.mxu0
        %v1886 = vadd.f32 %v1821, %v1885
        %v1887 = vpop.f32.mrf.mxu0
        %v1888 = vadd.f32 %v1823, %v1887
        %1889 = vdwg.mxu0
        %s1890 = scalar_lea.vmem [#allocation4], 16
        %v1891 = vld [vmem:[%s1890] sm:$0xff]
        %v1892 = vld [vmem:[%s1890 + $0x8] sm:$0xff]
        %v1893 = vld [vmem:[%s1890 + $0x10] sm:$0xff]
        %v1894 = vld [vmem:[%s1890 + $0x18] sm:$0xff]
        %v1895 = vld [vmem:[%s1890 + $0x20] sm:$0xff]
        %v1896 = vld [vmem:[%s1890 + $0x28] sm:$0xff]
        %v1897 = vld [vmem:[%s1890 + $0x30] sm:$0xff]
        %v1898 = vld [vmem:[%s1890 + $0x38] sm:$0xff]
        %v1899 = vpack.c.bf16 %v1892, %v1891
        %v1900 = vpack.c.bf16 %v1894, %v1893
        %v1901 = vpack.c.bf16 %v1896, %v1895
        %v1902 = vpack.c.bf16 %v1898, %v1897
        %s1903 = scalar_lea.vmem %s6, 64
        %v1904 = vld [vmem:[%s1903] sm:$0xf]
        %v1905 = vld [vmem:[%s1903 + $0x4] sm:$0xf]
        %v1906 = vld [vmem:[%s1903 + $0x8] sm:$0xf]
        %v1907 = vld [vmem:[%s1903 + $0xc] sm:$0xf]
        %v1908 = vld [vmem:[%s1903 + $0x10] sm:$0xf]
        %v1909 = vld [vmem:[%s1903 + $0x14] sm:$0xf]
        %v1910 = vld [vmem:[%s1903 + $0x18] sm:$0xf]
        %v1911 = vld [vmem:[%s1903 + $0x1c] sm:$0xf]
        %v1920 = vunpack.c.l.b16 %v1904
        %v1921 = vunpack.c.l.b16 %v1905
        %v1922 = vunpack.c.l.b16 %v1906
        %v1923 = vunpack.c.l.b16 %v1907
        %v1924 = vunpack.c.l.b16 %v1908
        %v1925 = vunpack.c.l.b16 %v1909
        %v1926 = vunpack.c.l.b16 %v1910
        %v1927 = vunpack.c.l.b16 %v1911
        %v1928 = vpack.c.b16 %v1921, %v1920
        %v1929 = vpack.c.b16 %v1923, %v1922
        %v1930 = vpack.c.b16 %v1925, %v1924
        %v1931 = vpack.c.b16 %v1927, %v1926
        %v1937 = vsel %vm551, %v1899, 0
        %v1940 = vsel %vm551, %v1900, 0
        %v1943 = vsel %vm551, %v1901, 0
        %v1946 = vsel %vm551, %v1902, 0
        %1948 = vmatpush.bf16.msra.mxu0 0
        %1949 = vmatpush.bf16.msra.mxu0 0
        %1950 = vmatpush.bf16.msra.mxu0 0
        %1951 = vmatpush.bf16.msra.mxu0 0
        %1952 = vmatpush.bf16.msra.mxu0 %v1931
        %1953 = vmatpush.bf16.msra.mxu0 %v1930
        %1954 = vmatpush.bf16.msra.mxu0 %v1929
        %1955 = vmatpush.bf16.msra.mxu0 %v1928
        %1956 = vmatmul.bf16.gmra.mxu0 %v1937
        %v1957 = vpop.f32.mrf.mxu0
        %v1958 = vadd.f32 0.0, %v1957
        %v1959 = vpop.f32.mrf.mxu0
        %v1960 = vadd.f32 0.0, %v1959
        %1961 = vmatmul.bf16.gmra.mxu0 %v1940
        %v1962 = vpop.f32.mrf.mxu0
        %v1963 = vadd.f32 0.0, %v1962
        %v1964 = vpop.f32.mrf.mxu0
        %v1965 = vadd.f32 0.0, %v1964
        %1966 = vmatmul.bf16.gmra.mxu0 %v1943
        %v1967 = vpop.f32.mrf.mxu0
        %v1968 = vadd.f32 0.0, %v1967
        %v1969 = vpop.f32.mrf.mxu0
        %v1970 = vadd.f32 0.0, %v1969
        %1971 = vmatmul.bf16.gmra.mxu0 %v1946
        %v1972 = vpop.f32.mrf.mxu0
        %v1973 = vadd.f32 0.0, %v1972
        %v1974 = vpop.f32.mrf.mxu0
        %v1975 = vadd.f32 0.0, %v1974
        %1976 = vdwg.mxu0
        %v1977 = vadd.f32 %v1871, %v1958
        %v1978 = vadd.f32 %v1873, %v1960
        %v1979 = vadd.f32 %v1876, %v1963
        %v1980 = vadd.f32 %v1878, %v1965
        %v1981 = vadd.f32 %v1881, %v1968
        %v1982 = vadd.f32 %v1883, %v1970
        %v1983 = vadd.f32 %v1886, %v1973
        %v1984 = vadd.f32 %v1888, %v1975
        %v1985 = vld [vmem:[%s7] sm:$0x1]
        %v1987 = vperm.slane %v1985, 0
        %v1989 = vadd.f32 %v1977, %v1987
        %v1990 = vadd.f32 %v1978, %v1987
        %v1991 = vadd.f32 %v1979, %v1987
        %v1992 = vadd.f32 %v1980, %v1987
        %v1993 = vadd.f32 %v1981, %v1987
        %v1994 = vadd.f32 %v1982, %v1987
        %v1995 = vadd.f32 %v1983, %v1987
        %v1996 = vadd.f32 %v1984, %v1987
        %v1997 = vmax.f32 %v1989, 0.0
        %v1998 = vmax.f32 %v1990, 0.0
        %v1999 = vmax.f32 %v1991, 0.0
        %v2000 = vmax.f32 %v1992, 0.0
        %v2001 = vmax.f32 %v1993, 0.0
        %v2002 = vmax.f32 %v1994, 0.0
        %v2003 = vmax.f32 %v1995, 0.0
        %v2004 = vmax.f32 %v1996, 0.0
        %2005 = vst [vmem:[#allocation5] sm:$0xff] 0.0
        %s2006 = scalar_lea.vmem [#allocation5], 72
        %2007 = vst [vmem:[%s2006] sm:$0xff] 0.0
        %s2008 = scalar_lea.vmem [#allocation5], 8
        %2009 = vst [vmem:[%s2008] sm:$0xff] %v1997
        %2010 = vst [vmem:[%s2008 + $0x8] sm:$0xff] %v1998
        %2011 = vst [vmem:[%s2008 + $0x10] sm:$0xff] %v1999
        %2012 = vst [vmem:[%s2008 + $0x18] sm:$0xff] %v2000
        %2013 = vst [vmem:[%s2008 + $0x20] sm:$0xff] %v2001
        %2014 = vst [vmem:[%s2008 + $0x28] sm:$0xff] %v2002
        %2015 = vst [vmem:[%s2008 + $0x30] sm:$0xff] %v2003
        %2016 = vst [vmem:[%s2008 + $0x38] sm:$0xff] %v2004
        %v2017 = vld [vmem:[#allocation5] sm:$0xff]
        %v2018 = vld [vmem:[#allocation5 + $0x8] sm:$0xff]
        %v2019 = vld [vmem:[#allocation5 + $0x10] sm:$0xff]
        %v2020 = vld [vmem:[#allocation5 + $0x18] sm:$0xff]
        %v2021 = vld [vmem:[#allocation5 + $0x20] sm:$0xff]
        %v2022 = vld [vmem:[#allocation5 + $0x28] sm:$0xff]
        %v2023 = vld [vmem:[#allocation5 + $0x30] sm:$0xff]
        %v2024 = vld [vmem:[#allocation5 + $0x38] sm:$0xff]
        %v2025 = vpack.c.bf16 %v2018, %v2017
        %v2026 = vpack.c.bf16 %v2020, %v2019
        %v2027 = vpack.c.bf16 %v2022, %v2021
        %v2028 = vpack.c.bf16 %v2024, %v2023
        %v2029 = vld [vmem:[%s8] sm:$0xf]
        %v2030 = vld [vmem:[%s8 + $0x4] sm:$0xf]
        %v2031 = vld [vmem:[%s8 + $0x8] sm:$0xf]
        %v2032 = vld [vmem:[%s8 + $0xc] sm:$0xf]
        %v2033 = vld [vmem:[%s8 + $0x10] sm:$0xf]
        %v2034 = vld [vmem:[%s8 + $0x14] sm:$0xf]
        %v2035 = vld [vmem:[%s8 + $0x18] sm:$0xf]
        %v2036 = vld [vmem:[%s8 + $0x1c] sm:$0xf]
        %v2037 = vld [vmem:[%s8 + $0x20] sm:$0xf]
        %v2038 = vld [vmem:[%s8 + $0x24] sm:$0xf]
        %v2039 = vld [vmem:[%s8 + $0x28] sm:$0xf]
        %v2040 = vld [vmem:[%s8 + $0x2c] sm:$0xf]
        %v2041 = vld [vmem:[%s8 + $0x30] sm:$0xf]
        %v2042 = vld [vmem:[%s8 + $0x34] sm:$0xf]
        %v2043 = vld [vmem:[%s8 + $0x38] sm:$0xf]
        %v2044 = vld [vmem:[%s8 + $0x3c] sm:$0xf]
        %v2045 = vld [vmem:[%s2008] sm:$0xff]
        %v2046 = vld [vmem:[%s2008 + $0x8] sm:$0xff]
        %v2047 = vld [vmem:[%s2008 + $0x10] sm:$0xff]
        %v2048 = vld [vmem:[%s2008 + $0x18] sm:$0xff]
        %v2049 = vld [vmem:[%s2008 + $0x20] sm:$0xff]
        %v2050 = vld [vmem:[%s2008 + $0x28] sm:$0xff]
        %v2051 = vld [vmem:[%s2008 + $0x30] sm:$0xff]
        %v2052 = vld [vmem:[%s2008 + $0x38] sm:$0xff]
        %v2053 = vpack.c.bf16 %v2046, %v2045
        %v2054 = vpack.c.bf16 %v2048, %v2047
        %v2055 = vpack.c.bf16 %v2050, %v2049
        %v2056 = vpack.c.bf16 %v2052, %v2051
        %s2057 = scalar_lea.vmem %s8, 64
        %v2058 = vld [vmem:[%s2057] sm:$0xf]
        %v2059 = vld [vmem:[%s2057 + $0x4] sm:$0xf]
        %v2060 = vld [vmem:[%s2057 + $0x8] sm:$0xf]
        %v2061 = vld [vmem:[%s2057 + $0xc] sm:$0xf]
        %v2062 = vld [vmem:[%s2057 + $0x10] sm:$0xf]
        %v2063 = vld [vmem:[%s2057 + $0x14] sm:$0xf]
        %v2064 = vld [vmem:[%s2057 + $0x18] sm:$0xf]
        %v2065 = vld [vmem:[%s2057 + $0x1c] sm:$0xf]
        %v2066 = vld [vmem:[%s2057 + $0x20] sm:$0xf]
        %v2067 = vld [vmem:[%s2057 + $0x24] sm:$0xf]
        %v2068 = vld [vmem:[%s2057 + $0x28] sm:$0xf]
        %v2069 = vld [vmem:[%s2057 + $0x2c] sm:$0xf]
        %v2070 = vld [vmem:[%s2057 + $0x30] sm:$0xf]
        %v2071 = vld [vmem:[%s2057 + $0x34] sm:$0xf]
        %v2072 = vld [vmem:[%s2057 + $0x38] sm:$0xf]
        %v2073 = vld [vmem:[%s2057 + $0x3c] sm:$0xf]
        %v2090 = vunpack.c.l.b16 %v2058
        %v2091 = vunpack.c.l.b16 %v2059
        %v2092 = vunpack.c.l.b16 %v2060
        %v2093 = vunpack.c.l.b16 %v2061
        %v2094 = vunpack.c.l.b16 %v2062
        %v2095 = vunpack.c.l.b16 %v2063
        %v2096 = vunpack.c.l.b16 %v2064
        %v2097 = vunpack.c.l.b16 %v2065
        %v2098 = vunpack.c.l.b16 %v2066
        %v2099 = vunpack.c.l.b16 %v2067
        %v2100 = vunpack.c.l.b16 %v2068
        %v2101 = vunpack.c.l.b16 %v2069
        %v2102 = vunpack.c.l.b16 %v2070
        %v2103 = vunpack.c.l.b16 %v2071
        %v2104 = vunpack.c.l.b16 %v2072
        %v2105 = vunpack.c.l.b16 %v2073
        %v2106 = vpack.c.b16 %v2091, %v2090
        %v2107 = vpack.c.b16 %v2093, %v2092
        %v2108 = vpack.c.b16 %v2095, %v2094
        %v2109 = vpack.c.b16 %v2097, %v2096
        %v2110 = vpack.c.b16 %v2099, %v2098
        %v2111 = vpack.c.b16 %v2101, %v2100
        %v2112 = vpack.c.b16 %v2103, %v2102
        %v2113 = vpack.c.b16 %v2105, %v2104
        %2122 = vmatpush.bf16.msra.mxu0 %v2113
        %2123 = vmatpush.bf16.msra.mxu0 %v2112
        %2124 = vmatpush.bf16.msra.mxu0 %v2111
        %2125 = vmatpush.bf16.msra.mxu0 %v2110
        %2126 = vmatpush.bf16.msra.mxu0 %v2109
        %2127 = vmatpush.bf16.msra.mxu0 %v2108
        %2128 = vmatpush.bf16.msra.mxu0 %v2107
        %2129 = vmatpush.bf16.msra.mxu0 %v2106
        %2130 = vmatmul.bf16.gmra.mxu0 %v2053
        %v2131 = vpop.f32.mrf.mxu0
        %v2132 = vadd.f32 0.0, %v2131
        %v2133 = vpop.f32.mrf.mxu0
        %v2134 = vadd.f32 0.0, %v2133
        %2135 = vmatmul.bf16.gmra.mxu0 %v2054
        %v2136 = vpop.f32.mrf.mxu0
        %v2137 = vadd.f32 0.0, %v2136
        %v2138 = vpop.f32.mrf.mxu0
        %v2139 = vadd.f32 0.0, %v2138
        %2140 = vmatmul.bf16.gmra.mxu0 %v2055
        %v2141 = vpop.f32.mrf.mxu0
        %v2142 = vadd.f32 0.0, %v2141
        %v2143 = vpop.f32.mrf.mxu0
        %v2144 = vadd.f32 0.0, %v2143
        %2145 = vmatmul.bf16.gmra.mxu0 %v2056
        %v2146 = vpop.f32.mrf.mxu0
        %v2147 = vadd.f32 0.0, %v2146
        %v2148 = vpop.f32.mrf.mxu0
        %v2149 = vadd.f32 0.0, %v2148
        %2150 = vdwg.mxu0
        %v2167 = vunpack.c.l.b16 %v2029
        %v2168 = vunpack.c.l.b16 %v2030
        %v2169 = vunpack.c.l.b16 %v2031
        %v2170 = vunpack.c.l.b16 %v2032
        %v2171 = vunpack.c.l.b16 %v2033
        %v2172 = vunpack.c.l.b16 %v2034
        %v2173 = vunpack.c.l.b16 %v2035
        %v2174 = vunpack.c.l.b16 %v2036
        %v2175 = vunpack.c.l.b16 %v2037
        %v2176 = vunpack.c.l.b16 %v2038
        %v2177 = vunpack.c.l.b16 %v2039
        %v2178 = vunpack.c.l.b16 %v2040
        %v2179 = vunpack.c.l.b16 %v2041
        %v2180 = vunpack.c.l.b16 %v2042
        %v2181 = vunpack.c.l.b16 %v2043
        %v2182 = vunpack.c.l.b16 %v2044
        %v2183 = vpack.c.b16 %v2168, %v2167
        %v2184 = vpack.c.b16 %v2170, %v2169
        %v2185 = vpack.c.b16 %v2172, %v2171
        %v2186 = vpack.c.b16 %v2174, %v2173
        %v2187 = vpack.c.b16 %v2176, %v2175
        %v2188 = vpack.c.b16 %v2178, %v2177
        %v2189 = vpack.c.b16 %v2180, %v2179
        %v2190 = vpack.c.b16 %v2182, %v2181
        %2199 = vmatpush.bf16.msra.mxu0 %v2190
        %2200 = vmatpush.bf16.msra.mxu0 %v2189
        %2201 = vmatpush.bf16.msra.mxu0 %v2188
        %2202 = vmatpush.bf16.msra.mxu0 %v2187
        %2203 = vmatpush.bf16.msra.mxu0 %v2186
        %2204 = vmatpush.bf16.msra.mxu0 %v2185
        %2205 = vmatpush.bf16.msra.mxu0 %v2184
        %2206 = vmatpush.bf16.msra.mxu0 %v2183
        %2207 = vmatmul.bf16.gmra.mxu0 %v2025
        %v2208 = vpop.f32.mrf.mxu0
        %v2209 = vadd.f32 %v2132, %v2208
        %v2210 = vpop.f32.mrf.mxu0
        %v2211 = vadd.f32 %v2134, %v2210
        %2212 = vmatmul.bf16.gmra.mxu0 %v2026
        %v2213 = vpop.f32.mrf.mxu0
        %v2214 = vadd.f32 %v2137, %v2213
        %v2215 = vpop.f32.mrf.mxu0
        %v2216 = vadd.f32 %v2139, %v2215
        %2217 = vmatmul.bf16.gmra.mxu0 %v2027
        %v2218 = vpop.f32.mrf.mxu0
        %v2219 = vadd.f32 %v2142, %v2218
        %v2220 = vpop.f32.mrf.mxu0
        %v2221 = vadd.f32 %v2144, %v2220
        %2222 = vmatmul.bf16.gmra.mxu0 %v2028
        %v2223 = vpop.f32.mrf.mxu0
        %v2224 = vadd.f32 %v2147, %v2223
        %v2225 = vpop.f32.mrf.mxu0
        %v2226 = vadd.f32 %v2149, %v2225
        %2227 = vdwg.mxu0
        %s2228 = scalar_lea.vmem [#allocation5], 16
        %v2229 = vld [vmem:[%s2228] sm:$0xff]
        %v2230 = vld [vmem:[%s2228 + $0x8] sm:$0xff]
        %v2231 = vld [vmem:[%s2228 + $0x10] sm:$0xff]
        %v2232 = vld [vmem:[%s2228 + $0x18] sm:$0xff]
        %v2233 = vld [vmem:[%s2228 + $0x20] sm:$0xff]
        %v2234 = vld [vmem:[%s2228 + $0x28] sm:$0xff]
        %v2235 = vld [vmem:[%s2228 + $0x30] sm:$0xff]
        %v2236 = vld [vmem:[%s2228 + $0x38] sm:$0xff]
        %v2237 = vpack.c.bf16 %v2230, %v2229
        %v2238 = vpack.c.bf16 %v2232, %v2231
        %v2239 = vpack.c.bf16 %v2234, %v2233
        %v2240 = vpack.c.bf16 %v2236, %v2235
        %s2241 = scalar_lea.vmem %s8, 128
        %v2242 = vld [vmem:[%s2241] sm:$0xf]
        %v2243 = vld [vmem:[%s2241 + $0x4] sm:$0xf]
        %v2244 = vld [vmem:[%s2241 + $0x8] sm:$0xf]
        %v2245 = vld [vmem:[%s2241 + $0xc] sm:$0xf]
        %v2246 = vld [vmem:[%s2241 + $0x10] sm:$0xf]
        %v2247 = vld [vmem:[%s2241 + $0x14] sm:$0xf]
        %v2248 = vld [vmem:[%s2241 + $0x18] sm:$0xf]
        %v2249 = vld [vmem:[%s2241 + $0x1c] sm:$0xf]
        %v2250 = vld [vmem:[%s2241 + $0x20] sm:$0xf]
        %v2251 = vld [vmem:[%s2241 + $0x24] sm:$0xf]
        %v2252 = vld [vmem:[%s2241 + $0x28] sm:$0xf]
        %v2253 = vld [vmem:[%s2241 + $0x2c] sm:$0xf]
        %v2254 = vld [vmem:[%s2241 + $0x30] sm:$0xf]
        %v2255 = vld [vmem:[%s2241 + $0x34] sm:$0xf]
        %v2256 = vld [vmem:[%s2241 + $0x38] sm:$0xf]
        %v2257 = vld [vmem:[%s2241 + $0x3c] sm:$0xf]
        %v2274 = vunpack.c.l.b16 %v2242
        %v2275 = vunpack.c.l.b16 %v2243
        %v2276 = vunpack.c.l.b16 %v2244
        %v2277 = vunpack.c.l.b16 %v2245
        %v2278 = vunpack.c.l.b16 %v2246
        %v2279 = vunpack.c.l.b16 %v2247
        %v2280 = vunpack.c.l.b16 %v2248
        %v2281 = vunpack.c.l.b16 %v2249
        %v2282 = vunpack.c.l.b16 %v2250
        %v2283 = vunpack.c.l.b16 %v2251
        %v2284 = vunpack.c.l.b16 %v2252
        %v2285 = vunpack.c.l.b16 %v2253
        %v2286 = vunpack.c.l.b16 %v2254
        %v2287 = vunpack.c.l.b16 %v2255
        %v2288 = vunpack.c.l.b16 %v2256
        %v2289 = vunpack.c.l.b16 %v2257
        %v2290 = vpack.c.b16 %v2275, %v2274
        %v2291 = vpack.c.b16 %v2277, %v2276
        %v2292 = vpack.c.b16 %v2279, %v2278
        %v2293 = vpack.c.b16 %v2281, %v2280
        %v2294 = vpack.c.b16 %v2283, %v2282
        %v2295 = vpack.c.b16 %v2285, %v2284
        %v2296 = vpack.c.b16 %v2287, %v2286
        %v2297 = vpack.c.b16 %v2289, %v2288
        %2306 = vmatpush.bf16.msra.mxu0 %v2297
        %2307 = vmatpush.bf16.msra.mxu0 %v2296
        %2308 = vmatpush.bf16.msra.mxu0 %v2295
        %2309 = vmatpush.bf16.msra.mxu0 %v2294
        %2310 = vmatpush.bf16.msra.mxu0 %v2293
        %2311 = vmatpush.bf16.msra.mxu0 %v2292
        %2312 = vmatpush.bf16.msra.mxu0 %v2291
        %2313 = vmatpush.bf16.msra.mxu0 %v2290
        %2314 = vmatmul.bf16.gmra.mxu0 %v2237
        %v2315 = vpop.f32.mrf.mxu0
        %v2316 = vadd.f32 0.0, %v2315
        %v2317 = vpop.f32.mrf.mxu0
        %v2318 = vadd.f32 0.0, %v2317
        %2319 = vmatmul.bf16.gmra.mxu0 %v2238
        %v2320 = vpop.f32.mrf.mxu0
        %v2321 = vadd.f32 0.0, %v2320
        %v2322 = vpop.f32.mrf.mxu0
        %v2323 = vadd.f32 0.0, %v2322
        %2324 = vmatmul.bf16.gmra.mxu0 %v2239
        %v2325 = vpop.f32.mrf.mxu0
        %v2326 = vadd.f32 0.0, %v2325
        %v2327 = vpop.f32.mrf.mxu0
        %v2328 = vadd.f32 0.0, %v2327
        %2329 = vmatmul.bf16.gmra.mxu0 %v2240
        %v2330 = vpop.f32.mrf.mxu0
        %v2331 = vadd.f32 0.0, %v2330
        %v2332 = vpop.f32.mrf.mxu0
        %v2333 = vadd.f32 0.0, %v2332
        %2334 = vdwg.mxu0
        %v2335 = vadd.f32 %v2209, %v2316
        %v2336 = vadd.f32 %v2211, %v2318
        %v2337 = vadd.f32 %v2214, %v2321
        %v2338 = vadd.f32 %v2216, %v2323
        %v2339 = vadd.f32 %v2219, %v2326
        %v2340 = vadd.f32 %v2221, %v2328
        %v2341 = vadd.f32 %v2224, %v2331
        %v2342 = vadd.f32 %v2226, %v2333
        %v2343 = vld [vmem:[%s9] sm:$0x1]
        %v2345 = vperm.slane %v2343, 0
        %v2347 = vadd.f32 %v2335, %v2345
        %v2348 = vadd.f32 %v2336, %v2345
        %v2349 = vadd.f32 %v2337, %v2345
        %v2350 = vadd.f32 %v2338, %v2345
        %v2351 = vadd.f32 %v2339, %v2345
        %v2352 = vadd.f32 %v2340, %v2345
        %v2353 = vadd.f32 %v2341, %v2345
        %v2354 = vadd.f32 %v2342, %v2345
        %v2355 = vmax.f32 %v2347, 0.0
        %v2356 = vmax.f32 %v2348, 0.0
        %v2357 = vmax.f32 %v2349, 0.0
        %v2358 = vmax.f32 %v2350, 0.0
        %v2359 = vmax.f32 %v2351, 0.0
        %v2360 = vmax.f32 %v2352, 0.0
        %v2361 = vmax.f32 %v2353, 0.0
        %v2362 = vmax.f32 %v2354, 0.0
        %v2363 = vmax.f32 %v2355, %v2356
        %v2364 = vmax.f32 %v2357, %v2358
        %v2365 = vmax.f32 %v2359, %v2360
        %v2366 = vmax.f32 %v2361, %v2362
        %v2367 = vpack.c.bf16 %v2364, %v2363
        %v2368 = vpack.c.bf16 %v2366, %v2365
        %v2369 = vld [vmem:[%s10] sm:$0xf]
        %v2370 = vld [vmem:[%s10 + $0x4] sm:$0xf]
        %v2371 = vld [vmem:[%s10 + $0x8] sm:$0xf]
        %v2372 = vld [vmem:[%s10 + $0xc] sm:$0xf]
        %v2373 = vld [vmem:[%s10 + $0x10] sm:$0xf]
        %v2374 = vld [vmem:[%s10 + $0x14] sm:$0xf]
        %v2375 = vld [vmem:[%s10 + $0x18] sm:$0xf]
        %v2376 = vld [vmem:[%s10 + $0x1c] sm:$0xf]
        %v2377 = vld [vmem:[%s10 + $0x20] sm:$0xf]
        %v2378 = vld [vmem:[%s10 + $0x24] sm:$0xf]
        %v2379 = vld [vmem:[%s10 + $0x28] sm:$0xf]
        %v2380 = vld [vmem:[%s10 + $0x2c] sm:$0xf]
        %v2381 = vld [vmem:[%s10 + $0x30] sm:$0xf]
        %v2382 = vld [vmem:[%s10 + $0x34] sm:$0xf]
        %v2383 = vld [vmem:[%s10 + $0x38] sm:$0xf]
        %v2384 = vld [vmem:[%s10 + $0x3c] sm:$0xf]
        %v2401 = vunpack.c.l.b16 %v2369
        %v2402 = vunpack.c.l.b16 %v2370
        %v2403 = vunpack.c.l.b16 %v2371
        %v2404 = vunpack.c.l.b16 %v2372
        %v2405 = vunpack.c.l.b16 %v2373
        %v2406 = vunpack.c.l.b16 %v2374
        %v2407 = vunpack.c.l.b16 %v2375
        %v2408 = vunpack.c.l.b16 %v2376
        %v2409 = vunpack.c.l.b16 %v2377
        %v2410 = vunpack.c.l.b16 %v2378
        %v2411 = vunpack.c.l.b16 %v2379
        %v2412 = vunpack.c.l.b16 %v2380
        %v2413 = vunpack.c.l.b16 %v2381
        %v2414 = vunpack.c.l.b16 %v2382
        %v2415 = vunpack.c.l.b16 %v2383
        %v2416 = vunpack.c.l.b16 %v2384
        %v2417 = vpack.c.b16 %v2402, %v2401
        %v2418 = vpack.c.b16 %v2404, %v2403
        %v2419 = vpack.c.b16 %v2406, %v2405
        %v2420 = vpack.c.b16 %v2408, %v2407
        %v2421 = vpack.c.b16 %v2410, %v2409
        %v2422 = vpack.c.b16 %v2412, %v2411
        %v2423 = vpack.c.b16 %v2414, %v2413
        %v2424 = vpack.c.b16 %v2416, %v2415
        %2433 = vmatpush.bf16.msra.mxu0 %v2424
        %2434 = vmatpush.bf16.msra.mxu0 %v2423
        %2435 = vmatpush.bf16.msra.mxu0 %v2422
        %2436 = vmatpush.bf16.msra.mxu0 %v2421
        %2437 = vmatpush.bf16.msra.mxu0 %v2420
        %2438 = vmatpush.bf16.msra.mxu0 %v2419
        %2439 = vmatpush.bf16.msra.mxu0 %v2418
        %2440 = vmatpush.bf16.msra.mxu0 %v2417
        %2441 = vmatmul.bf16.gmra.mxu0 %v2367
        %v2442 = vpop.f32.mrf.mxu0
        %v2443 = vadd.f32 0.0, %v2442
        %v2444 = vpop.f32.mrf.mxu0
        %v2445 = vadd.f32 0.0, %v2444
        %2446 = vmatmul.bf16.gmra.mxu0 %v2368
        %v2447 = vpop.f32.mrf.mxu0
        %v2448 = vadd.f32 0.0, %v2447
        %v2449 = vpop.f32.mrf.mxu0
        %v2450 = vadd.f32 0.0, %v2449
        %2451 = vdwg.mxu0
        %s2452 = scalar_lea.vmem %s10, 64
        %v2453 = vld [vmem:[%s2452] sm:$0xf]
        %v2454 = vld [vmem:[%s2452 + $0x4] sm:$0xf]
        %v2455 = vld [vmem:[%s2452 + $0x8] sm:$0xf]
        %v2456 = vld [vmem:[%s2452 + $0xc] sm:$0xf]
        %v2457 = vld [vmem:[%s2452 + $0x10] sm:$0xf]
        %v2458 = vld [vmem:[%s2452 + $0x14] sm:$0xf]
        %v2459 = vld [vmem:[%s2452 + $0x18] sm:$0xf]
        %v2460 = vld [vmem:[%s2452 + $0x1c] sm:$0xf]
        %v2461 = vld [vmem:[%s2452 + $0x20] sm:$0xf]
        %v2462 = vld [vmem:[%s2452 + $0x24] sm:$0xf]
        %v2463 = vld [vmem:[%s2452 + $0x28] sm:$0xf]
        %v2464 = vld [vmem:[%s2452 + $0x2c] sm:$0xf]
        %v2465 = vld [vmem:[%s2452 + $0x30] sm:$0xf]
        %v2466 = vld [vmem:[%s2452 + $0x34] sm:$0xf]
        %v2467 = vld [vmem:[%s2452 + $0x38] sm:$0xf]
        %v2468 = vld [vmem:[%s2452 + $0x3c] sm:$0xf]
        %v2485 = vunpack.c.l.b16 %v2453
        %v2486 = vunpack.c.l.b16 %v2454
        %v2487 = vunpack.c.l.b16 %v2455
        %v2488 = vunpack.c.l.b16 %v2456
        %v2489 = vunpack.c.l.b16 %v2457
        %v2490 = vunpack.c.l.b16 %v2458
        %v2491 = vunpack.c.l.b16 %v2459
        %v2492 = vunpack.c.l.b16 %v2460
        %v2493 = vunpack.c.l.b16 %v2461
        %v2494 = vunpack.c.l.b16 %v2462
        %v2495 = vunpack.c.l.b16 %v2463
        %v2496 = vunpack.c.l.b16 %v2464
        %v2497 = vunpack.c.l.b16 %v2465
        %v2498 = vunpack.c.l.b16 %v2466
        %v2499 = vunpack.c.l.b16 %v2467
        %v2500 = vunpack.c.l.b16 %v2468
        %v2501 = vpack.c.b16 %v2486, %v2485
        %v2502 = vpack.c.b16 %v2488, %v2487
        %v2503 = vpack.c.b16 %v2490, %v2489
        %v2504 = vpack.c.b16 %v2492, %v2491
        %v2505 = vpack.c.b16 %v2494, %v2493
        %v2506 = vpack.c.b16 %v2496, %v2495
        %v2507 = vpack.c.b16 %v2498, %v2497
        %v2508 = vpack.c.b16 %v2500, %v2499
        %2517 = vmatpush.bf16.msra.mxu0 %v2508
        %2518 = vmatpush.bf16.msra.mxu0 %v2507
        %2519 = vmatpush.bf16.msra.mxu0 %v2506
        %2520 = vmatpush.bf16.msra.mxu0 %v2505
        %2521 = vmatpush.bf16.msra.mxu0 %v2504
        %2522 = vmatpush.bf16.msra.mxu0 %v2503
        %2523 = vmatpush.bf16.msra.mxu0 %v2502
        %2524 = vmatpush.bf16.msra.mxu0 %v2501
        %2525 = vmatmul.bf16.gmra.mxu0 %v2367
        %v2526 = vpop.f32.mrf.mxu0
        %v2527 = vadd.f32 0.0, %v2526
        %v2528 = vpop.f32.mrf.mxu0
        %v2529 = vadd.f32 0.0, %v2528
        %2530 = vmatmul.bf16.gmra.mxu0 %v2368
        %v2531 = vpop.f32.mrf.mxu0
        %v2532 = vadd.f32 0.0, %v2531
        %v2533 = vpop.f32.mrf.mxu0
        %v2534 = vadd.f32 0.0, %v2533
        %2535 = vdwg.mxu0
        %v2536 = vmax.f32 %v2443, %v2527
        %v2537 = vmax.f32 %v2445, %v2529
        %v2538 = vmax.f32 %v2448, %v2532
        %v2539 = vmax.f32 %v2450, %v2534
        %v2540 = vpack.c.bf16 %v2536, %v2536
        %v2541 = vld [vmem:[%s11] sm:$0xf]
        %v2542 = vld [vmem:[%s11 + $0x4] sm:$0xf]
        %v2543 = vld [vmem:[%s11 + $0x8] sm:$0xf]
        %v2544 = vld [vmem:[%s11 + $0xc] sm:$0xf]
        %v2545 = vld [vmem:[%s11 + $0x10] sm:$0xf]
        %v2546 = vld [vmem:[%s11 + $0x14] sm:$0xf]
        %v2547 = vld [vmem:[%s11 + $0x18] sm:$0xf]
        %v2548 = vld [vmem:[%s11 + $0x1c] sm:$0xf]
        %v2549 = vpack.c.bf16 %v2537, %v2537
        %s2550 = scalar_lea.vmem %s11, 32
        %v2551 = vld [vmem:[%s2550] sm:$0xf]
        %v2552 = vld [vmem:[%s2550 + $0x4] sm:$0xf]
        %v2553 = vld [vmem:[%s2550 + $0x8] sm:$0xf]
        %v2554 = vld [vmem:[%s2550 + $0xc] sm:$0xf]
        %v2555 = vld [vmem:[%s2550 + $0x10] sm:$0xf]
        %v2556 = vld [vmem:[%s2550 + $0x14] sm:$0xf]
        %v2557 = vld [vmem:[%s2550 + $0x18] sm:$0xf]
        %v2558 = vld [vmem:[%s2550 + $0x1c] sm:$0xf]
        %v2567 = vunpack.c.l.b16 %v2551
        %v2568 = vunpack.c.l.b16 %v2552
        %v2569 = vunpack.c.l.b16 %v2553
        %v2570 = vunpack.c.l.b16 %v2554
        %v2571 = vunpack.c.l.b16 %v2555
        %v2572 = vunpack.c.l.b16 %v2556
        %v2573 = vunpack.c.l.b16 %v2557
        %v2574 = vunpack.c.l.b16 %v2558
        %v2575 = vpack.c.b16 %v2568, %v2567
        %v2576 = vpack.c.b16 %v2570, %v2569
        %v2577 = vpack.c.b16 %v2572, %v2571
        %v2578 = vpack.c.b16 %v2574, %v2573
        %v2584 = vsel %vm551, %v2549, 0
        %2586 = vmatpush.bf16.msra.mxu0 0
        %2587 = vmatpush.bf16.msra.mxu0 0
        %2588 = vmatpush.bf16.msra.mxu0 0
        %2589 = vmatpush.bf16.msra.mxu0 0
        %2590 = vmatpush.bf16.msra.mxu0 %v2578
        %2591 = vmatpush.bf16.msra.mxu0 %v2577
        %2592 = vmatpush.bf16.msra.mxu0 %v2576
        %2593 = vmatpush.bf16.msra.mxu0 %v2575
        %2594 = vmatmul.bf16.gmra.mxu0 %v2584
        %v2595 = vpop.f32.mrf.mxu0
        %v2596 = vadd.f32 0.0, %v2595
        %v2597 = vpop.f32.mrf.mxu0
        %2598 = vdwg.mxu0
        %v2607 = vunpack.c.l.b16 %v2541
        %v2608 = vunpack.c.l.b16 %v2542
        %v2609 = vunpack.c.l.b16 %v2543
        %v2610 = vunpack.c.l.b16 %v2544
        %v2611 = vunpack.c.l.b16 %v2545
        %v2612 = vunpack.c.l.b16 %v2546
        %v2613 = vunpack.c.l.b16 %v2547
        %v2614 = vunpack.c.l.b16 %v2548
        %v2615 = vpack.c.b16 %v2608, %v2607
        %v2616 = vpack.c.b16 %v2610, %v2609
        %v2617 = vpack.c.b16 %v2612, %v2611
        %v2618 = vpack.c.b16 %v2614, %v2613
        %v2624 = vsel %vm551, %v2540, 0
        %2626 = vmatpush.bf16.msra.mxu0 0
        %2627 = vmatpush.bf16.msra.mxu0 0
        %2628 = vmatpush.bf16.msra.mxu0 0
        %2629 = vmatpush.bf16.msra.mxu0 0
        %2630 = vmatpush.bf16.msra.mxu0 %v2618
        %2631 = vmatpush.bf16.msra.mxu0 %v2617
        %2632 = vmatpush.bf16.msra.mxu0 %v2616
        %2633 = vmatpush.bf16.msra.mxu0 %v2615
        %2634 = vmatmul.bf16.gmra.mxu0 %v2624
        %v2635 = vpop.f32.mrf.mxu0
        %v2636 = vadd.f32 %v2596, %v2635
        %v2637 = vpop.f32.mrf.mxu0
        %2638 = vdwg.mxu0
        %v2639 = vpack.c.bf16 %v2538, %v2538
        %s2640 = scalar_lea.vmem %s11, 64
        %v2641 = vld [vmem:[%s2640] sm:$0xf]
        %v2642 = vld [vmem:[%s2640 + $0x4] sm:$0xf]
        %v2643 = vld [vmem:[%s2640 + $0x8] sm:$0xf]
        %v2644 = vld [vmem:[%s2640 + $0xc] sm:$0xf]
        %v2645 = vld [vmem:[%s2640 + $0x10] sm:$0xf]
        %v2646 = vld [vmem:[%s2640 + $0x14] sm:$0xf]
        %v2647 = vld [vmem:[%s2640 + $0x18] sm:$0xf]
        %v2648 = vld [vmem:[%s2640 + $0x1c] sm:$0xf]
        %v2657 = vunpack.c.l.b16 %v2641
        %v2658 = vunpack.c.l.b16 %v2642
        %v2659 = vunpack.c.l.b16 %v2643
        %v2660 = vunpack.c.l.b16 %v2644
        %v2661 = vunpack.c.l.b16 %v2645
        %v2662 = vunpack.c.l.b16 %v2646
        %v2663 = vunpack.c.l.b16 %v2647
        %v2664 = vunpack.c.l.b16 %v2648
        %v2665 = vpack.c.b16 %v2658, %v2657
        %v2666 = vpack.c.b16 %v2660, %v2659
        %v2667 = vpack.c.b16 %v2662, %v2661
        %v2668 = vpack.c.b16 %v2664, %v2663
        %v2674 = vsel %vm551, %v2639, 0
        %2676 = vmatpush.bf16.msra.mxu0 0
        %2677 = vmatpush.bf16.msra.mxu0 0
        %2678 = vmatpush.bf16.msra.mxu0 0
        %2679 = vmatpush.bf16.msra.mxu0 0
        %2680 = vmatpush.bf16.msra.mxu0 %v2668
        %2681 = vmatpush.bf16.msra.mxu0 %v2667
        %2682 = vmatpush.bf16.msra.mxu0 %v2666
        %2683 = vmatpush.bf16.msra.mxu0 %v2665
        %2684 = vmatmul.bf16.gmra.mxu0 %v2674
        %v2685 = vpop.f32.mrf.mxu0
        %v2686 = vadd.f32 0.0, %v2685
        %v2687 = vpop.f32.mrf.mxu0
        %2688 = vdwg.mxu0
        %v2689 = vadd.f32 %v2636, %v2686
        %v2690 = vpack.c.bf16 %v2539, %v2539
        %s2691 = scalar_lea.vmem %s11, 96
        %v2692 = vld [vmem:[%s2691] sm:$0xf]
        %v2693 = vld [vmem:[%s2691 + $0x4] sm:$0xf]
        %v2694 = vld [vmem:[%s2691 + $0x8] sm:$0xf]
        %v2695 = vld [vmem:[%s2691 + $0xc] sm:$0xf]
        %v2696 = vld [vmem:[%s2691 + $0x10] sm:$0xf]
        %v2697 = vld [vmem:[%s2691 + $0x14] sm:$0xf]
        %v2698 = vld [vmem:[%s2691 + $0x18] sm:$0xf]
        %v2699 = vld [vmem:[%s2691 + $0x1c] sm:$0xf]
        %v2708 = vunpack.c.l.b16 %v2692
        %v2709 = vunpack.c.l.b16 %v2693
        %v2710 = vunpack.c.l.b16 %v2694
        %v2711 = vunpack.c.l.b16 %v2695
        %v2712 = vunpack.c.l.b16 %v2696
        %v2713 = vunpack.c.l.b16 %v2697
        %v2714 = vunpack.c.l.b16 %v2698
        %v2715 = vunpack.c.l.b16 %v2699
        %v2716 = vpack.c.b16 %v2709, %v2708
        %v2717 = vpack.c.b16 %v2711, %v2710
        %v2718 = vpack.c.b16 %v2713, %v2712
        %v2719 = vpack.c.b16 %v2715, %v2714
        %v2725 = vsel %vm551, %v2690, 0
        %2727 = vmatpush.bf16.msra.mxu0 0
        %2728 = vmatpush.bf16.msra.mxu0 0
        %2729 = vmatpush.bf16.msra.mxu0 0
        %2730 = vmatpush.bf16.msra.mxu0 0
        %2731 = vmatpush.bf16.msra.mxu0 %v2719
        %2732 = vmatpush.bf16.msra.mxu0 %v2718
        %2733 = vmatpush.bf16.msra.mxu0 %v2717
        %2734 = vmatpush.bf16.msra.mxu0 %v2716
        %2735 = vmatmul.bf16.gmra.mxu0 %v2725
        %v2736 = vpop.f32.mrf.mxu0
        %v2737 = vadd.f32 0.0, %v2736
        %v2738 = vpop.f32.mrf.mxu0
        %2739 = vdwg.mxu0
        %v2740 = vadd.f32 %v2689, %v2737
        %v2741 = vld [vmem:[%s12] sm:$0x1]
        %v2743 = vperm.slane %v2741, 0
        %v2745 = vadd.f32 %v2740, %v2743
        %vm2746 = vcmask 130048
        %2747 = vst.msk [vmem:[%s533] sm:$0xff] %vm2746, %v2745
        %s2748 = sand.u32 %s313, 1
        %s2749 = scalar_lea.sflag [#allocation8], %s2748
        %s2750 = sand.u32 %s313, 1
        %s2751 = smul.addr %s2750, 8
        %s2752 = scalar_lea.vmem [#allocation7], %s2751
        // Predicated region
        $region111: #{cae_encoder_forward.1} parent=105 // pred_check
          %p2753 = pneg %p323
        $region112: #{cae_encoder_forward.1} parent=105 // pred_check_branch
          %2755 = sbr.rel (%p2753) target = $region114
        $region113: #{cae_encoder_forward.1} parent=105 // pred_region
          %2757 = vsyncadd %s2749, 0
          %s2758 = smul.addr %s27, 8
          %s2759 = scalar_lea.hbm %s13, %s2758
          %s2761 = sshll.u32 %s2752, 4
          %s2762 = int_to_ptr.vmem [resolvable:$true] %s2761
          %s2763 = sshll.u32 %s2759, 4
          %s2764 = int_to_ptr.hbm [resolvable:$true] %s2763
          %2766 = dma.vmem_to_hbm [thread:$0]  %s2762, 128, %s2764, %s2749
        $region114: #{cae_encoder_forward.1} parent=105 // pred_fallthru
          _
      $region106: #{cae_encoder_forward.1} parent=5 // pred_fallthru
        _
      %p2767 = scmp.le.s32.totalorder 2, %s22
      // Predicated region
      $region115: #{cae_encoder_forward.1} parent=5 // pred_check
        %p2768 = pneg %p2767
      $region116: #{cae_encoder_forward.1} parent=5 // pred_check_branch
        %2770 = sbr.rel (%p2768) target = $region118
      $region117: #{cae_encoder_forward.1} parent=5 // pred_region
        %s2771 = ssub.s32 %s22, 2
        // Predicated region
        $region119: #{cae_encoder_forward.1} parent=117 // pred_check
          %p2772 = pneg %p329
        $region120: #{cae_encoder_forward.1} parent=117 // pred_check_branch
          %2774 = sbr.rel (%p2772) target = $region122
        $region121: #{cae_encoder_forward.1} parent=117 // pred_region
          %s2775 = sand.u32 %s314, 1
          %s2776 = scalar_lea.sflag [#allocation8], %s2775
          %s2777 = sand.u32 %s314, 1
          %s2778 = smul.addr %s2777, 8
          %s2779 = scalar_lea.vmem [#allocation7], %s2778
          %2781 = dma.done %s2776, 128
        $region122: #{cae_encoder_forward.1} parent=117 // pred_fallthru
          _
      $region118: #{cae_encoder_forward.1} parent=5 // pred_fallthru
        _
    $region6: #{cae_encoder_forward.1} parent=1 // loop_footer
      %s26 = sadd.s32 1, %s22
    $region7: #{cae_encoder_forward.1} parent=1 // loop_footer_branch
      %21 = sbr.rel target = $region3
    $region8: #{cae_encoder_forward.1} parent=1 // loop_exit
      _
    %2782 = vsyncpa [#allocation8], 1
    %s2783 = scalar_lea.sflag [#allocation8], 1
    %2784 = vsyncpa %s2783, 1

</llo_original>
